<compile_context>
chip_gen: v6e
topology: v6e:2x2x1
jax: 0.10.0
libtpu: 0.0.40
codegen_flags: <defaults>
</compile_context>

<pallas_src>
import math

import jax
import jax.numpy as jnp
from jax.experimental import pallas as pl
from jax.experimental.pallas import tpu as pltpu


PARAM_ORDER = [
    "wq", "bq", "wk", "bk", "wv", "bv",
    "wc1", "bc1", "wc3", "bc3", "wc5", "bc5",
    "wfc", "bfc",
    "wa1", "ba1", "wa2", "ba2",
    "wm", "bm",
]

# Large matmul weights are shipped to the kernel in bf16 (MXU operands only);
# biases and the tiny gate-MLP weights stay f32.
_BF16_PARAMS = frozenset({"wq", "wk", "wv", "wc1", "wc3", "wc5", "wfc", "wm"})


def _choose_batch_tile(B, S):
    """Largest divisor of B that (a) still leaves >=2 grid steps when B >= 2
    (v7x megacore wants >=2 parallel steps) and (b) keeps the fused Bt*S
    sublane extent modest."""
    best = 1
    for bt in range(1, B + 1):
        if B % bt:
            continue
        if B >= 2 and B // bt < 2:
            continue
        if bt * S > 512:
            continue
        best = bt
    return best


def _make_kernel(n_heads, batch_tile):
    Bt = batch_tile

    def kernel(v_ref, k_ref, q_ref, mask_ref,
               wq_ref, bq_ref, wk_ref, bk_ref, wv_ref, bv_ref,
               wc1_ref, bc1_ref, wc3_ref, bc3_ref, wc5_ref, bc5_ref,
               wfc_ref, bfc_ref,
               wa1_ref, ba1_ref, wa2_ref, ba2_ref,
               wm_ref, bm_ref,
               out_ref, halo_ref):
        S, H = v_ref.shape[1], v_ref.shape[2]
        BS = Bt * S
        hsh = H // n_heads
        scale = 1.0 / math.sqrt(hsh)
        bf16 = jnp.bfloat16

        # Zero the conv halo rows (2 top / 2 bottom) of the padded scratch.
        # (Done every step — scratch is per-core and uninitialized; with a
        #  "parallel" batch axis we cannot rely on program_id == 0.)
        halo_ref[0:2, :] = jnp.zeros((2, H), jnp.float32)
        halo_ref[S + 2:S + 4, :] = jnp.zeros((2, H), jnp.float32)

        # --- fused (Bt*S, H) q/k/v projections: bf16 MXU, f32 accumulate ----
        def proj(x_ref, w_ref, b_ref):
            x = x_ref[...].reshape(BS, H).astype(bf16)
            return (jnp.dot(x, w_ref[...],
                            preferred_element_type=jnp.float32) + b_ref[...])

        vp = proj(v_ref, wv_ref, bv_ref)                     # (BS, H) f32
        kp = proj(k_ref, wk_ref, bk_ref)
        qp = proj(q_ref, wq_ref, bq_ref) * scale   # fold 1/sqrt(d_k) once

        vp_b = vp.astype(bf16)
        qp_b = qp.astype(bf16)
        kp_t = kp.T.astype(bf16)                             # (H, BS) — one transpose

        gated_parts = []
        for bt in range(Bt):
            rows = slice(bt * S, (bt + 1) * S)
            # Additive key mask, built once per batch: 0 visible, -1e9 masked.
            neg = mask_ref[bt] * jnp.float32(-1e9)           # (1, S)

            # --- scaled dot-product attention, static loop over heads -------
            head_outs = []
            for h in range(n_heads):
                cols = slice(h * hsh, (h + 1) * hsh)
                qh = qp_b[rows, cols]                        # (S, hsh)
                kt = kp_t[cols, rows]                        # (hsh, S)
                vh = vp_b[rows, cols]                        # (S, hsh)
                sc = jnp.dot(qh, kt,
                             preferred_element_type=jnp.float32)   # (S, S)
                sc = sc + neg
                sc = sc - jnp.max(sc, axis=-1, keepdims=True)
                e = jnp.exp(sc)
                denom = jnp.sum(e, axis=-1, keepdims=True)   # (S, 1)
                # TODO(synk): nn.Dropout on the attention map is omitted (eval mode).
                oh = jnp.dot(e.astype(bf16), vh,
                             preferred_element_type=jnp.float32)   # (S, hsh)
                head_outs.append(oh * pl.reciprocal(denom, approx=True))

            # lane-concat in registers, then ONE lane-dense store into the
            # halo-padded conv scratch (rows [2, S+2)).
            atted = jnp.concatenate(head_outs, axis=-1)      # (S, H) f32
            atted_b = atted.astype(bf16)
            halo_ref[2:S + 2, :] = atted

            # --- multi-scale Conv1d branch: halo-padded sublane-offset taps -
            def conv_relu(w_ref, b_ref, ks):
                pad = (ks - 1) // 2
                acc = jnp.zeros((S, H), jnp.float32)
                for d in range(ks):
                    off = 2 + d - pad                        # static, in [0, 4]
                    if off == 2:
                        xs = atted_b                         # center tap: reuse regs
                    else:
                        xs = halo_ref[off:off + S, :].astype(bf16)
                    acc = acc + jnp.dot(xs, w_ref[d],
                                        preferred_element_type=jnp.float32)
                return jnp.maximum(acc + b_ref[...], 0.0)    # ReLU

            # fc(concat([ms3, ms5, ms1])) == ms3@W0 + ms5@W1 + ms1@W2 (split
            # weight); branches accumulated so only one (S, H) slab is live.
            ms_pre = jnp.zeros((S, H), jnp.float32)
            for w_ref, b_ref, ks, tap in ((wc3_ref, bc3_ref, 3, 0),
                                          (wc5_ref, bc5_ref, 5, 1),
                                          (wc1_ref, bc1_ref, 1, 2)):
                ms = conv_relu(w_ref, b_ref, ks).astype(bf16)
                ms_pre = ms_pre + jnp.dot(ms, wfc_ref[tap],
                                          preferred_element_type=jnp.float32)
            ms_out = jnp.maximum(ms_pre + bfc_ref[...], 0.0)  # (S, H)

            # --- dynamic gate alpha = sigmoid(MLP(mean over sequence)) ------
            mean_a = jnp.mean(atted, axis=0, keepdims=True)   # (1, H)
            h1 = jnp.maximum(
                jnp.dot(mean_a, wa1_ref[...],
                        preferred_element_type=jnp.float32) + ba1_ref[...], 0.0)
            alpha = jax.nn.sigmoid(
                jnp.dot(h1, wa2_ref[...],
                        preferred_element_type=jnp.float32) + ba2_ref[...])  # (1,1)

            gated_parts.append(atted + alpha * (ms_out - atted))   # (S, H)

        # --- final merge linear, fused over all Bt batches -------------------
        gated = jnp.concatenate(gated_parts, axis=0).astype(bf16)  # (BS, H)
        out = (jnp.dot(gated, wm_ref[...],
                       preferred_element_type=jnp.float32) + bm_ref[...])
        out_ref[...] = out.reshape(Bt, S, H).astype(out_ref.dtype)

    return kernel


def mshatt_forward(v, k, q, mask, params, n_heads):
    """v, k, q: (B, S, H) float32; mask: (B, 1, S) float32 (1.0 == masked)."""
    B, S, H = q.shape
    Bt = _choose_batch_tile(B, S)

    ordered = []
    for name in PARAM_ORDER:
        w = params[name]
        ordered.append(w.astype(jnp.bfloat16) if name in _BF16_PARAMS else w)

    # Grid-invariant weights: constant index_map + single pipeline buffer.
    def weight_spec(arr):
        nd = arr.ndim
        return pl.BlockSpec(arr.shape, lambda b, _nd=nd: (0,) * _nd,
                            pipeline_mode=pl.Buffered(1))

    data_spec = pl.BlockSpec((Bt, S, H), lambda b: (b, 0, 0))
    mask_spec = pl.BlockSpec((Bt, 1, S), lambda b: (b, 0, 0))
    in_specs = [data_spec, data_spec, data_spec, mask_spec] + [
        weight_spec(w) for w in ordered
    ]

    # VMEM budget: single-buffered weights, double-buffered (Bt,S,H) data
    # blocks, halo scratch, plus headroom for live (S,S)/(Bt*S,H) temporaries.
    # Capped at ~85% of physical VMEM (never the full ceiling — leaves room
    # for compiler-internal scratch, esp. on v7x's 64 MiB/core).
    param_bytes = sum(int(w.size) * w.dtype.itemsize for w in ordered)
    io_block_bytes = (4 * Bt * S * H + Bt * S) * 4           # v,k,q,out + mask
    scratch_bytes = (S + 4) * H * 4
    temp_bytes = 12 * Bt * S * H * 4 + 4 * S * S * 4
    want = param_bytes + 2 * io_block_bytes + scratch_bytes + temp_bytes + (2 << 20)
    try:
        phys = int(pltpu.get_tpu_info().vmem_capacity_bytes)
    except Exception:
        phys = 64 << 20
    cap = int(phys * 0.85)
    vmem_limit = min(cap, max(want, 16 << 20))

    return pl.pallas_call(
        _make_kernel(n_heads, Bt),
        out_shape=jax.ShapeDtypeStruct((B, S, H), jnp.float32),
        grid=(B // Bt,),
        in_specs=in_specs,
        out_specs=data_spec,
        scratch_shapes=[pltpu.VMEM((S + 4, H), jnp.float32)],
        compiler_params=pltpu.CompilerParams(
            dimension_semantics=("parallel",),
            vmem_limit_bytes=vmem_limit),
    )(v, k, q, mask, *ordered)


def init_params(key, H, n_heads):
    keys = jax.random.split(key, 20)
    s = 0.08

    def w(i, shape):
        return jax.random.normal(keys[i], shape, jnp.float32) * s

    return {
        "wq": w(0, (H, H)), "bq": w(1, (1, H)),
        "wk": w(2, (H, H)), "bk": w(3, (1, H)),
        "wv": w(4, (H, H)), "bv": w(5, (1, H)),
        "wc1": w(6, (1, H, H)), "bc1": w(7, (1, H)),
        "wc3": w(8, (3, H, H)), "bc3": w(9, (1, H)),
        "wc5": w(10, (5, H, H)), "bc5": w(11, (1, H)),
        # fc: Conv1d(3H -> H, k=1); stored split as (3, H, H):
        #   block 0 acts on ms3, block 1 on ms5, block 2 on ms1 (concat order).
        "wfc": w(12, (3, H, H)), "bfc": w(13, (1, H)),
        "wa1": w(14, (H, H // 2)), "ba1": w(15, (1, H // 2)),
        "wa2": w(16, (H // 2, 1)), "ba2": w(17, (1, 1)),
        "wm": w(18, (H, H)), "bm": w(19, (1, H)),
    }


def mshatt_reference(v, k, q, mask, p, n_heads):
    """Pure-JAX f32 reference mirroring the PyTorch forward (eval mode)."""
    B, S, H = q.shape
    hsh = H // n_heads

    vp = v @ p["wv"] + p["bv"]
    kp = k @ p["wk"] + p["bk"]
    qp = q @ p["wq"] + p["bq"]

    def split(x):
        return x.reshape(B, S, n_heads, hsh).transpose(0, 2, 1, 3)

    vh, kh, qh = split(vp), split(kp), split(qp)
    sc = jnp.einsum("bhqd,bhkd->bhqk", qh, kh) / math.sqrt(hsh)
    sc = jnp.where(mask[:, :, None, :] > 0.5, -1e9, sc)
    att = jax.nn.softmax(sc, axis=-1)
    ah = jnp.einsum("bhqk,bhkd->bhqd", att, vh)
    atted = ah.transpose(0, 2, 1, 3).reshape(B, S, H)

    def conv1d(x, w, b, ks):
        pad = (ks - 1) // 2
        xp = jnp.pad(x, ((0, 0), (pad, pad), (0, 0)))
        acc = sum(jnp.einsum("bsi,io->bso", xp[:, d:d + S], w[d]) for d in range(ks))
        return jax.nn.relu(acc + b)

    ms1 = conv1d(atted, p["wc1"], p["bc1"], 1)
    ms3 = conv1d(atted, p["wc3"], p["bc3"], 3)
    ms5 = conv1d(atted, p["wc5"], p["bc5"], 5)
    wfc_cat = jnp.concatenate([p["wfc"][0], p["wfc"][1], p["wfc"][2]], axis=0)
    ms_concat = jnp.concatenate([ms3, ms5, ms1], axis=-1)
    ms_out = jax.nn.relu(ms_concat @ wfc_cat + p["bfc"])

    mean_a = atted.mean(axis=1)                               # (B, H)
    h1 = jax.nn.relu(mean_a @ p["wa1"] + p["ba1"])
    alpha = jax.nn.sigmoid(h1 @ p["wa2"] + p["ba2"])          # (B, 1)
    alpha = alpha[:, :, None]                                 # (B, 1, 1)
    gated = alpha * ms_out + (1.0 - alpha) * atted
    return gated @ p["wm"] + p["bm"]


if __name__ == "__main__":
    B, S, H, NH = 4, 8, 32, 4

    key = jax.random.PRNGKey(0)
    kparam, kv, kk, kq = jax.random.split(key, 4)
    params = init_params(kparam, H, NH)

    v = jax.random.normal(kv, (B, S, H), jnp.float32)
    k = jax.random.normal(kk, (B, S, H), jnp.float32)
    q = jax.random.normal(kq, (B, S, H), jnp.float32)

    # mask: per-batch number of masked tail key positions (1.0 == masked).
    key_pos = jnp.arange(S)
    masked_tail = jnp.array([2, 0, 1, 3])[:B]
    mask = (key_pos[None, :] >= (S - masked_tail[:, None])).astype(jnp.float32)
    mask = mask[:, None, :]                                   # (B, 1, S)

    out = mshatt_forward(v, k, q, mask, params, NH)
    out = jax.block_until_ready(out)
    assert out.shape == (B, S, H)

    ref = mshatt_reference(v, k, q, mask, params, NH)
    # Kernel uses bf16 MXU operands with f32 accumulation; compare against the
    # pure-f32 reference with a tolerance sized for bf16 rounding.
    err = float(jnp.max(jnp.abs(out - ref)))
    if err > 2e-2:
        raise AssertionError(f"kernel vs reference mismatch: max abs err = {err}")

    print("KERNEL_OK")
</pallas_src>

<mosaic_0001>
module attributes {stable_mosaic.version = 11 : i64} {
  func.func @kernel(%arg0: i32, %arg1: memref<2x8x32xf32, #tpu.memory_space<vmem>>, %arg2: memref<2x8x32xf32, #tpu.memory_space<vmem>>, %arg3: memref<2x8x32xf32, #tpu.memory_space<vmem>>, %arg4: memref<2x1x8xf32, #tpu.memory_space<vmem>>, %arg5: memref<32x32xbf16, #tpu.memory_space<vmem>>, %arg6: memref<1x32xf32, #tpu.memory_space<vmem>>, %arg7: memref<32x32xbf16, #tpu.memory_space<vmem>>, %arg8: memref<1x32xf32, #tpu.memory_space<vmem>>, %arg9: memref<32x32xbf16, #tpu.memory_space<vmem>>, %arg10: memref<1x32xf32, #tpu.memory_space<vmem>>, %arg11: memref<1x32x32xbf16, #tpu.memory_space<vmem>>, %arg12: memref<1x32xf32, #tpu.memory_space<vmem>>, %arg13: memref<3x32x32xbf16, #tpu.memory_space<vmem>>, %arg14: memref<1x32xf32, #tpu.memory_space<vmem>>, %arg15: memref<5x32x32xbf16, #tpu.memory_space<vmem>>, %arg16: memref<1x32xf32, #tpu.memory_space<vmem>>, %arg17: memref<3x32x32xbf16, #tpu.memory_space<vmem>>, %arg18: memref<1x32xf32, #tpu.memory_space<vmem>>, %arg19: memref<32x16xf32, #tpu.memory_space<vmem>>, %arg20: memref<1x16xf32, #tpu.memory_space<vmem>>, %arg21: memref<16x1xf32, #tpu.memory_space<vmem>>, %arg22: memref<1x1xf32, #tpu.memory_space<vmem>>, %arg23: memref<32x32xbf16, #tpu.memory_space<vmem>>, %arg24: memref<1x32xf32, #tpu.memory_space<vmem>>, %arg25: memref<2x8x32xf32, #tpu.memory_space<vmem>>, %arg26: memref<12x32xf32, #tpu.memory_space<vmem>>) attributes {dimension_semantics = [#tpu.dimension_semantics<parallel>], iteration_bounds = array<i64: 2>, scalar_prefetch = 0 : i64, scratch_operands = 1 : i64, tpu.core_type = #tpu.core_type<tc>, window_params = [{transform_indices = @transform_0, window_bounds = array<i64: 2, 8, 32>}, {transform_indices = @transform_1, window_bounds = array<i64: 2, 8, 32>}, {transform_indices = @transform_2, window_bounds = array<i64: 2, 8, 32>}, {transform_indices = @transform_3, window_bounds = array<i64: 2, 1, 8>}, {pipeline_mode = #tpu.pipeline_mode<synchronous>, transform_indices = @transform_4, window_bounds = array<i64: 32, 32>}, {pipeline_mode = #tpu.pipeline_mode<synchronous>, transform_indices = @transform_5, window_bounds = array<i64: 1, 32>}, {pipeline_mode = #tpu.pipeline_mode<synchronous>, transform_indices = @transform_6, window_bounds = array<i64: 32, 32>}, {pipeline_mode = #tpu.pipeline_mode<synchronous>, transform_indices = @transform_7, window_bounds = array<i64: 1, 32>}, {pipeline_mode = #tpu.pipeline_mode<synchronous>, transform_indices = @transform_8, window_bounds = array<i64: 32, 32>}, {pipeline_mode = #tpu.pipeline_mode<synchronous>, transform_indices = @transform_9, window_bounds = array<i64: 1, 32>}, {pipeline_mode = #tpu.pipeline_mode<synchronous>, transform_indices = @transform_10, window_bounds = array<i64: 1, 32, 32>}, {pipeline_mode = #tpu.pipeline_mode<synchronous>, transform_indices = @transform_11, window_bounds = array<i64: 1, 32>}, {pipeline_mode = #tpu.pipeline_mode<synchronous>, transform_indices = @transform_12, window_bounds = array<i64: 3, 32, 32>}, {pipeline_mode = #tpu.pipeline_mode<synchronous>, transform_indices = @transform_13, window_bounds = array<i64: 1, 32>}, {pipeline_mode = #tpu.pipeline_mode<synchronous>, transform_indices = @transform_14, window_bounds = array<i64: 5, 32, 32>}, {pipeline_mode = #tpu.pipeline_mode<synchronous>, transform_indices = @transform_15, window_bounds = array<i64: 1, 32>}, {pipeline_mode = #tpu.pipeline_mode<synchronous>, transform_indices = @transform_16, window_bounds = array<i64: 3, 32, 32>}, {pipeline_mode = #tpu.pipeline_mode<synchronous>, transform_indices = @transform_17, window_bounds = array<i64: 1, 32>}, {pipeline_mode = #tpu.pipeline_mode<synchronous>, transform_indices = @transform_18, window_bounds = array<i64: 32, 16>}, {pipeline_mode = #tpu.pipeline_mode<synchronous>, transform_indices = @transform_19, window_bounds = array<i64: 1, 16>}, {pipeline_mode = #tpu.pipeline_mode<synchronous>, transform_indices = @transform_20, window_bounds = array<i64: 16, 1>}, {pipeline_mode = #tpu.pipeline_mode<synchronous>, transform_indices = @transform_21, window_bounds = array<i64: 1, 1>}, {pipeline_mode = #tpu.pipeline_mode<synchronous>, transform_indices = @transform_22, window_bounds = array<i64: 32, 32>}, {pipeline_mode = #tpu.pipeline_mode<synchronous>, transform_indices = @transform_23, window_bounds = array<i64: 1, 32>}, {transform_indices = @transform_24, window_bounds = array<i64: 2, 8, 32>}]} {
    %cst = arith.constant 0.000000e+00 : f32
    %0 = vector.broadcast %cst : f32 to vector<2x32xf32>
    %c0 = arith.constant 0 : index
    %c0_0 = arith.constant 0 : index
    %1 = vector.load %arg26[%c0, %c0_0] : memref<12x32xf32, #tpu.memory_space<vmem>>, vector<2x32xf32>
    tpu.vector_store %arg26[%c0, %c0_0], %0 {strides = array<i32>} : memref<12x32xf32, #tpu.memory_space<vmem>>, vector<2x32xf32>,
    %cst_1 = arith.constant 0.000000e+00 : f32
    %2 = vector.broadcast %cst_1 : f32 to vector<2x32xf32>
    %c10 = arith.constant 10 : index
    %c0_2 = arith.constant 0 : index
    %3 = vector.load %arg26[%c10, %c0_2] : memref<12x32xf32, #tpu.memory_space<vmem>>, vector<2x32xf32>
    tpu.vector_store %arg26[%c10, %c0_2], %2 {strides = array<i32>} : memref<12x32xf32, #tpu.memory_space<vmem>>, vector<2x32xf32>,
    %c0_3 = arith.constant 0 : index
    %c0_4 = arith.constant 0 : index
    %c0_5 = arith.constant 0 : index
    %4 = vector.load %arg1[%c0_3, %c0_4, %c0_5] : memref<2x8x32xf32, #tpu.memory_space<vmem>>, vector<2x8x32xf32>
    %5 = vector.shape_cast %4 : vector<2x8x32xf32> to vector<16x32xf32>
    %6 = arith.truncf %5 : vector<16x32xf32> to vector<16x32xbf16>
    %c0_6 = arith.constant 0 : index
    %c0_7 = arith.constant 0 : index
    %7 = vector.load %arg9[%c0_6, %c0_7] : memref<32x32xbf16, #tpu.memory_space<vmem>>, vector<32x32xbf16>
    %cst_8 = arith.constant dense<0.000000e+00> : vector<16x32xf32>
    %8 = tpu.matmul %6, %7, %cst_8 {dimension_numbers = #tpu.dot_dimension_numbers<[1], [0], [0], [1], [0, 0, 1, 1], [], []>} : vector<16x32xbf16>, vector<32x32xbf16>, vector<16x32xf32> -> vector<16x32xf32>
    %c0_9 = arith.constant 0 : index
    %c0_10 = arith.constant 0 : index
    %9 = vector.load %arg10[%c0_9, %c0_10] : memref<1x32xf32, #tpu.memory_space<vmem>>, vector<1x32xf32>
    %10 = vector.broadcast %9 : vector<1x32xf32> to vector<16x32xf32>
    %11 = arith.addf %8, %10 : vector<16x32xf32>
    %c0_11 = arith.constant 0 : index
    %c0_12 = arith.constant 0 : index
    %c0_13 = arith.constant 0 : index
    %12 = vector.load %arg2[%c0_11, %c0_12, %c0_13] : memref<2x8x32xf32, #tpu.memory_space<vmem>>, vector<2x8x32xf32>
    %13 = vector.shape_cast %12 : vector<2x8x32xf32> to vector<16x32xf32>
    %14 = arith.truncf %13 : vector<16x32xf32> to vector<16x32xbf16>
    %c0_14 = arith.constant 0 : index
    %c0_15 = arith.constant 0 : index
    %15 = vector.load %arg7[%c0_14, %c0_15] : memref<32x32xbf16, #tpu.memory_space<vmem>>, vector<32x32xbf16>
    %cst_16 = arith.constant dense<0.000000e+00> : vector<16x32xf32>
    %16 = tpu.matmul %14, %15, %cst_16 {dimension_numbers = #tpu.dot_dimension_numbers<[1], [0], [0], [1], [0, 0, 1, 1], [], []>} : vector<16x32xbf16>, vector<32x32xbf16>, vector<16x32xf32> -> vector<16x32xf32>
    %c0_17 = arith.constant 0 : index
    %c0_18 = arith.constant 0 : index
    %17 = vector.load %arg8[%c0_17, %c0_18] : memref<1x32xf32, #tpu.memory_space<vmem>>, vector<1x32xf32>
    %18 = vector.broadcast %17 : vector<1x32xf32> to vector<16x32xf32>
    %19 = arith.addf %16, %18 : vector<16x32xf32>
    %c0_19 = arith.constant 0 : index
    %c0_20 = arith.constant 0 : index
    %c0_21 = arith.constant 0 : index
    %20 = vector.load %arg3[%c0_19, %c0_20, %c0_21] : memref<2x8x32xf32, #tpu.memory_space<vmem>>, vector<2x8x32xf32>
    %21 = vector.shape_cast %20 : vector<2x8x32xf32> to vector<16x32xf32>
    %22 = arith.truncf %21 : vector<16x32xf32> to vector<16x32xbf16>
    %c0_22 = arith.constant 0 : index
    %c0_23 = arith.constant 0 : index
    %23 = vector.load %arg5[%c0_22, %c0_23] : memref<32x32xbf16, #tpu.memory_space<vmem>>, vector<32x32xbf16>
    %cst_24 = arith.constant dense<0.000000e+00> : vector<16x32xf32>
    %24 = tpu.matmul %22, %23, %cst_24 {dimension_numbers = #tpu.dot_dimension_numbers<[1], [0], [0], [1], [0, 0, 1, 1], [], []>} : vector<16x32xbf16>, vector<32x32xbf16>, vector<16x32xf32> -> vector<16x32xf32>
    %c0_25 = arith.constant 0 : index
    %c0_26 = arith.constant 0 : index
    %25 = vector.load %arg6[%c0_25, %c0_26] : memref<1x32xf32, #tpu.memory_space<vmem>>, vector<1x32xf32>
    %26 = vector.broadcast %25 : vector<1x32xf32> to vector<16x32xf32>
    %27 = arith.addf %24, %26 : vector<16x32xf32>
    %cst_27 = arith.constant 0.353553385 : f32
    %28 = vector.broadcast %cst_27 : f32 to vector<16x32xf32>
    %29 = arith.mulf %27, %28 : vector<16x32xf32>
    %30 = arith.truncf %11 : vector<16x32xf32> to vector<16x32xbf16>
    %31 = arith.truncf %29 : vector<16x32xf32> to vector<16x32xbf16>
    %32 = tpu.transpose %19, [1, 0] : vector<16x32xf32> -> vector<32x16xf32>
    %33 = arith.truncf %32 : vector<32x16xf32> to vector<32x16xbf16>
    %c0_28 = arith.constant 0 : index
    %c0_29 = arith.constant 0 : index
    %c0_30 = arith.constant 0 : index
    %34 = vector.load %arg4[%c0_28, %c0_29, %c0_30] : memref<2x1x8xf32, #tpu.memory_space<vmem>>, vector<1x1x8xf32>
    %35 = vector.shape_cast %34 : vector<1x1x8xf32> to vector<1x8xf32>
    %cst_31 = arith.constant -1.000000e+09 : f32
    %36 = vector.broadcast %cst_31 : f32 to vector<1x8xf32>
    %37 = arith.mulf %35, %36 : vector<1x8xf32>
    %38 = vector.extract_strided_slice %31 {offsets = [0, 0], sizes = [8, 8], strides = [1, 1]} : vector<16x32xbf16> to vector<8x8xbf16>
    %39 = vector.extract_strided_slice %33 {offsets = [0, 0], sizes = [8, 8], strides = [1, 1]} : vector<32x16xbf16> to vector<8x8xbf16>
    %40 = vector.extract_strided_slice %30 {offsets = [0, 0], sizes = [8, 8], strides = [1, 1]} : vector<16x32xbf16> to vector<8x8xbf16>
    %cst_32 = arith.constant dense<0.000000e+00> : vector<8x8xf32>
    %41 = tpu.matmul %38, %39, %cst_32 {dimension_numbers = #tpu.dot_dimension_numbers<[1], [0], [0], [1], [0, 0, 1, 1], [], []>} : vector<8x8xbf16>, vector<8x8xbf16>, vector<8x8xf32> -> vector<8x8xf32>
    %42 = vector.broadcast %37 : vector<1x8xf32> to vector<8x8xf32>
    %43 = arith.addf %41, %42 : vector<8x8xf32>
    %cst_33 = arith.constant dense<0xFF800000> : vector<8xf32>
    %44 = vector.multi_reduction <maximumf>, %43, %cst_33 [1] : vector<8x8xf32> to vector<8xf32>
    %45 = vector.shape_cast %44 : vector<8xf32> to vector<8x1xf32>
    %46 = vector.broadcast %45 : vector<8x1xf32> to vector<8x8xf32>
    %47 = arith.subf %43, %46 : vector<8x8xf32>
    %48 = math.exp %47 : vector<8x8xf32>
    %cst_34 = arith.constant dense<0.000000e+00> : vector<8xf32>
    %49 = vector.multi_reduction <add>, %48, %cst_34 [1] : vector<8x8xf32> to vector<8xf32>
    %50 = vector.shape_cast %49 : vector<8xf32> to vector<8x1xf32>
    %51 = arith.truncf %48 : vector<8x8xf32> to vector<8x8xbf16>
    %cst_35 = arith.constant dense<0.000000e+00> : vector<8x8xf32>
    %52 = tpu.matmul %51, %40, %cst_35 {dimension_numbers = #tpu.dot_dimension_numbers<[1], [0], [0], [1], [0, 0, 1, 1], [], []>} : vector<8x8xbf16>, vector<8x8xbf16>, vector<8x8xf32> -> vector<8x8xf32>
    %53 = tpu.reciprocal %50 {approx = true} : vector<8x1xf32> -> vector<8x1xf32>
    %54 = vector.broadcast %53 : vector<8x1xf32> to vector<8x8xf32>
    %55 = arith.mulf %52, %54 : vector<8x8xf32>
    %56 = vector.extract_strided_slice %31 {offsets = [0, 8], sizes = [8, 8], strides = [1, 1]} : vector<16x32xbf16> to vector<8x8xbf16>
    %57 = vector.extract_strided_slice %33 {offsets = [8, 0], sizes = [8, 8], strides = [1, 1]} : vector<32x16xbf16> to vector<8x8xbf16>
    %58 = vector.extract_strided_slice %30 {offsets = [0, 8], sizes = [8, 8], strides = [1, 1]} : vector<16x32xbf16> to vector<8x8xbf16>
    %cst_36 = arith.constant dense<0.000000e+00> : vector<8x8xf32>
    %59 = tpu.matmul %56, %57, %cst_36 {dimension_numbers = #tpu.dot_dimension_numbers<[1], [0], [0], [1], [0, 0, 1, 1], [], []>} : vector<8x8xbf16>, vector<8x8xbf16>, vector<8x8xf32> -> vector<8x8xf32>
    %60 = vector.broadcast %37 : vector<1x8xf32> to vector<8x8xf32>
    %61 = arith.addf %59, %60 : vector<8x8xf32>
    %cst_37 = arith.constant dense<0xFF800000> : vector<8xf32>
    %62 = vector.multi_reduction <maximumf>, %61, %cst_37 [1] : vector<8x8xf32> to vector<8xf32>
    %63 = vector.shape_cast %62 : vector<8xf32> to vector<8x1xf32>
    %64 = vector.broadcast %63 : vector<8x1xf32> to vector<8x8xf32>
    %65 = arith.subf %61, %64 : vector<8x8xf32>
    %66 = math.exp %65 : vector<8x8xf32>
    %cst_38 = arith.constant dense<0.000000e+00> : vector<8xf32>
    %67 = vector.multi_reduction <add>, %66, %cst_38 [1] : vector<8x8xf32> to vector<8xf32>
    %68 = vector.shape_cast %67 : vector<8xf32> to vector<8x1xf32>
    %69 = arith.truncf %66 : vector<8x8xf32> to vector<8x8xbf16>
    %cst_39 = arith.constant dense<0.000000e+00> : vector<8x8xf32>
    %70 = tpu.matmul %69, %58, %cst_39 {dimension_numbers = #tpu.dot_dimension_numbers<[1], [0], [0], [1], [0, 0, 1, 1], [], []>} : vector<8x8xbf16>, vector<8x8xbf16>, vector<8x8xf32> -> vector<8x8xf32>
    %71 = tpu.reciprocal %68 {approx = true} : vector<8x1xf32> -> vector<8x1xf32>
    %72 = vector.broadcast %71 : vector<8x1xf32> to vector<8x8xf32>
    %73 = arith.mulf %70, %72 : vector<8x8xf32>
    %74 = vector.extract_strided_slice %31 {offsets = [0, 16], sizes = [8, 8], strides = [1, 1]} : vector<16x32xbf16> to vector<8x8xbf16>
    %75 = vector.extract_strided_slice %33 {offsets = [16, 0], sizes = [8, 8], strides = [1, 1]} : vector<32x16xbf16> to vector<8x8xbf16>
    %76 = vector.extract_strided_slice %30 {offsets = [0, 16], sizes = [8, 8], strides = [1, 1]} : vector<16x32xbf16> to vector<8x8xbf16>
    %cst_40 = arith.constant dense<0.000000e+00> : vector<8x8xf32>
    %77 = tpu.matmul %74, %75, %cst_40 {dimension_numbers = #tpu.dot_dimension_numbers<[1], [0], [0], [1], [0, 0, 1, 1], [], []>} : vector<8x8xbf16>, vector<8x8xbf16>, vector<8x8xf32> -> vector<8x8xf32>
    %78 = vector.broadcast %37 : vector<1x8xf32> to vector<8x8xf32>
    %79 = arith.addf %77, %78 : vector<8x8xf32>
    %cst_41 = arith.constant dense<0xFF800000> : vector<8xf32>
    %80 = vector.multi_reduction <maximumf>, %79, %cst_41 [1] : vector<8x8xf32> to vector<8xf32>
    %81 = vector.shape_cast %80 : vector<8xf32> to vector<8x1xf32>
    %82 = vector.broadcast %81 : vector<8x1xf32> to vector<8x8xf32>
    %83 = arith.subf %79, %82 : vector<8x8xf32>
    %84 = math.exp %83 : vector<8x8xf32>
    %cst_42 = arith.constant dense<0.000000e+00> : vector<8xf32>
    %85 = vector.multi_reduction <add>, %84, %cst_42 [1] : vector<8x8xf32> to vector<8xf32>
    %86 = vector.shape_cast %85 : vector<8xf32> to vector<8x1xf32>
    %87 = arith.truncf %84 : vector<8x8xf32> to vector<8x8xbf16>
    %cst_43 = arith.constant dense<0.000000e+00> : vector<8x8xf32>
    %88 = tpu.matmul %87, %76, %cst_43 {dimension_numbers = #tpu.dot_dimension_numbers<[1], [0], [0], [1], [0, 0, 1, 1], [], []>} : vector<8x8xbf16>, vector<8x8xbf16>, vector<8x8xf32> -> vector<8x8xf32>
    %89 = tpu.reciprocal %86 {approx = true} : vector<8x1xf32> -> vector<8x1xf32>
    %90 = vector.broadcast %89 : vector<8x1xf32> to vector<8x8xf32>
    %91 = arith.mulf %88, %90 : vector<8x8xf32>
    %92 = vector.extract_strided_slice %31 {offsets = [0, 24], sizes = [8, 8], strides = [1, 1]} : vector<16x32xbf16> to vector<8x8xbf16>
    %93 = vector.extract_strided_slice %33 {offsets = [24, 0], sizes = [8, 8], strides = [1, 1]} : vector<32x16xbf16> to vector<8x8xbf16>
    %94 = vector.extract_strided_slice %30 {offsets = [0, 24], sizes = [8, 8], strides = [1, 1]} : vector<16x32xbf16> to vector<8x8xbf16>
    %cst_44 = arith.constant dense<0.000000e+00> : vector<8x8xf32>
    %95 = tpu.matmul %92, %93, %cst_44 {dimension_numbers = #tpu.dot_dimension_numbers<[1], [0], [0], [1], [0, 0, 1, 1], [], []>} : vector<8x8xbf16>, vector<8x8xbf16>, vector<8x8xf32> -> vector<8x8xf32>
    %96 = vector.broadcast %37 : vector<1x8xf32> to vector<8x8xf32>
    %97 = arith.addf %95, %96 : vector<8x8xf32>
    %cst_45 = arith.constant dense<0xFF800000> : vector<8xf32>
    %98 = vector.multi_reduction <maximumf>, %97, %cst_45 [1] : vector<8x8xf32> to vector<8xf32>
    %99 = vector.shape_cast %98 : vector<8xf32> to vector<8x1xf32>
    %100 = vector.broadcast %99 : vector<8x1xf32> to vector<8x8xf32>
    %101 = arith.subf %97, %100 : vector<8x8xf32>
    %102 = math.exp %101 : vector<8x8xf32>
    %cst_46 = arith.constant dense<0.000000e+00> : vector<8xf32>
    %103 = vector.multi_reduction <add>, %102, %cst_46 [1] : vector<8x8xf32> to vector<8xf32>
    %104 = vector.shape_cast %103 : vector<8xf32> to vector<8x1xf32>
    %105 = arith.truncf %102 : vector<8x8xf32> to vector<8x8xbf16>
    %cst_47 = arith.constant dense<0.000000e+00> : vector<8x8xf32>
    %106 = tpu.matmul %105, %94, %cst_47 {dimension_numbers = #tpu.dot_dimension_numbers<[1], [0], [0], [1], [0, 0, 1, 1], [], []>} : vector<8x8xbf16>, vector<8x8xbf16>, vector<8x8xf32> -> vector<8x8xf32>
    %107 = tpu.reciprocal %104 {approx = true} : vector<8x1xf32> -> vector<8x1xf32>
    %108 = vector.broadcast %107 : vector<8x1xf32> to vector<8x8xf32>
    %109 = arith.mulf %106, %108 : vector<8x8xf32>
    %110 = tpu.concatenate %55, %73, %91, %109 in 1 : vector<8x8xf32>, vector<8x8xf32>, vector<8x8xf32>, vector<8x8xf32> -> vector<8x32xf32>
    %111 = arith.truncf %110 : vector<8x32xf32> to vector<8x32xbf16>
    %c2 = arith.constant 2 : index
    %c0_48 = arith.constant 0 : index
    %112 = vector.load %arg26[%c2, %c0_48] : memref<12x32xf32, #tpu.memory_space<vmem>>, vector<8x32xf32>
    tpu.vector_store %arg26[%c2, %c0_48], %110 {strides = array<i32>} : memref<12x32xf32, #tpu.memory_space<vmem>>, vector<8x32xf32>,
    %cst_49 = arith.constant 0.000000e+00 : f32
    %113 = vector.broadcast %cst_49 : f32 to vector<8x32xf32>
    %cst_50 = arith.constant 0.000000e+00 : f32
    %114 = vector.broadcast %cst_50 : f32 to vector<8x32xf32>
    %c1 = arith.constant 1 : index
    %c0_51 = arith.constant 0 : index
    %115 = vector.load %arg26[%c1, %c0_51] : memref<12x32xf32, #tpu.memory_space<vmem>>, vector<8x32xf32>
    %116 = arith.truncf %115 : vector<8x32xf32> to vector<8x32xbf16>
    %c0_52 = arith.constant 0 : index
    %c0_53 = arith.constant 0 : index
    %c0_54 = arith.constant 0 : index
    %117 = vector.load %arg13[%c0_52, %c0_53, %c0_54] : memref<3x32x32xbf16, #tpu.memory_space<vmem>>, vector<1x32x32xbf16>
    %118 = vector.shape_cast %117 : vector<1x32x32xbf16> to vector<32x32xbf16>
    %cst_55 = arith.constant dense<0.000000e+00> : vector<8x32xf32>
    %119 = tpu.matmul %116, %118, %cst_55 {dimension_numbers = #tpu.dot_dimension_numbers<[1], [0], [0], [1], [0, 0, 1, 1], [], []>} : vector<8x32xbf16>, vector<32x32xbf16>, vector<8x32xf32> -> vector<8x32xf32>
    %120 = arith.addf %114, %119 : vector<8x32xf32>
    %c1_56 = arith.constant 1 : index
    %c0_57 = arith.constant 0 : index
    %c0_58 = arith.constant 0 : index
    %121 = vector.load %arg13[%c1_56, %c0_57, %c0_58] : memref<3x32x32xbf16, #tpu.memory_space<vmem>>, vector<1x32x32xbf16>
    %122 = vector.shape_cast %121 : vector<1x32x32xbf16> to vector<32x32xbf16>
    %cst_59 = arith.constant dense<0.000000e+00> : vector<8x32xf32>
    %123 = tpu.matmul %111, %122, %cst_59 {dimension_numbers = #tpu.dot_dimension_numbers<[1], [0], [0], [1], [0, 0, 1, 1], [], []>} : vector<8x32xbf16>, vector<32x32xbf16>, vector<8x32xf32> -> vector<8x32xf32>
    %124 = arith.addf %120, %123 : vector<8x32xf32>
    %c3 = arith.constant 3 : index
    %c0_60 = arith.constant 0 : index
    %125 = vector.load %arg26[%c3, %c0_60] : memref<12x32xf32, #tpu.memory_space<vmem>>, vector<8x32xf32>
    %126 = arith.truncf %125 : vector<8x32xf32> to vector<8x32xbf16>
    %c2_61 = arith.constant 2 : index
    %c0_62 = arith.constant 0 : index
    %c0_63 = arith.constant 0 : index
    %127 = vector.load %arg13[%c2_61, %c0_62, %c0_63] : memref<3x32x32xbf16, #tpu.memory_space<vmem>>, vector<1x32x32xbf16>
    %128 = vector.shape_cast %127 : vector<1x32x32xbf16> to vector<32x32xbf16>
    %cst_64 = arith.constant dense<0.000000e+00> : vector<8x32xf32>
    %129 = tpu.matmul %126, %128, %cst_64 {dimension_numbers = #tpu.dot_dimension_numbers<[1], [0], [0], [1], [0, 0, 1, 1], [], []>} : vector<8x32xbf16>, vector<32x32xbf16>, vector<8x32xf32> -> vector<8x32xf32>
    %130 = arith.addf %124, %129 : vector<8x32xf32>
    %c0_65 = arith.constant 0 : index
    %c0_66 = arith.constant 0 : index
    %131 = vector.load %arg14[%c0_65, %c0_66] : memref<1x32xf32, #tpu.memory_space<vmem>>, vector<1x32xf32>
    %132 = vector.broadcast %131 : vector<1x32xf32> to vector<8x32xf32>
    %133 = arith.addf %130, %132 : vector<8x32xf32>
    %cst_67 = arith.constant 0.000000e+00 : f32
    %134 = vector.broadcast %cst_67 : f32 to vector<8x32xf32>
    %135 = arith.maximumf %133, %134 : vector<8x32xf32>
    %136 = arith.truncf %135 : vector<8x32xf32> to vector<8x32xbf16>
    %c0_68 = arith.constant 0 : index
    %c0_69 = arith.constant 0 : index
    %c0_70 = arith.constant 0 : index
    %137 = vector.load %arg17[%c0_68, %c0_69, %c0_70] : memref<3x32x32xbf16, #tpu.memory_space<vmem>>, vector<1x32x32xbf16>
    %138 = vector.shape_cast %137 : vector<1x32x32xbf16> to vector<32x32xbf16>
    %cst_71 = arith.constant dense<0.000000e+00> : vector<8x32xf32>
    %139 = tpu.matmul %136, %138, %cst_71 {dimension_numbers = #tpu.dot_dimension_numbers<[1], [0], [0], [1], [0, 0, 1, 1], [], []>} : vector<8x32xbf16>, vector<32x32xbf16>, vector<8x32xf32> -> vector<8x32xf32>
    %140 = arith.addf %113, %139 : vector<8x32xf32>
    %cst_72 = arith.constant 0.000000e+00 : f32
    %141 = vector.broadcast %cst_72 : f32 to vector<8x32xf32>
    %c0_73 = arith.constant 0 : index
    %c0_74 = arith.constant 0 : index
    %142 = vector.load %arg26[%c0_73, %c0_74] : memref<12x32xf32, #tpu.memory_space<vmem>>, vector<8x32xf32>
    %143 = arith.truncf %142 : vector<8x32xf32> to vector<8x32xbf16>
    %c0_75 = arith.constant 0 : index
    %c0_76 = arith.constant 0 : index
    %c0_77 = arith.constant 0 : index
    %144 = vector.load %arg15[%c0_75, %c0_76, %c0_77] : memref<5x32x32xbf16, #tpu.memory_space<vmem>>, vector<1x32x32xbf16>
    %145 = vector.shape_cast %144 : vector<1x32x32xbf16> to vector<32x32xbf16>
    %cst_78 = arith.constant dense<0.000000e+00> : vector<8x32xf32>
    %146 = tpu.matmul %143, %145, %cst_78 {dimension_numbers = #tpu.dot_dimension_numbers<[1], [0], [0], [1], [0, 0, 1, 1], [], []>} : vector<8x32xbf16>, vector<32x32xbf16>, vector<8x32xf32> -> vector<8x32xf32>
    %147 = arith.addf %141, %146 : vector<8x32xf32>
    %c1_79 = arith.constant 1 : index
    %c0_80 = arith.constant 0 : index
    %148 = vector.load %arg26[%c1_79, %c0_80] : memref<12x32xf32, #tpu.memory_space<vmem>>, vector<8x32xf32>
    %149 = arith.truncf %148 : vector<8x32xf32> to vector<8x32xbf16>
    %c1_81 = arith.constant 1 : index
    %c0_82 = arith.constant 0 : index
    %c0_83 = arith.constant 0 : index
    %150 = vector.load %arg15[%c1_81, %c0_82, %c0_83] : memref<5x32x32xbf16, #tpu.memory_space<vmem>>, vector<1x32x32xbf16>
    %151 = vector.shape_cast %150 : vector<1x32x32xbf16> to vector<32x32xbf16>
    %cst_84 = arith.constant dense<0.000000e+00> : vector<8x32xf32>
    %152 = tpu.matmul %149, %151, %cst_84 {dimension_numbers = #tpu.dot_dimension_numbers<[1], [0], [0], [1], [0, 0, 1, 1], [], []>} : vector<8x32xbf16>, vector<32x32xbf16>, vector<8x32xf32> -> vector<8x32xf32>
    %153 = arith.addf %147, %152 : vector<8x32xf32>
    %c2_85 = arith.constant 2 : index
    %c0_86 = arith.constant 0 : index
    %c0_87 = arith.constant 0 : index
    %154 = vector.load %arg15[%c2_85, %c0_86, %c0_87] : memref<5x32x32xbf16, #tpu.memory_space<vmem>>, vector<1x32x32xbf16>
    %155 = vector.shape_cast %154 : vector<1x32x32xbf16> to vector<32x32xbf16>
    %cst_88 = arith.constant dense<0.000000e+00> : vector<8x32xf32>
    %156 = tpu.matmul %111, %155, %cst_88 {dimension_numbers = #tpu.dot_dimension_numbers<[1], [0], [0], [1], [0, 0, 1, 1], [], []>} : vector<8x32xbf16>, vector<32x32xbf16>, vector<8x32xf32> -> vector<8x32xf32>
    %157 = arith.addf %153, %156 : vector<8x32xf32>
    %c3_89 = arith.constant 3 : index
    %c0_90 = arith.constant 0 : index
    %158 = vector.load %arg26[%c3_89, %c0_90] : memref<12x32xf32, #tpu.memory_space<vmem>>, vector<8x32xf32>
    %159 = arith.truncf %158 : vector<8x32xf32> to vector<8x32xbf16>
    %c3_91 = arith.constant 3 : index
    %c0_92 = arith.constant 0 : index
    %c0_93 = arith.constant 0 : index
    %160 = vector.load %arg15[%c3_91, %c0_92, %c0_93] : memref<5x32x32xbf16, #tpu.memory_space<vmem>>, vector<1x32x32xbf16>
    %161 = vector.shape_cast %160 : vector<1x32x32xbf16> to vector<32x32xbf16>
    %cst_94 = arith.constant dense<0.000000e+00> : vector<8x32xf32>
    %162 = tpu.matmul %159, %161, %cst_94 {dimension_numbers = #tpu.dot_dimension_numbers<[1], [0], [0], [1], [0, 0, 1, 1], [], []>} : vector<8x32xbf16>, vector<32x32xbf16>, vector<8x32xf32> -> vector<8x32xf32>
    %163 = arith.addf %157, %162 : vector<8x32xf32>
    %c4 = arith.constant 4 : index
    %c0_95 = arith.constant 0 : index
    %164 = vector.load %arg26[%c4, %c0_95] : memref<12x32xf32, #tpu.memory_space<vmem>>, vector<8x32xf32>
    %165 = arith.truncf %164 : vector<8x32xf32> to vector<8x32xbf16>
    %c4_96 = arith.constant 4 : index
    %c0_97 = arith.constant 0 : index
    %c0_98 = arith.constant 0 : index
    %166 = vector.load %arg15[%c4_96, %c0_97, %c0_98] : memref<5x32x32xbf16, #tpu.memory_space<vmem>>, vector<1x32x32xbf16>
    %167 = vector.shape_cast %166 : vector<1x32x32xbf16> to vector<32x32xbf16>
    %cst_99 = arith.constant dense<0.000000e+00> : vector<8x32xf32>
    %168 = tpu.matmul %165, %167, %cst_99 {dimension_numbers = #tpu.dot_dimension_numbers<[1], [0], [0], [1], [0, 0, 1, 1], [], []>} : vector<8x32xbf16>, vector<32x32xbf16>, vector<8x32xf32> -> vector<8x32xf32>
    %169 = arith.addf %163, %168 : vector<8x32xf32>
    %c0_100 = arith.constant 0 : index
    %c0_101 = arith.constant 0 : index
    %170 = vector.load %arg16[%c0_100, %c0_101] : memref<1x32xf32, #tpu.memory_space<vmem>>, vector<1x32xf32>
    %171 = vector.broadcast %170 : vector<1x32xf32> to vector<8x32xf32>
    %172 = arith.addf %169, %171 : vector<8x32xf32>
    %cst_102 = arith.constant 0.000000e+00 : f32
    %173 = vector.broadcast %cst_102 : f32 to vector<8x32xf32>
    %174 = arith.maximumf %172, %173 : vector<8x32xf32>
    %175 = arith.truncf %174 : vector<8x32xf32> to vector<8x32xbf16>
    %c1_103 = arith.constant 1 : index
    %c0_104 = arith.constant 0 : index
    %c0_105 = arith.constant 0 : index
    %176 = vector.load %arg17[%c1_103, %c0_104, %c0_105] : memref<3x32x32xbf16, #tpu.memory_space<vmem>>, vector<1x32x32xbf16>
    %177 = vector.shape_cast %176 : vector<1x32x32xbf16> to vector<32x32xbf16>
    %cst_106 = arith.constant dense<0.000000e+00> : vector<8x32xf32>
    %178 = tpu.matmul %175, %177, %cst_106 {dimension_numbers = #tpu.dot_dimension_numbers<[1], [0], [0], [1], [0, 0, 1, 1], [], []>} : vector<8x32xbf16>, vector<32x32xbf16>, vector<8x32xf32> -> vector<8x32xf32>
    %179 = arith.addf %140, %178 : vector<8x32xf32>
    %cst_107 = arith.constant 0.000000e+00 : f32
    %180 = vector.broadcast %cst_107 : f32 to vector<8x32xf32>
    %c0_108 = arith.constant 0 : index
    %c0_109 = arith.constant 0 : index
    %c0_110 = arith.constant 0 : index
    %181 = vector.load %arg11[%c0_108, %c0_109, %c0_110] : memref<1x32x32xbf16, #tpu.memory_space<vmem>>, vector<1x32x32xbf16>
    %182 = vector.shape_cast %181 : vector<1x32x32xbf16> to vector<32x32xbf16>
    %cst_111 = arith.constant dense<0.000000e+00> : vector<8x32xf32>
    %183 = tpu.matmul %111, %182, %cst_111 {dimension_numbers = #tpu.dot_dimension_numbers<[1], [0], [0], [1], [0, 0, 1, 1], [], []>} : vector<8x32xbf16>, vector<32x32xbf16>, vector<8x32xf32> -> vector<8x32xf32>
    %184 = arith.addf %180, %183 : vector<8x32xf32>
    %c0_112 = arith.constant 0 : index
    %c0_113 = arith.constant 0 : index
    %185 = vector.load %arg12[%c0_112, %c0_113] : memref<1x32xf32, #tpu.memory_space<vmem>>, vector<1x32xf32>
    %186 = vector.broadcast %185 : vector<1x32xf32> to vector<8x32xf32>
    %187 = arith.addf %184, %186 : vector<8x32xf32>
    %cst_114 = arith.constant 0.000000e+00 : f32
    %188 = vector.broadcast %cst_114 : f32 to vector<8x32xf32>
    %189 = arith.maximumf %187, %188 : vector<8x32xf32>
    %190 = arith.truncf %189 : vector<8x32xf32> to vector<8x32xbf16>
    %c2_115 = arith.constant 2 : index
    %c0_116 = arith.constant 0 : index
    %c0_117 = arith.constant 0 : index
    %191 = vector.load %arg17[%c2_115, %c0_116, %c0_117] : memref<3x32x32xbf16, #tpu.memory_space<vmem>>, vector<1x32x32xbf16>
    %192 = vector.shape_cast %191 : vector<1x32x32xbf16> to vector<32x32xbf16>
    %cst_118 = arith.constant dense<0.000000e+00> : vector<8x32xf32>
    %193 = tpu.matmul %190, %192, %cst_118 {dimension_numbers = #tpu.dot_dimension_numbers<[1], [0], [0], [1], [0, 0, 1, 1], [], []>} : vector<8x32xbf16>, vector<32x32xbf16>, vector<8x32xf32> -> vector<8x32xf32>
    %194 = arith.addf %179, %193 : vector<8x32xf32>
    %c0_119 = arith.constant 0 : index
    %c0_120 = arith.constant 0 : index
    %195 = vector.load %arg18[%c0_119, %c0_120] : memref<1x32xf32, #tpu.memory_space<vmem>>, vector<1x32xf32>
    %196 = vector.broadcast %195 : vector<1x32xf32> to vector<8x32xf32>
    %197 = arith.addf %194, %196 : vector<8x32xf32>
    %cst_121 = arith.constant 0.000000e+00 : f32
    %198 = vector.broadcast %cst_121 : f32 to vector<8x32xf32>
    %199 = arith.maximumf %197, %198 : vector<8x32xf32>
    %cst_122 = arith.constant dense<0.000000e+00> : vector<32xf32>
    %200 = vector.multi_reduction <add>, %110, %cst_122 [0] : vector<8x32xf32> to vector<32xf32>
    %201 = vector.shape_cast %200 : vector<32xf32> to vector<1x32xf32>
    %cst_123 = arith.constant 8.000000e+00 : f32
    %202 = vector.broadcast %cst_123 : f32 to vector<1x32xf32>
    %203 = arith.divf %201, %202 : vector<1x32xf32>
    %c0_124 = arith.constant 0 : index
    %c0_125 = arith.constant 0 : index
    %204 = vector.load %arg19[%c0_124, %c0_125] : memref<32x16xf32, #tpu.memory_space<vmem>>, vector<32x16xf32>
    %cst_126 = arith.constant dense<0.000000e+00> : vector<1x16xf32>
    %205 = tpu.matmul %203, %204, %cst_126 {dimension_numbers = #tpu.dot_dimension_numbers<[1], [0], [0], [1], [0, 0, 1, 1], [], []>} : vector<1x32xf32>, vector<32x16xf32>, vector<1x16xf32> -> vector<1x16xf32>
    %c0_127 = arith.constant 0 : index
    %c0_128 = arith.constant 0 : index
    %206 = vector.load %arg20[%c0_127, %c0_128] : memref<1x16xf32, #tpu.memory_space<vmem>>, vector<1x16xf32>
    %207 = arith.addf %205, %206 : vector<1x16xf32>
    %cst_129 = arith.constant 0.000000e+00 : f32
    %208 = vector.broadcast %cst_129 : f32 to vector<1x16xf32>
    %209 = arith.maximumf %207, %208 : vector<1x16xf32>
    %c0_130 = arith.constant 0 : index
    %c0_131 = arith.constant 0 : index
    %210 = vector.load %arg21[%c0_130, %c0_131] : memref<16x1xf32, #tpu.memory_space<vmem>>, vector<16x1xf32>
    %cst_132 = arith.constant dense<0.000000e+00> : vector<1x1xf32>
    %211 = tpu.matmul %209, %210, %cst_132 {dimension_numbers = #tpu.dot_dimension_numbers<[1], [0], [0], [1], [0, 0, 1, 1], [], []>} : vector<1x16xf32>, vector<16x1xf32>, vector<1x1xf32> -> vector<1x1xf32>
    %c0_133 = arith.constant 0 : index
    %c0_134 = arith.constant 0 : index
    %212 = vector.load %arg22[%c0_133, %c0_134] : memref<1x1xf32, #tpu.memory_space<vmem>>, vector<1x1xf32>
    %213 = arith.addf %211, %212 : vector<1x1xf32>
    %214 = arith.negf %213 : vector<1x1xf32>
    %215 = math.exp %214 : vector<1x1xf32>
    %cst_135 = arith.constant 1.000000e+00 : f32
    %216 = vector.broadcast %cst_135 : f32 to vector<1x1xf32>
    %217 = arith.addf %216, %215 : vector<1x1xf32>
    %218 = arith.divf %216, %217 : vector<1x1xf32>
    %219 = arith.subf %199, %110 : vector<8x32xf32>
    %220 = vector.broadcast %218 : vector<1x1xf32> to vector<8x32xf32>
    %221 = arith.mulf %220, %219 : vector<8x32xf32>
    %222 = arith.addf %110, %221 : vector<8x32xf32>
    %c1_136 = arith.constant 1 : index
    %c0_137 = arith.constant 0 : index
    %c0_138 = arith.constant 0 : index
    %223 = vector.load %arg4[%c1_136, %c0_137, %c0_138] : memref<2x1x8xf32, #tpu.memory_space<vmem>>, vector<1x1x8xf32>
    %224 = vector.shape_cast %223 : vector<1x1x8xf32> to vector<1x8xf32>
    %cst_139 = arith.constant -1.000000e+09 : f32
    %225 = vector.broadcast %cst_139 : f32 to vector<1x8xf32>
    %226 = arith.mulf %224, %225 : vector<1x8xf32>
    %227 = vector.extract_strided_slice %31 {offsets = [8, 0], sizes = [8, 8], strides = [1, 1]} : vector<16x32xbf16> to vector<8x8xbf16>
    %228 = vector.extract_strided_slice %33 {offsets = [0, 8], sizes = [8, 8], strides = [1, 1]} : vector<32x16xbf16> to vector<8x8xbf16>
    %229 = vector.extract_strided_slice %30 {offsets = [8, 0], sizes = [8, 8], strides = [1, 1]} : vector<16x32xbf16> to vector<8x8xbf16>
    %cst_140 = arith.constant dense<0.000000e+00> : vector<8x8xf32>
    %230 = tpu.matmul %227, %228, %cst_140 {dimension_numbers = #tpu.dot_dimension_numbers<[1], [0], [0], [1], [0, 0, 1, 1], [], []>} : vector<8x8xbf16>, vector<8x8xbf16>, vector<8x8xf32> -> vector<8x8xf32>
    %231 = vector.broadcast %226 : vector<1x8xf32> to vector<8x8xf32>
    %232 = arith.addf %230, %231 : vector<8x8xf32>
    %cst_141 = arith.constant dense<0xFF800000> : vector<8xf32>
    %233 = vector.multi_reduction <maximumf>, %232, %cst_141 [1] : vector<8x8xf32> to vector<8xf32>
    %234 = vector.shape_cast %233 : vector<8xf32> to vector<8x1xf32>
    %235 = vector.broadcast %234 : vector<8x1xf32> to vector<8x8xf32>
    %236 = arith.subf %232, %235 : vector<8x8xf32>
    %237 = math.exp %236 : vector<8x8xf32>
    %cst_142 = arith.constant dense<0.000000e+00> : vector<8xf32>
    %238 = vector.multi_reduction <add>, %237, %cst_142 [1] : vector<8x8xf32> to vector<8xf32>
    %239 = vector.shape_cast %238 : vector<8xf32> to vector<8x1xf32>
    %240 = arith.truncf %237 : vector<8x8xf32> to vector<8x8xbf16>
    %cst_143 = arith.constant dense<0.000000e+00> : vector<8x8xf32>
    %241 = tpu.matmul %240, %229, %cst_143 {dimension_numbers = #tpu.dot_dimension_numbers<[1], [0], [0], [1], [0, 0, 1, 1], [], []>} : vector<8x8xbf16>, vector<8x8xbf16>, vector<8x8xf32> -> vector<8x8xf32>
    %242 = tpu.reciprocal %239 {approx = true} : vector<8x1xf32> -> vector<8x1xf32>
    %243 = vector.broadcast %242 : vector<8x1xf32> to vector<8x8xf32>
    %244 = arith.mulf %241, %243 : vector<8x8xf32>
    %245 = vector.extract_strided_slice %31 {offsets = [8, 8], sizes = [8, 8], strides = [1, 1]} : vector<16x32xbf16> to vector<8x8xbf16>
    %246 = vector.extract_strided_slice %33 {offsets = [8, 8], sizes = [8, 8], strides = [1, 1]} : vector<32x16xbf16> to vector<8x8xbf16>
    %247 = vector.extract_strided_slice %30 {offsets = [8, 8], sizes = [8, 8], strides = [1, 1]} : vector<16x32xbf16> to vector<8x8xbf16>
    %cst_144 = arith.constant dense<0.000000e+00> : vector<8x8xf32>
    %248 = tpu.matmul %245, %246, %cst_144 {dimension_numbers = #tpu.dot_dimension_numbers<[1], [0], [0], [1], [0, 0, 1, 1], [], []>} : vector<8x8xbf16>, vector<8x8xbf16>, vector<8x8xf32> -> vector<8x8xf32>
    %249 = vector.broadcast %226 : vector<1x8xf32> to vector<8x8xf32>
    %250 = arith.addf %248, %249 : vector<8x8xf32>
    %cst_145 = arith.constant dense<0xFF800000> : vector<8xf32>
    %251 = vector.multi_reduction <maximumf>, %250, %cst_145 [1] : vector<8x8xf32> to vector<8xf32>
    %252 = vector.shape_cast %251 : vector<8xf32> to vector<8x1xf32>
    %253 = vector.broadcast %252 : vector<8x1xf32> to vector<8x8xf32>
    %254 = arith.subf %250, %253 : vector<8x8xf32>
    %255 = math.exp %254 : vector<8x8xf32>
    %cst_146 = arith.constant dense<0.000000e+00> : vector<8xf32>
    %256 = vector.multi_reduction <add>, %255, %cst_146 [1] : vector<8x8xf32> to vector<8xf32>
    %257 = vector.shape_cast %256 : vector<8xf32> to vector<8x1xf32>
    %258 = arith.truncf %255 : vector<8x8xf32> to vector<8x8xbf16>
    %cst_147 = arith.constant dense<0.000000e+00> : vector<8x8xf32>
    %259 = tpu.matmul %258, %247, %cst_147 {dimension_numbers = #tpu.dot_dimension_numbers<[1], [0], [0], [1], [0, 0, 1, 1], [], []>} : vector<8x8xbf16>, vector<8x8xbf16>, vector<8x8xf32> -> vector<8x8xf32>
    %260 = tpu.reciprocal %257 {approx = true} : vector<8x1xf32> -> vector<8x1xf32>
    %261 = vector.broadcast %260 : vector<8x1xf32> to vector<8x8xf32>
    %262 = arith.mulf %259, %261 : vector<8x8xf32>
    %263 = vector.extract_strided_slice %31 {offsets = [8, 16], sizes = [8, 8], strides = [1, 1]} : vector<16x32xbf16> to vector<8x8xbf16>
    %264 = vector.extract_strided_slice %33 {offsets = [16, 8], sizes = [8, 8], strides = [1, 1]} : vector<32x16xbf16> to vector<8x8xbf16>
    %265 = vector.extract_strided_slice %30 {offsets = [8, 16], sizes = [8, 8], strides = [1, 1]} : vector<16x32xbf16> to vector<8x8xbf16>
    %cst_148 = arith.constant dense<0.000000e+00> : vector<8x8xf32>
    %266 = tpu.matmul %263, %264, %cst_148 {dimension_numbers = #tpu.dot_dimension_numbers<[1], [0], [0], [1], [0, 0, 1, 1], [], []>} : vector<8x8xbf16>, vector<8x8xbf16>, vector<8x8xf32> -> vector<8x8xf32>
    %267 = vector.broadcast %226 : vector<1x8xf32> to vector<8x8xf32>
    %268 = arith.addf %266, %267 : vector<8x8xf32>
    %cst_149 = arith.constant dense<0xFF800000> : vector<8xf32>
    %269 = vector.multi_reduction <maximumf>, %268, %cst_149 [1] : vector<8x8xf32> to vector<8xf32>
    %270 = vector.shape_cast %269 : vector<8xf32> to vector<8x1xf32>
    %271 = vector.broadcast %270 : vector<8x1xf32> to vector<8x8xf32>
    %272 = arith.subf %268, %271 : vector<8x8xf32>
    %273 = math.exp %272 : vector<8x8xf32>
    %cst_150 = arith.constant dense<0.000000e+00> : vector<8xf32>
    %274 = vector.multi_reduction <add>, %273, %cst_150 [1] : vector<8x8xf32> to vector<8xf32>
    %275 = vector.shape_cast %274 : vector<8xf32> to vector<8x1xf32>
    %276 = arith.truncf %273 : vector<8x8xf32> to vector<8x8xbf16>
    %cst_151 = arith.constant dense<0.000000e+00> : vector<8x8xf32>
    %277 = tpu.matmul %276, %265, %cst_151 {dimension_numbers = #tpu.dot_dimension_numbers<[1], [0], [0], [1], [0, 0, 1, 1], [], []>} : vector<8x8xbf16>, vector<8x8xbf16>, vector<8x8xf32> -> vector<8x8xf32>
    %278 = tpu.reciprocal %275 {approx = true} : vector<8x1xf32> -> vector<8x1xf32>
    %279 = vector.broadcast %278 : vector<8x1xf32> to vector<8x8xf32>
    %280 = arith.mulf %277, %279 : vector<8x8xf32>
    %281 = vector.extract_strided_slice %31 {offsets = [8, 24], sizes = [8, 8], strides = [1, 1]} : vector<16x32xbf16> to vector<8x8xbf16>
    %282 = vector.extract_strided_slice %33 {offsets = [24, 8], sizes = [8, 8], strides = [1, 1]} : vector<32x16xbf16> to vector<8x8xbf16>
    %283 = vector.extract_strided_slice %30 {offsets = [8, 24], sizes = [8, 8], strides = [1, 1]} : vector<16x32xbf16> to vector<8x8xbf16>
    %cst_152 = arith.constant dense<0.000000e+00> : vector<8x8xf32>
    %284 = tpu.matmul %281, %282, %cst_152 {dimension_numbers = #tpu.dot_dimension_numbers<[1], [0], [0], [1], [0, 0, 1, 1], [], []>} : vector<8x8xbf16>, vector<8x8xbf16>, vector<8x8xf32> -> vector<8x8xf32>
    %285 = vector.broadcast %226 : vector<1x8xf32> to vector<8x8xf32>
    %286 = arith.addf %284, %285 : vector<8x8xf32>
    %cst_153 = arith.constant dense<0xFF800000> : vector<8xf32>
    %287 = vector.multi_reduction <maximumf>, %286, %cst_153 [1] : vector<8x8xf32> to vector<8xf32>
    %288 = vector.shape_cast %287 : vector<8xf32> to vector<8x1xf32>
    %289 = vector.broadcast %288 : vector<8x1xf32> to vector<8x8xf32>
    %290 = arith.subf %286, %289 : vector<8x8xf32>
    %291 = math.exp %290 : vector<8x8xf32>
    %cst_154 = arith.constant dense<0.000000e+00> : vector<8xf32>
    %292 = vector.multi_reduction <add>, %291, %cst_154 [1] : vector<8x8xf32> to vector<8xf32>
    %293 = vector.shape_cast %292 : vector<8xf32> to vector<8x1xf32>
    %294 = arith.truncf %291 : vector<8x8xf32> to vector<8x8xbf16>
    %cst_155 = arith.constant dense<0.000000e+00> : vector<8x8xf32>
    %295 = tpu.matmul %294, %283, %cst_155 {dimension_numbers = #tpu.dot_dimension_numbers<[1], [0], [0], [1], [0, 0, 1, 1], [], []>} : vector<8x8xbf16>, vector<8x8xbf16>, vector<8x8xf32> -> vector<8x8xf32>
    %296 = tpu.reciprocal %293 {approx = true} : vector<8x1xf32> -> vector<8x1xf32>
    %297 = vector.broadcast %296 : vector<8x1xf32> to vector<8x8xf32>
    %298 = arith.mulf %295, %297 : vector<8x8xf32>
    %299 = tpu.concatenate %244, %262, %280, %298 in 1 : vector<8x8xf32>, vector<8x8xf32>, vector<8x8xf32>, vector<8x8xf32> -> vector<8x32xf32>
    %300 = arith.truncf %299 : vector<8x32xf32> to vector<8x32xbf16>
    %c2_156 = arith.constant 2 : index
    %c0_157 = arith.constant 0 : index
    %301 = vector.load %arg26[%c2_156, %c0_157] : memref<12x32xf32, #tpu.memory_space<vmem>>, vector<8x32xf32>
    tpu.vector_store %arg26[%c2_156, %c0_157], %299 {strides = array<i32>} : memref<12x32xf32, #tpu.memory_space<vmem>>, vector<8x32xf32>,
    %cst_158 = arith.constant 0.000000e+00 : f32
    %302 = vector.broadcast %cst_158 : f32 to vector<8x32xf32>
    %cst_159 = arith.constant 0.000000e+00 : f32
    %303 = vector.broadcast %cst_159 : f32 to vector<8x32xf32>
    %c1_160 = arith.constant 1 : index
    %c0_161 = arith.constant 0 : index
    %304 = vector.load %arg26[%c1_160, %c0_161] : memref<12x32xf32, #tpu.memory_space<vmem>>, vector<8x32xf32>
    %305 = arith.truncf %304 : vector<8x32xf32> to vector<8x32xbf16>
    %c0_162 = arith.constant 0 : index
    %c0_163 = arith.constant 0 : index
    %c0_164 = arith.constant 0 : index
    %306 = vector.load %arg13[%c0_162, %c0_163, %c0_164] : memref<3x32x32xbf16, #tpu.memory_space<vmem>>, vector<1x32x32xbf16>
    %307 = vector.shape_cast %306 : vector<1x32x32xbf16> to vector<32x32xbf16>
    %cst_165 = arith.constant dense<0.000000e+00> : vector<8x32xf32>
    %308 = tpu.matmul %305, %307, %cst_165 {dimension_numbers = #tpu.dot_dimension_numbers<[1], [0], [0], [1], [0, 0, 1, 1], [], []>} : vector<8x32xbf16>, vector<32x32xbf16>, vector<8x32xf32> -> vector<8x32xf32>
    %309 = arith.addf %303, %308 : vector<8x32xf32>
    %c1_166 = arith.constant 1 : index
    %c0_167 = arith.constant 0 : index
    %c0_168 = arith.constant 0 : index
    %310 = vector.load %arg13[%c1_166, %c0_167, %c0_168] : memref<3x32x32xbf16, #tpu.memory_space<vmem>>, vector<1x32x32xbf16>
    %311 = vector.shape_cast %310 : vector<1x32x32xbf16> to vector<32x32xbf16>
    %cst_169 = arith.constant dense<0.000000e+00> : vector<8x32xf32>
    %312 = tpu.matmul %300, %311, %cst_169 {dimension_numbers = #tpu.dot_dimension_numbers<[1], [0], [0], [1], [0, 0, 1, 1], [], []>} : vector<8x32xbf16>, vector<32x32xbf16>, vector<8x32xf32> -> vector<8x32xf32>
    %313 = arith.addf %309, %312 : vector<8x32xf32>
    %c3_170 = arith.constant 3 : index
    %c0_171 = arith.constant 0 : index
    %314 = vector.load %arg26[%c3_170, %c0_171] : memref<12x32xf32, #tpu.memory_space<vmem>>, vector<8x32xf32>
    %315 = arith.truncf %314 : vector<8x32xf32> to vector<8x32xbf16>
    %c2_172 = arith.constant 2 : index
    %c0_173 = arith.constant 0 : index
    %c0_174 = arith.constant 0 : index
    %316 = vector.load %arg13[%c2_172, %c0_173, %c0_174] : memref<3x32x32xbf16, #tpu.memory_space<vmem>>, vector<1x32x32xbf16>
    %317 = vector.shape_cast %316 : vector<1x32x32xbf16> to vector<32x32xbf16>
    %cst_175 = arith.constant dense<0.000000e+00> : vector<8x32xf32>
    %318 = tpu.matmul %315, %317, %cst_175 {dimension_numbers = #tpu.dot_dimension_numbers<[1], [0], [0], [1], [0, 0, 1, 1], [], []>} : vector<8x32xbf16>, vector<32x32xbf16>, vector<8x32xf32> -> vector<8x32xf32>
    %319 = arith.addf %313, %318 : vector<8x32xf32>
    %c0_176 = arith.constant 0 : index
    %c0_177 = arith.constant 0 : index
    %320 = vector.load %arg14[%c0_176, %c0_177] : memref<1x32xf32, #tpu.memory_space<vmem>>, vector<1x32xf32>
    %321 = vector.broadcast %320 : vector<1x32xf32> to vector<8x32xf32>
    %322 = arith.addf %319, %321 : vector<8x32xf32>
    %cst_178 = arith.constant 0.000000e+00 : f32
    %323 = vector.broadcast %cst_178 : f32 to vector<8x32xf32>
    %324 = arith.maximumf %322, %323 : vector<8x32xf32>
    %325 = arith.truncf %324 : vector<8x32xf32> to vector<8x32xbf16>
    %c0_179 = arith.constant 0 : index
    %c0_180 = arith.constant 0 : index
    %c0_181 = arith.constant 0 : index
    %326 = vector.load %arg17[%c0_179, %c0_180, %c0_181] : memref<3x32x32xbf16, #tpu.memory_space<vmem>>, vector<1x32x32xbf16>
    %327 = vector.shape_cast %326 : vector<1x32x32xbf16> to vector<32x32xbf16>
    %cst_182 = arith.constant dense<0.000000e+00> : vector<8x32xf32>
    %328 = tpu.matmul %325, %327, %cst_182 {dimension_numbers = #tpu.dot_dimension_numbers<[1], [0], [0], [1], [0, 0, 1, 1], [], []>} : vector<8x32xbf16>, vector<32x32xbf16>, vector<8x32xf32> -> vector<8x32xf32>
    %329 = arith.addf %302, %328 : vector<8x32xf32>
    %cst_183 = arith.constant 0.000000e+00 : f32
    %330 = vector.broadcast %cst_183 : f32 to vector<8x32xf32>
    %c0_184 = arith.constant 0 : index
    %c0_185 = arith.constant 0 : index
    %331 = vector.load %arg26[%c0_184, %c0_185] : memref<12x32xf32, #tpu.memory_space<vmem>>, vector<8x32xf32>
    %332 = arith.truncf %331 : vector<8x32xf32> to vector<8x32xbf16>
    %c0_186 = arith.constant 0 : index
    %c0_187 = arith.constant 0 : index
    %c0_188 = arith.constant 0 : index
    %333 = vector.load %arg15[%c0_186, %c0_187, %c0_188] : memref<5x32x32xbf16, #tpu.memory_space<vmem>>, vector<1x32x32xbf16>
    %334 = vector.shape_cast %333 : vector<1x32x32xbf16> to vector<32x32xbf16>
    %cst_189 = arith.constant dense<0.000000e+00> : vector<8x32xf32>
    %335 = tpu.matmul %332, %334, %cst_189 {dimension_numbers = #tpu.dot_dimension_numbers<[1], [0], [0], [1], [0, 0, 1, 1], [], []>} : vector<8x32xbf16>, vector<32x32xbf16>, vector<8x32xf32> -> vector<8x32xf32>
    %336 = arith.addf %330, %335 : vector<8x32xf32>
    %c1_190 = arith.constant 1 : index
    %c0_191 = arith.constant 0 : index
    %337 = vector.load %arg26[%c1_190, %c0_191] : memref<12x32xf32, #tpu.memory_space<vmem>>, vector<8x32xf32>
    %338 = arith.truncf %337 : vector<8x32xf32> to vector<8x32xbf16>
    %c1_192 = arith.constant 1 : index
    %c0_193 = arith.constant 0 : index
    %c0_194 = arith.constant 0 : index
    %339 = vector.load %arg15[%c1_192, %c0_193, %c0_194] : memref<5x32x32xbf16, #tpu.memory_space<vmem>>, vector<1x32x32xbf16>
    %340 = vector.shape_cast %339 : vector<1x32x32xbf16> to vector<32x32xbf16>
    %cst_195 = arith.constant dense<0.000000e+00> : vector<8x32xf32>
    %341 = tpu.matmul %338, %340, %cst_195 {dimension_numbers = #tpu.dot_dimension_numbers<[1], [0], [0], [1], [0, 0, 1, 1], [], []>} : vector<8x32xbf16>, vector<32x32xbf16>, vector<8x32xf32> -> vector<8x32xf32>
    %342 = arith.addf %336, %341 : vector<8x32xf32>
    %c2_196 = arith.constant 2 : index
    %c0_197 = arith.constant 0 : index
    %c0_198 = arith.constant 0 : index
    %343 = vector.load %arg15[%c2_196, %c0_197, %c0_198] : memref<5x32x32xbf16, #tpu.memory_space<vmem>>, vector<1x32x32xbf16>
    %344 = vector.shape_cast %343 : vector<1x32x32xbf16> to vector<32x32xbf16>
    %cst_199 = arith.constant dense<0.000000e+00> : vector<8x32xf32>
    %345 = tpu.matmul %300, %344, %cst_199 {dimension_numbers = #tpu.dot_dimension_numbers<[1], [0], [0], [1], [0, 0, 1, 1], [], []>} : vector<8x32xbf16>, vector<32x32xbf16>, vector<8x32xf32> -> vector<8x32xf32>
    %346 = arith.addf %342, %345 : vector<8x32xf32>
    %c3_200 = arith.constant 3 : index
    %c0_201 = arith.constant 0 : index
    %347 = vector.load %arg26[%c3_200, %c0_201] : memref<12x32xf32, #tpu.memory_space<vmem>>, vector<8x32xf32>
    %348 = arith.truncf %347 : vector<8x32xf32> to vector<8x32xbf16>
    %c3_202 = arith.constant 3 : index
    %c0_203 = arith.constant 0 : index
    %c0_204 = arith.constant 0 : index
    %349 = vector.load %arg15[%c3_202, %c0_203, %c0_204] : memref<5x32x32xbf16, #tpu.memory_space<vmem>>, vector<1x32x32xbf16>
    %350 = vector.shape_cast %349 : vector<1x32x32xbf16> to vector<32x32xbf16>
    %cst_205 = arith.constant dense<0.000000e+00> : vector<8x32xf32>
    %351 = tpu.matmul %348, %350, %cst_205 {dimension_numbers = #tpu.dot_dimension_numbers<[1], [0], [0], [1], [0, 0, 1, 1], [], []>} : vector<8x32xbf16>, vector<32x32xbf16>, vector<8x32xf32> -> vector<8x32xf32>
    %352 = arith.addf %346, %351 : vector<8x32xf32>
    %c4_206 = arith.constant 4 : index
    %c0_207 = arith.constant 0 : index
    %353 = vector.load %arg26[%c4_206, %c0_207] : memref<12x32xf32, #tpu.memory_space<vmem>>, vector<8x32xf32>
    %354 = arith.truncf %353 : vector<8x32xf32> to vector<8x32xbf16>
    %c4_208 = arith.constant 4 : index
    %c0_209 = arith.constant 0 : index
    %c0_210 = arith.constant 0 : index
    %355 = vector.load %arg15[%c4_208, %c0_209, %c0_210] : memref<5x32x32xbf16, #tpu.memory_space<vmem>>, vector<1x32x32xbf16>
    %356 = vector.shape_cast %355 : vector<1x32x32xbf16> to vector<32x32xbf16>
    %cst_211 = arith.constant dense<0.000000e+00> : vector<8x32xf32>
    %357 = tpu.matmul %354, %356, %cst_211 {dimension_numbers = #tpu.dot_dimension_numbers<[1], [0], [0], [1], [0, 0, 1, 1], [], []>} : vector<8x32xbf16>, vector<32x32xbf16>, vector<8x32xf32> -> vector<8x32xf32>
    %358 = arith.addf %352, %357 : vector<8x32xf32>
    %c0_212 = arith.constant 0 : index
    %c0_213 = arith.constant 0 : index
    %359 = vector.load %arg16[%c0_212, %c0_213] : memref<1x32xf32, #tpu.memory_space<vmem>>, vector<1x32xf32>
    %360 = vector.broadcast %359 : vector<1x32xf32> to vector<8x32xf32>
    %361 = arith.addf %358, %360 : vector<8x32xf32>
    %cst_214 = arith.constant 0.000000e+00 : f32
    %362 = vector.broadcast %cst_214 : f32 to vector<8x32xf32>
    %363 = arith.maximumf %361, %362 : vector<8x32xf32>
    %364 = arith.truncf %363 : vector<8x32xf32> to vector<8x32xbf16>
    %c1_215 = arith.constant 1 : index
    %c0_216 = arith.constant 0 : index
    %c0_217 = arith.constant 0 : index
    %365 = vector.load %arg17[%c1_215, %c0_216, %c0_217] : memref<3x32x32xbf16, #tpu.memory_space<vmem>>, vector<1x32x32xbf16>
    %366 = vector.shape_cast %365 : vector<1x32x32xbf16> to vector<32x32xbf16>
    %cst_218 = arith.constant dense<0.000000e+00> : vector<8x32xf32>
    %367 = tpu.matmul %364, %366, %cst_218 {dimension_numbers = #tpu.dot_dimension_numbers<[1], [0], [0], [1], [0, 0, 1, 1], [], []>} : vector<8x32xbf16>, vector<32x32xbf16>, vector<8x32xf32> -> vector<8x32xf32>
    %368 = arith.addf %329, %367 : vector<8x32xf32>
    %cst_219 = arith.constant 0.000000e+00 : f32
    %369 = vector.broadcast %cst_219 : f32 to vector<8x32xf32>
    %c0_220 = arith.constant 0 : index
    %c0_221 = arith.constant 0 : index
    %c0_222 = arith.constant 0 : index
    %370 = vector.load %arg11[%c0_220, %c0_221, %c0_222] : memref<1x32x32xbf16, #tpu.memory_space<vmem>>, vector<1x32x32xbf16>
    %371 = vector.shape_cast %370 : vector<1x32x32xbf16> to vector<32x32xbf16>
    %cst_223 = arith.constant dense<0.000000e+00> : vector<8x32xf32>
    %372 = tpu.matmul %300, %371, %cst_223 {dimension_numbers = #tpu.dot_dimension_numbers<[1], [0], [0], [1], [0, 0, 1, 1], [], []>} : vector<8x32xbf16>, vector<32x32xbf16>, vector<8x32xf32> -> vector<8x32xf32>
    %373 = arith.addf %369, %372 : vector<8x32xf32>
    %c0_224 = arith.constant 0 : index
    %c0_225 = arith.constant 0 : index
    %374 = vector.load %arg12[%c0_224, %c0_225] : memref<1x32xf32, #tpu.memory_space<vmem>>, vector<1x32xf32>
    %375 = vector.broadcast %374 : vector<1x32xf32> to vector<8x32xf32>
    %376 = arith.addf %373, %375 : vector<8x32xf32>
    %cst_226 = arith.constant 0.000000e+00 : f32
    %377 = vector.broadcast %cst_226 : f32 to vector<8x32xf32>
    %378 = arith.maximumf %376, %377 : vector<8x32xf32>
    %379 = arith.truncf %378 : vector<8x32xf32> to vector<8x32xbf16>
    %c2_227 = arith.constant 2 : index
    %c0_228 = arith.constant 0 : index
    %c0_229 = arith.constant 0 : index
    %380 = vector.load %arg17[%c2_227, %c0_228, %c0_229] : memref<3x32x32xbf16, #tpu.memory_space<vmem>>, vector<1x32x32xbf16>
    %381 = vector.shape_cast %380 : vector<1x32x32xbf16> to vector<32x32xbf16>
    %cst_230 = arith.constant dense<0.000000e+00> : vector<8x32xf32>
    %382 = tpu.matmul %379, %381, %cst_230 {dimension_numbers = #tpu.dot_dimension_numbers<[1], [0], [0], [1], [0, 0, 1, 1], [], []>} : vector<8x32xbf16>, vector<32x32xbf16>, vector<8x32xf32> -> vector<8x32xf32>
    %383 = arith.addf %368, %382 : vector<8x32xf32>
    %c0_231 = arith.constant 0 : index
    %c0_232 = arith.constant 0 : index
    %384 = vector.load %arg18[%c0_231, %c0_232] : memref<1x32xf32, #tpu.memory_space<vmem>>, vector<1x32xf32>
    %385 = vector.broadcast %384 : vector<1x32xf32> to vector<8x32xf32>
    %386 = arith.addf %383, %385 : vector<8x32xf32>
    %cst_233 = arith.constant 0.000000e+00 : f32
    %387 = vector.broadcast %cst_233 : f32 to vector<8x32xf32>
    %388 = arith.maximumf %386, %387 : vector<8x32xf32>
    %cst_234 = arith.constant dense<0.000000e+00> : vector<32xf32>
    %389 = vector.multi_reduction <add>, %299, %cst_234 [0] : vector<8x32xf32> to vector<32xf32>
    %390 = vector.shape_cast %389 : vector<32xf32> to vector<1x32xf32>
    %cst_235 = arith.constant 8.000000e+00 : f32
    %391 = vector.broadcast %cst_235 : f32 to vector<1x32xf32>
    %392 = arith.divf %390, %391 : vector<1x32xf32>
    %c0_236 = arith.constant 0 : index
    %c0_237 = arith.constant 0 : index
    %393 = vector.load %arg19[%c0_236, %c0_237] : memref<32x16xf32, #tpu.memory_space<vmem>>, vector<32x16xf32>
    %cst_238 = arith.constant dense<0.000000e+00> : vector<1x16xf32>
    %394 = tpu.matmul %392, %393, %cst_238 {dimension_numbers = #tpu.dot_dimension_numbers<[1], [0], [0], [1], [0, 0, 1, 1], [], []>} : vector<1x32xf32>, vector<32x16xf32>, vector<1x16xf32> -> vector<1x16xf32>
    %c0_239 = arith.constant 0 : index
    %c0_240 = arith.constant 0 : index
    %395 = vector.load %arg20[%c0_239, %c0_240] : memref<1x16xf32, #tpu.memory_space<vmem>>, vector<1x16xf32>
    %396 = arith.addf %394, %395 : vector<1x16xf32>
    %cst_241 = arith.constant 0.000000e+00 : f32
    %397 = vector.broadcast %cst_241 : f32 to vector<1x16xf32>
    %398 = arith.maximumf %396, %397 : vector<1x16xf32>
    %c0_242 = arith.constant 0 : index
    %c0_243 = arith.constant 0 : index
    %399 = vector.load %arg21[%c0_242, %c0_243] : memref<16x1xf32, #tpu.memory_space<vmem>>, vector<16x1xf32>
    %cst_244 = arith.constant dense<0.000000e+00> : vector<1x1xf32>
    %400 = tpu.matmul %398, %399, %cst_244 {dimension_numbers = #tpu.dot_dimension_numbers<[1], [0], [0], [1], [0, 0, 1, 1], [], []>} : vector<1x16xf32>, vector<16x1xf32>, vector<1x1xf32> -> vector<1x1xf32>
    %c0_245 = arith.constant 0 : index
    %c0_246 = arith.constant 0 : index
    %401 = vector.load %arg22[%c0_245, %c0_246] : memref<1x1xf32, #tpu.memory_space<vmem>>, vector<1x1xf32>
    %402 = arith.addf %400, %401 : vector<1x1xf32>
    %403 = arith.negf %402 : vector<1x1xf32>
    %404 = math.exp %403 : vector<1x1xf32>
    %cst_247 = arith.constant 1.000000e+00 : f32
    %405 = vector.broadcast %cst_247 : f32 to vector<1x1xf32>
    %406 = arith.addf %405, %404 : vector<1x1xf32>
    %407 = arith.divf %405, %406 : vector<1x1xf32>
    %408 = arith.subf %388, %299 : vector<8x32xf32>
    %409 = vector.broadcast %407 : vector<1x1xf32> to vector<8x32xf32>
    %410 = arith.mulf %409, %408 : vector<8x32xf32>
    %411 = arith.addf %299, %410 : vector<8x32xf32>
    %412 = tpu.concatenate %222, %411 in 0 : vector<8x32xf32>, vector<8x32xf32> -> vector<16x32xf32>
    %413 = arith.truncf %412 : vector<16x32xf32> to vector<16x32xbf16>
    %c0_248 = arith.constant 0 : index
    %c0_249 = arith.constant 0 : index
    %414 = vector.load %arg23[%c0_248, %c0_249] : memref<32x32xbf16, #tpu.memory_space<vmem>>, vector<32x32xbf16>
    %cst_250 = arith.constant dense<0.000000e+00> : vector<16x32xf32>
    %415 = tpu.matmul %413, %414, %cst_250 {dimension_numbers = #tpu.dot_dimension_numbers<[1], [0], [0], [1], [0, 0, 1, 1], [], []>} : vector<16x32xbf16>, vector<32x32xbf16>, vector<16x32xf32> -> vector<16x32xf32>
    %c0_251 = arith.constant 0 : index
    %c0_252 = arith.constant 0 : index
    %416 = vector.load %arg24[%c0_251, %c0_252] : memref<1x32xf32, #tpu.memory_space<vmem>>, vector<1x32xf32>
    %417 = vector.broadcast %416 : vector<1x32xf32> to vector<16x32xf32>
    %418 = arith.addf %415, %417 : vector<16x32xf32>
    %419 = vector.shape_cast %418 : vector<16x32xf32> to vector<2x8x32xf32>
    %c0_253 = arith.constant 0 : index
    %c0_254 = arith.constant 0 : index
    %c0_255 = arith.constant 0 : index
    %420 = vector.load %arg25[%c0_253, %c0_254, %c0_255] : memref<2x8x32xf32, #tpu.memory_space<vmem>>, vector<2x8x32xf32>
    tpu.vector_store %arg25[%c0_253, %c0_254, %c0_255], %419 {strides = array<i32>} : memref<2x8x32xf32, #tpu.memory_space<vmem>>, vector<2x8x32xf32>,
    return
  }
  func.func @transform_0(%arg0: i32) -> (i32, i32, i32) {
    %c0_i32 = arith.constant 0 : i32
    %c0_i32_0 = arith.constant 0 : i32
    %c0_i32_1 = arith.constant 0 : i32
    return %arg0, %c0_i32, %c0_i32_0 : i32, i32, i32
  }
  func.func @transform_1(%arg0: i32) -> (i32, i32, i32) {
    %c0_i32 = arith.constant 0 : i32
    %c0_i32_0 = arith.constant 0 : i32
    %c0_i32_1 = arith.constant 0 : i32
    return %arg0, %c0_i32, %c0_i32_0 : i32, i32, i32
  }
  func.func @transform_2(%arg0: i32) -> (i32, i32, i32) {
    %c0_i32 = arith.constant 0 : i32
    %c0_i32_0 = arith.constant 0 : i32
    %c0_i32_1 = arith.constant 0 : i32
    return %arg0, %c0_i32, %c0_i32_0 : i32, i32, i32
  }
  func.func @transform_3(%arg0: i32) -> (i32, i32, i32) {
    %c0_i32 = arith.constant 0 : i32
    %c0_i32_0 = arith.constant 0 : i32
    %c0_i32_1 = arith.constant 0 : i32
    return %arg0, %c0_i32, %c0_i32_0 : i32, i32, i32
  }
  func.func @transform_4(%arg0: i32) -> (i32, i32) {
    %c0_i32 = arith.constant 0 : i32
    %c0_i32_0 = arith.constant 0 : i32
    %c0_i32_1 = arith.constant 0 : i32
    return %c0_i32, %c0_i32_0 : i32, i32
  }
  func.func @transform_5(%arg0: i32) -> (i32, i32) {
    %c0_i32 = arith.constant 0 : i32
    %c0_i32_0 = arith.constant 0 : i32
    %c0_i32_1 = arith.constant 0 : i32
    return %c0_i32, %c0_i32_0 : i32, i32
  }
  func.func @transform_6(%arg0: i32) -> (i32, i32) {
    %c0_i32 = arith.constant 0 : i32
    %c0_i32_0 = arith.constant 0 : i32
    %c0_i32_1 = arith.constant 0 : i32
    return %c0_i32, %c0_i32_0 : i32, i32
  }
  func.func @transform_7(%arg0: i32) -> (i32, i32) {
    %c0_i32 = arith.constant 0 : i32
    %c0_i32_0 = arith.constant 0 : i32
    %c0_i32_1 = arith.constant 0 : i32
    return %c0_i32, %c0_i32_0 : i32, i32
  }
  func.func @transform_8(%arg0: i32) -> (i32, i32) {
    %c0_i32 = arith.constant 0 : i32
    %c0_i32_0 = arith.constant 0 : i32
    %c0_i32_1 = arith.constant 0 : i32
    return %c0_i32, %c0_i32_0 : i32, i32
  }
  func.func @transform_9(%arg0: i32) -> (i32, i32) {
    %c0_i32 = arith.constant 0 : i32
    %c0_i32_0 = arith.constant 0 : i32
    %c0_i32_1 = arith.constant 0 : i32
    return %c0_i32, %c0_i32_0 : i32, i32
  }
  func.func @transform_10(%arg0: i32) -> (i32, i32, i32) {
    %c0_i32 = arith.constant 0 : i32
    %c0_i32_0 = arith.constant 0 : i32
    %c0_i32_1 = arith.constant 0 : i32
    %c0_i32_2 = arith.constant 0 : i32
    return %c0_i32, %c0_i32_0, %c0_i32_1 : i32, i32, i32
  }
  func.func @transform_11(%arg0: i32) -> (i32, i32) {
    %c0_i32 = arith.constant 0 : i32
    %c0_i32_0 = arith.constant 0 : i32
    %c0_i32_1 = arith.constant 0 : i32
    return %c0_i32, %c0_i32_0 : i32, i32
  }
  func.func @transform_12(%arg0: i32) -> (i32, i32, i32) {
    %c0_i32 = arith.constant 0 : i32
    %c0_i32_0 = arith.constant 0 : i32
    %c0_i32_1 = arith.constant 0 : i32
    %c0_i32_2 = arith.constant 0 : i32
    return %c0_i32, %c0_i32_0, %c0_i32_1 : i32, i32, i32
  }
  func.func @transform_13(%arg0: i32) -> (i32, i32) {
    %c0_i32 = arith.constant 0 : i32
    %c0_i32_0 = arith.constant 0 : i32
    %c0_i32_1 = arith.constant 0 : i32
    return %c0_i32, %c0_i32_0 : i32, i32
  }
  func.func @transform_14(%arg0: i32) -> (i32, i32, i32) {
    %c0_i32 = arith.constant 0 : i32
    %c0_i32_0 = arith.constant 0 : i32
    %c0_i32_1 = arith.constant 0 : i32
    %c0_i32_2 = arith.constant 0 : i32
    return %c0_i32, %c0_i32_0, %c0_i32_1 : i32, i32, i32
  }
  func.func @transform_15(%arg0: i32) -> (i32, i32) {
    %c0_i32 = arith.constant 0 : i32
    %c0_i32_0 = arith.constant 0 : i32
    %c0_i32_1 = arith.constant 0 : i32
    return %c0_i32, %c0_i32_0 : i32, i32
  }
  func.func @transform_16(%arg0: i32) -> (i32, i32, i32) {
    %c0_i32 = arith.constant 0 : i32
    %c0_i32_0 = arith.constant 0 : i32
    %c0_i32_1 = arith.constant 0 : i32
    %c0_i32_2 = arith.constant 0 : i32
    return %c0_i32, %c0_i32_0, %c0_i32_1 : i32, i32, i32
  }
  func.func @transform_17(%arg0: i32) -> (i32, i32) {
    %c0_i32 = arith.constant 0 : i32
    %c0_i32_0 = arith.constant 0 : i32
    %c0_i32_1 = arith.constant 0 : i32
    return %c0_i32, %c0_i32_0 : i32, i32
  }
  func.func @transform_18(%arg0: i32) -> (i32, i32) {
    %c0_i32 = arith.constant 0 : i32
    %c0_i32_0 = arith.constant 0 : i32
    %c0_i32_1 = arith.constant 0 : i32
    return %c0_i32, %c0_i32_0 : i32, i32
  }
  func.func @transform_19(%arg0: i32) -> (i32, i32) {
    %c0_i32 = arith.constant 0 : i32
    %c0_i32_0 = arith.constant 0 : i32
    %c0_i32_1 = arith.constant 0 : i32
    return %c0_i32, %c0_i32_0 : i32, i32
  }
  func.func @transform_20(%arg0: i32) -> (i32, i32) {
    %c0_i32 = arith.constant 0 : i32
    %c0_i32_0 = arith.constant 0 : i32
    %c0_i32_1 = arith.constant 0 : i32
    return %c0_i32, %c0_i32_0 : i32, i32
  }
  func.func @transform_21(%arg0: i32) -> (i32, i32) {
    %c0_i32 = arith.constant 0 : i32
    %c0_i32_0 = arith.constant 0 : i32
    %c0_i32_1 = arith.constant 0 : i32
    return %c0_i32, %c0_i32_0 : i32, i32
  }
  func.func @transform_22(%arg0: i32) -> (i32, i32) {
    %c0_i32 = arith.constant 0 : i32
    %c0_i32_0 = arith.constant 0 : i32
    %c0_i32_1 = arith.constant 0 : i32
    return %c0_i32, %c0_i32_0 : i32, i32
  }
  func.func @transform_23(%arg0: i32) -> (i32, i32) {
    %c0_i32 = arith.constant 0 : i32
    %c0_i32_0 = arith.constant 0 : i32
    %c0_i32_1 = arith.constant 0 : i32
    return %c0_i32, %c0_i32_0 : i32, i32
  }
  func.func @transform_24(%arg0: i32) -> (i32, i32, i32) {
    %c0_i32 = arith.constant 0 : i32
    %c0_i32_0 = arith.constant 0 : i32
    %c0_i32_1 = arith.constant 0 : i32
    return %arg0, %c0_i32, %c0_i32_0 : i32, i32, i32
  }
}

</mosaic_0001>

<llo_original>
// kernel: tpu_custom_call.1
$region0: #{tpu_custom_call.1}
  #allocation0 [shape = 'u32[]', space=smem, size = 0x4, offset = 0x4, fixed_abs, tag = 'smem constant byte address 0x4 - core index']
  #allocation1 [shape = 'u32[144,128]{1,0:T(1,128)}', space=vmem, size = 0x12000, scoped, tag = 'internal scratch']
  #allocation2 [shape = 'f32[12,32]{1,0:T(8,128)}', space=vmem, size = 0x2000, scoped, tag = 'scratch operand']
  #allocation3 [shape = 'f32[1,1]{1,0:T(1,128)S(1)}', space=vmem, size = 0x200, scoped, tag = 'scoped memory for tpu_custom_call.1']
  %s0 = inlined_call_operand.hbm [shape: f32[4,8,32], index: 0, kind: input, shape index: {}]
  %s1 = inlined_call_operand.hbm [shape: f32[4,8,32], index: 1, kind: input, shape index: {}]
  %s2 = inlined_call_operand.hbm [shape: f32[4,8,32], index: 2, kind: input, shape index: {}]
  %s3 = inlined_call_operand.hbm [shape: f32[4,1,8], index: 3, kind: input, shape index: {}]
  %s4 = inlined_call_operand.hbm [shape: bf16[32,32], index: 4, kind: input, shape index: {}]
  %s5 = inlined_call_operand.hbm [shape: f32[1,32], index: 5, kind: input, shape index: {}]
  %s6 = inlined_call_operand.hbm [shape: bf16[32,32], index: 6, kind: input, shape index: {}]
  %s7 = inlined_call_operand.hbm [shape: f32[1,32], index: 7, kind: input, shape index: {}]
  %s8 = inlined_call_operand.hbm [shape: bf16[32,32], index: 8, kind: input, shape index: {}]
  %s9 = inlined_call_operand.hbm [shape: f32[1,32], index: 9, kind: input, shape index: {}]
  %s10 = inlined_call_operand.hbm [shape: bf16[1,32,32], index: 10, kind: input, shape index: {}]
  %s11 = inlined_call_operand.hbm [shape: f32[1,32], index: 11, kind: input, shape index: {}]
  %s12 = inlined_call_operand.hbm [shape: bf16[3,32,32], index: 12, kind: input, shape index: {}]
  %s13 = inlined_call_operand.hbm [shape: f32[1,32], index: 13, kind: input, shape index: {}]
  %s14 = inlined_call_operand.vmem [shape: bf16[5,32,32], index: 14, kind: input, shape index: {}]
  %s15 = inlined_call_operand.hbm [shape: f32[1,32], index: 15, kind: input, shape index: {}]
  %s16 = inlined_call_operand.hbm [shape: bf16[3,32,32], index: 16, kind: input, shape index: {}]
  %s17 = inlined_call_operand.vmem [shape: f32[1,32], index: 17, kind: input, shape index: {}]
  %s18 = inlined_call_operand.vmem [shape: f32[32,16], index: 18, kind: input, shape index: {}]
  %s19 = inlined_call_operand.vmem [shape: f32[1,16], index: 19, kind: input, shape index: {}]
  %s20 = inlined_call_operand.vmem [shape: f32[16,1], index: 20, kind: input, shape index: {}]
  %s21 = inlined_call_operand.<no memory space> [shape: f32[1,1], index: 21, kind: input, shape index: {}]
  %s22 = inlined_call_operand.hbm [shape: bf16[32,32], index: 22, kind: input, shape index: {}]
  %s23 = inlined_call_operand.vmem [shape: f32[1,32], index: 23, kind: input, shape index: {}]
  %s24 = inlined_call_operand.hbm [shape: f32[4,8,32], index: 24, kind: output, shape index: {}]
  %s25 = sld [smem:[#allocation0]]
  $region197: #{tpu_custom_call.1} parent=0
    _
  %s27 = ssub.s32 1, %s25
  %s28 = scalar_select 0, %s27, %s25
  %v29 = vstv %s21
  %30 = vst [vmem:[#allocation3] sm:$0x1] %v29
  $region1: #{tpu_custom_call.1} parent=0
    #allocation4 [shape = 'u8[16384]{0}', space=vmem, size = 0x4000, scoped, tag = 'input window, operand 0']
    #allocation5 [shape = 's32[2]{0}', space=sflag, size = 0x8, scoped, tag = 'scoped memory for tpu_custom_call.1']
    #allocation6 [shape = 's32[2]{0}', space=sflag, size = 0x8, scoped, tag = 'scoped memory for tpu_custom_call.1']
    #allocation7 [shape = 'u8[16384]{0}', space=vmem, size = 0x4000, scoped, tag = 'input window, operand 1']
    #allocation8 [shape = 's32[2]{0}', space=sflag, size = 0x8, scoped, tag = 'scoped memory for tpu_custom_call.1']
    #allocation9 [shape = 'u8[16384]{0}', space=vmem, size = 0x4000, scoped, tag = 'input window, operand 2']
    #allocation10 [shape = 'u8[2048]{0}', space=vmem, size = 0x800, scoped, tag = 'input window, operand 3']
    #allocation11 [shape = 's32[2]{0}', space=sflag, size = 0x8, scoped, tag = 'scoped memory for tpu_custom_call.1']
    #allocation12 [shape = 'u8[8192]{0}', space=vmem, size = 0x2000, scoped, tag = 'input window, operand 4, single buffered']
    #allocation13 [shape = 'u8[512]{0}', space=vmem, size = 0x400, scoped, tag = 'input window, operand 5, single buffered']
    #allocation14 [shape = 's32[1]{0}', space=sflag, size = 0x4, scoped, tag = 'scoped memory for tpu_custom_call.1']
    #allocation15 [shape = 'u8[8192]{0}', space=vmem, size = 0x2000, scoped, tag = 'input window, operand 6, single buffered']
    #allocation16 [shape = 'u8[512]{0}', space=vmem, size = 0x400, scoped, tag = 'input window, operand 7, single buffered']
    #allocation17 [shape = 's32[1]{0}', space=sflag, size = 0x4, scoped, tag = 'scoped memory for tpu_custom_call.1']
    #allocation18 [shape = 'u8[8192]{0}', space=vmem, size = 0x2000, scoped, tag = 'input window, operand 8, single buffered']
    #allocation19 [shape = 'u8[512]{0}', space=vmem, size = 0x400, scoped, tag = 'input window, operand 9, single buffered']
    #allocation20 [shape = 's32[1]{0}', space=sflag, size = 0x4, scoped, tag = 'scoped memory for tpu_custom_call.1']
    #allocation21 [shape = 'u8[8192]{0}', space=vmem, size = 0x2000, scoped, tag = 'input window, operand 10, single buffered']
    #allocation22 [shape = 'u8[512]{0}', space=vmem, size = 0x400, scoped, tag = 'input window, operand 11, single buffered']
    #allocation23 [shape = 's32[1]{0}', space=sflag, size = 0x4, scoped, tag = 'scoped memory for tpu_custom_call.1']
    #allocation24 [shape = 'u8[24576]{0}', space=vmem, size = 0x6000, scoped, tag = 'input window, operand 12, single buffered']
    #allocation25 [shape = 'u8[512]{0}', space=vmem, size = 0x400, scoped, tag = 'input window, operand 13, single buffered']
    #allocation26 [shape = 's32[1]{0}', space=sflag, size = 0x4, scoped, tag = 'scoped memory for tpu_custom_call.1']
    #allocation27 [shape = 'u8[512]{0}', space=vmem, size = 0x400, scoped, tag = 'input window, operand 15, single buffered']
    #allocation28 [shape = 'u8[24576]{0}', space=vmem, size = 0x6000, scoped, tag = 'input window, operand 16, single buffered']
    #allocation29 [shape = 's32[1]{0}', space=sflag, size = 0x4, scoped, tag = 'scoped memory for tpu_custom_call.1']
    #allocation30 [shape = 'u8[8192]{0}', space=vmem, size = 0x2000, scoped, tag = 'input window, operand 22, single buffered']
    #allocation31 [shape = 'u8[16384]{0}', space=vmem, size = 0x4000, scoped, tag = 'output window, operand 0']
    %31 = vsyncpa [#allocation5], 0
    %s32 = scalar_lea.sflag [#allocation5], 1
    %33 = vsyncpa %s32, 0
    %34 = vsyncpa [#allocation8], 0
    %s35 = scalar_lea.sflag [#allocation8], 1
    %36 = vsyncpa %s35, 0
    %37 = vsyncpa [#allocation11], 0
    %s38 = scalar_lea.sflag [#allocation11], 1
    %39 = vsyncpa %s38, 0
    %40 = vsyncpa [#allocation14], 0
    %41 = vsyncpa [#allocation17], 0
    %42 = vsyncpa [#allocation20], 0
    %43 = vsyncpa [#allocation23], 0
    %44 = vsyncpa [#allocation26], 0
    %45 = vsyncpa [#allocation29], 0
    %46 = vsyncpa [#allocation6], 0
    %s47 = scalar_lea.sflag [#allocation6], 1
    %48 = vsyncpa %s47, 0
    loop: start=0, step=1, limit=4
    $region2: #{tpu_custom_call.1} parent=1 // loop_pre_header
      _
    $region3: #{tpu_custom_call.1} parent=1 // loop_header
      %s50 = sphi 0, %s54
      %p51 = scmp.ge.s32.totalorder %s50, 4
      %s60 = sphi 0, %s62
      %s63 = sphi 0, %s60
      %s64 = sphi 0, %s63
      %s80 = sphi 0, %s64
      %s86 = sphi 0, %s88
      %s89 = sphi 0, %s86
      %s90 = sphi 0, %s89
      %s106 = sphi 0, %s90
      %s112 = sphi 0, %s114
      %s115 = sphi 0, %s112
      %s116 = sphi 0, %s115
      %s132 = sphi 0, %s116
      %s138 = sphi 0, %s140
      %s141 = sphi 0, %s138
      %s142 = sphi 0, %s141
      %s158 = sphi 0, %s142
      %s162 = sphi 0, %s162
      %s164 = sphi 0, %s162
      %s165 = sphi 0, %s164
      %s179 = sphi 0, %s165
      %s183 = sphi 0, %s183
      %s185 = sphi 0, %s183
      %s186 = sphi 0, %s185
      %s200 = sphi 0, %s186
      %s204 = sphi 0, %s204
      %s206 = sphi 0, %s204
      %s207 = sphi 0, %s206
      %s221 = sphi 0, %s207
      %s225 = sphi 0, %s225
      %s227 = sphi 0, %s225
      %s228 = sphi 0, %s227
      %s242 = sphi 0, %s228
      %s246 = sphi 0, %s246
      %s248 = sphi 0, %s246
      %s249 = sphi 0, %s248
      %s263 = sphi 0, %s249
      %s267 = sphi 0, %s267
      %s269 = sphi 0, %s267
      %s270 = sphi 0, %s269
      %s284 = sphi 0, %s270
      %s288 = sphi 0, %s288
      %s290 = sphi 0, %s288
      %s291 = sphi 0, %s290
      %s305 = sphi 0, %s291
      %s309 = sphi 0, %s309
      %s311 = sphi 0, %s309
      %s312 = sphi 0, %s311
      %s326 = sphi 0, %s312
      %s330 = sphi 0, %s330
      %s332 = sphi 0, %s330
      %s333 = sphi 0, %s332
      %s347 = sphi 0, %s333
      %s351 = sphi 0, %s351
      %s353 = sphi 0, %s351
      %s354 = sphi 0, %s353
      %s368 = sphi 0, %s354
      %s372 = sphi 0, %s372
      %s374 = sphi 0, %s372
      %s375 = sphi 0, %s374
      %s389 = sphi 0, %s375
      %s393 = sphi 0, %s393
      %s395 = sphi 0, %s393
      %s396 = sphi 0, %s395
      %s410 = sphi 0, %s396
      %s414 = sphi 0, %s414
      %s416 = sphi 0, %s414
      %s417 = sphi 0, %s416
      %s431 = sphi 0, %s417
      %s435 = sphi 0, %s435
      %s437 = sphi 0, %s435
      %s438 = sphi 0, %s437
      %s452 = sphi 0, %s438
      %s456 = sphi 0, %s456
      %s458 = sphi 0, %s456
      %s459 = sphi 0, %s458
      %s473 = sphi 0, %s459
      %s477 = sphi 0, %s477
      %s479 = sphi 0, %s477
      %s480 = sphi 0, %s479
      %s494 = sphi 0, %s480
      %s498 = sphi 0, %s498
      %s500 = sphi 0, %s498
      %s501 = sphi 0, %s500
      %s515 = sphi 0, %s501
      %s519 = sphi 0, %s519
      %s521 = sphi 0, %s519
      %s522 = sphi 0, %s521
      %s536 = sphi 0, %s522
      %s540 = sphi 0, %s540
      %s542 = sphi 0, %s540
      %s543 = sphi 0, %s542
      %s557 = sphi 0, %s543
      %s561 = sphi 0, %s561
      %s563 = sphi 0, %s561
      %s564 = sphi 0, %s563
      %s578 = sphi 0, %s564
      %s584 = sphi 0, %s586
      %s587 = sphi 0, %s584
      %s588 = sphi 0, %s587
      %s604 = sphi 0, %s588
    $region4: #{tpu_custom_call.1} parent=1 // loop_header_branch
      %53 = sbr.rel (%p51) target = $region8
    $region5: #{tpu_custom_call.1} parent=1 // loop_body
      %s55 = ssub.s32 %s50, 1
      %s56 = ssub.s32 %s50, 2
      %s57 = sadd.s32 %s50, 1
      %s58 = ssub.s32 %s50, %s57
      %p59 = scmp.eq.s32.totalorder %s58, 0
      %s61 = sadd.s32 %s60, 1
      %s62 = scalar_select %p59, %s60, %s61
      %p65 = pneg %p59
      %p66 = scmp.eq.s32.totalorder %s50, 1
      %p67 = por %p65, %p66
      %p68 = scmp.ne.s32.totalorder %s60, %s63
      %p69 = scmp.eq.s32.totalorder %s50, 0
      %p70 = por %p68, %p69
      %p71 = scmp.ne.s32.totalorder %s60, %s63
      %p72 = scmp.eq.s32.totalorder %s55, 1
      %p73 = por %p71, %p72
      %p74 = scmp.ne.s32.totalorder %s63, %s64
      %p75 = scmp.eq.s32.totalorder %s55, 0
      %p76 = por %p74, %p75
      %p77 = scmp.ne.s32.totalorder %s63, %s64
      %p78 = scmp.eq.s32.totalorder %s56, 1
      %p79 = por %p77, %p78
      %p81 = scmp.ne.s32.totalorder %s64, %s80
      %p82 = scmp.eq.s32.totalorder %s56, 0
      %p83 = por %p81, %p82
      %s84 = ssub.s32 %s50, %s57
      %p85 = scmp.eq.s32.totalorder %s84, 0
      %s87 = sadd.s32 %s86, 1
      %s88 = scalar_select %p85, %s86, %s87
      %p91 = pneg %p85
      %p92 = scmp.eq.s32.totalorder %s50, 1
      %p93 = por %p91, %p92
      %p94 = scmp.ne.s32.totalorder %s86, %s89
      %p95 = scmp.eq.s32.totalorder %s50, 0
      %p96 = por %p94, %p95
      %p97 = scmp.ne.s32.totalorder %s86, %s89
      %p98 = scmp.eq.s32.totalorder %s55, 1
      %p99 = por %p97, %p98
      %p100 = scmp.ne.s32.totalorder %s89, %s90
      %p101 = scmp.eq.s32.totalorder %s55, 0
      %p102 = por %p100, %p101
      %p103 = scmp.ne.s32.totalorder %s89, %s90
      %p104 = scmp.eq.s32.totalorder %s56, 1
      %p105 = por %p103, %p104
      %p107 = scmp.ne.s32.totalorder %s90, %s106
      %p108 = scmp.eq.s32.totalorder %s56, 0
      %p109 = por %p107, %p108
      %s110 = ssub.s32 %s50, %s57
      %p111 = scmp.eq.s32.totalorder %s110, 0
      %s113 = sadd.s32 %s112, 1
      %s114 = scalar_select %p111, %s112, %s113
      %p117 = pneg %p111
      %p118 = scmp.eq.s32.totalorder %s50, 1
      %p119 = por %p117, %p118
      %p120 = scmp.ne.s32.totalorder %s112, %s115
      %p121 = scmp.eq.s32.totalorder %s50, 0
      %p122 = por %p120, %p121
      %p123 = scmp.ne.s32.totalorder %s112, %s115
      %p124 = scmp.eq.s32.totalorder %s55, 1
      %p125 = por %p123, %p124
      %p126 = scmp.ne.s32.totalorder %s115, %s116
      %p127 = scmp.eq.s32.totalorder %s55, 0
      %p128 = por %p126, %p127
      %p129 = scmp.ne.s32.totalorder %s115, %s116
      %p130 = scmp.eq.s32.totalorder %s56, 1
      %p131 = por %p129, %p130
      %p133 = scmp.ne.s32.totalorder %s116, %s132
      %p134 = scmp.eq.s32.totalorder %s56, 0
      %p135 = por %p133, %p134
      %s136 = ssub.s32 %s50, %s57
      %p137 = scmp.eq.s32.totalorder %s136, 0
      %s139 = sadd.s32 %s138, 1
      %s140 = scalar_select %p137, %s138, %s139
      %p143 = pneg %p137
      %p144 = scmp.eq.s32.totalorder %s50, 1
      %p145 = por %p143, %p144
      %p146 = scmp.ne.s32.totalorder %s138, %s141
      %p147 = scmp.eq.s32.totalorder %s50, 0
      %p148 = por %p146, %p147
      %p149 = scmp.ne.s32.totalorder %s138, %s141
      %p150 = scmp.eq.s32.totalorder %s55, 1
      %p151 = por %p149, %p150
      %p152 = scmp.ne.s32.totalorder %s141, %s142
      %p153 = scmp.eq.s32.totalorder %s55, 0
      %p154 = por %p152, %p153
      %p155 = scmp.ne.s32.totalorder %s141, %s142
      %p156 = scmp.eq.s32.totalorder %s56, 1
      %p157 = por %p155, %p156
      %p159 = scmp.ne.s32.totalorder %s142, %s158
      %p160 = scmp.eq.s32.totalorder %s56, 0
      %p161 = por %p159, %p160
      %s163 = sadd.s32 %s162, 1
      %p166 = scmp.eq.s32.totalorder %s50, 1
      %p167 = scmp.ne.s32.totalorder %s162, %s164
      %p168 = scmp.eq.s32.totalorder %s50, 0
      %p169 = por %p167, %p168
      %p170 = scmp.ne.s32.totalorder %s162, %s164
      %p171 = scmp.eq.s32.totalorder %s55, 1
      %p172 = por %p170, %p171
      %p173 = scmp.ne.s32.totalorder %s164, %s165
      %p174 = scmp.eq.s32.totalorder %s55, 0
      %p175 = por %p173, %p174
      %p176 = scmp.ne.s32.totalorder %s164, %s165
      %p177 = scmp.eq.s32.totalorder %s56, 1
      %p178 = por %p176, %p177
      %p180 = scmp.ne.s32.totalorder %s165, %s179
      %p181 = scmp.eq.s32.totalorder %s56, 0
      %p182 = por %p180, %p181
      %s184 = sadd.s32 %s183, 1
      %p187 = scmp.eq.s32.totalorder %s50, 1
      %p188 = scmp.ne.s32.totalorder %s183, %s185
      %p189 = scmp.eq.s32.totalorder %s50, 0
      %p190 = por %p188, %p189
      %p191 = scmp.ne.s32.totalorder %s183, %s185
      %p192 = scmp.eq.s32.totalorder %s55, 1
      %p193 = por %p191, %p192
      %p194 = scmp.ne.s32.totalorder %s185, %s186
      %p195 = scmp.eq.s32.totalorder %s55, 0
      %p196 = por %p194, %p195
      %p197 = scmp.ne.s32.totalorder %s185, %s186
      %p198 = scmp.eq.s32.totalorder %s56, 1
      %p199 = por %p197, %p198
      %p201 = scmp.ne.s32.totalorder %s186, %s200
      %p202 = scmp.eq.s32.totalorder %s56, 0
      %p203 = por %p201, %p202
      %s205 = sadd.s32 %s204, 1
      %p208 = scmp.eq.s32.totalorder %s50, 1
      %p209 = scmp.ne.s32.totalorder %s204, %s206
      %p210 = scmp.eq.s32.totalorder %s50, 0
      %p211 = por %p209, %p210
      %p212 = scmp.ne.s32.totalorder %s204, %s206
      %p213 = scmp.eq.s32.totalorder %s55, 1
      %p214 = por %p212, %p213
      %p215 = scmp.ne.s32.totalorder %s206, %s207
      %p216 = scmp.eq.s32.totalorder %s55, 0
      %p217 = por %p215, %p216
      %p218 = scmp.ne.s32.totalorder %s206, %s207
      %p219 = scmp.eq.s32.totalorder %s56, 1
      %p220 = por %p218, %p219
      %p222 = scmp.ne.s32.totalorder %s207, %s221
      %p223 = scmp.eq.s32.totalorder %s56, 0
      %p224 = por %p222, %p223
      %s226 = sadd.s32 %s225, 1
      %p229 = scmp.eq.s32.totalorder %s50, 1
      %p230 = scmp.ne.s32.totalorder %s225, %s227
      %p231 = scmp.eq.s32.totalorder %s50, 0
      %p232 = por %p230, %p231
      %p233 = scmp.ne.s32.totalorder %s225, %s227
      %p234 = scmp.eq.s32.totalorder %s55, 1
      %p235 = por %p233, %p234
      %p236 = scmp.ne.s32.totalorder %s227, %s228
      %p237 = scmp.eq.s32.totalorder %s55, 0
      %p238 = por %p236, %p237
      %p239 = scmp.ne.s32.totalorder %s227, %s228
      %p240 = scmp.eq.s32.totalorder %s56, 1
      %p241 = por %p239, %p240
      %p243 = scmp.ne.s32.totalorder %s228, %s242
      %p244 = scmp.eq.s32.totalorder %s56, 0
      %p245 = por %p243, %p244
      %s247 = sadd.s32 %s246, 1
      %p250 = scmp.eq.s32.totalorder %s50, 1
      %p251 = scmp.ne.s32.totalorder %s246, %s248
      %p252 = scmp.eq.s32.totalorder %s50, 0
      %p253 = por %p251, %p252
      %p254 = scmp.ne.s32.totalorder %s246, %s248
      %p255 = scmp.eq.s32.totalorder %s55, 1
      %p256 = por %p254, %p255
      %p257 = scmp.ne.s32.totalorder %s248, %s249
      %p258 = scmp.eq.s32.totalorder %s55, 0
      %p259 = por %p257, %p258
      %p260 = scmp.ne.s32.totalorder %s248, %s249
      %p261 = scmp.eq.s32.totalorder %s56, 1
      %p262 = por %p260, %p261
      %p264 = scmp.ne.s32.totalorder %s249, %s263
      %p265 = scmp.eq.s32.totalorder %s56, 0
      %p266 = por %p264, %p265
      %s268 = sadd.s32 %s267, 1
      %p271 = scmp.eq.s32.totalorder %s50, 1
      %p272 = scmp.ne.s32.totalorder %s267, %s269
      %p273 = scmp.eq.s32.totalorder %s50, 0
      %p274 = por %p272, %p273
      %p275 = scmp.ne.s32.totalorder %s267, %s269
      %p276 = scmp.eq.s32.totalorder %s55, 1
      %p277 = por %p275, %p276
      %p278 = scmp.ne.s32.totalorder %s269, %s270
      %p279 = scmp.eq.s32.totalorder %s55, 0
      %p280 = por %p278, %p279
      %p281 = scmp.ne.s32.totalorder %s269, %s270
      %p282 = scmp.eq.s32.totalorder %s56, 1
      %p283 = por %p281, %p282
      %p285 = scmp.ne.s32.totalorder %s270, %s284
      %p286 = scmp.eq.s32.totalorder %s56, 0
      %p287 = por %p285, %p286
      %s289 = sadd.s32 %s288, 1
      %p292 = scmp.eq.s32.totalorder %s50, 1
      %p293 = scmp.ne.s32.totalorder %s288, %s290
      %p294 = scmp.eq.s32.totalorder %s50, 0
      %p295 = por %p293, %p294
      %p296 = scmp.ne.s32.totalorder %s288, %s290
      %p297 = scmp.eq.s32.totalorder %s55, 1
      %p298 = por %p296, %p297
      %p299 = scmp.ne.s32.totalorder %s290, %s291
      %p300 = scmp.eq.s32.totalorder %s55, 0
      %p301 = por %p299, %p300
      %p302 = scmp.ne.s32.totalorder %s290, %s291
      %p303 = scmp.eq.s32.totalorder %s56, 1
      %p304 = por %p302, %p303
      %p306 = scmp.ne.s32.totalorder %s291, %s305
      %p307 = scmp.eq.s32.totalorder %s56, 0
      %p308 = por %p306, %p307
      %s310 = sadd.s32 %s309, 1
      %p313 = scmp.eq.s32.totalorder %s50, 1
      %p314 = scmp.ne.s32.totalorder %s309, %s311
      %p315 = scmp.eq.s32.totalorder %s50, 0
      %p316 = por %p314, %p315
      %p317 = scmp.ne.s32.totalorder %s309, %s311
      %p318 = scmp.eq.s32.totalorder %s55, 1
      %p319 = por %p317, %p318
      %p320 = scmp.ne.s32.totalorder %s311, %s312
      %p321 = scmp.eq.s32.totalorder %s55, 0
      %p322 = por %p320, %p321
      %p323 = scmp.ne.s32.totalorder %s311, %s312
      %p324 = scmp.eq.s32.totalorder %s56, 1
      %p325 = por %p323, %p324
      %p327 = scmp.ne.s32.totalorder %s312, %s326
      %p328 = scmp.eq.s32.totalorder %s56, 0
      %p329 = por %p327, %p328
      %s331 = sadd.s32 %s330, 1
      %p334 = scmp.eq.s32.totalorder %s50, 1
      %p335 = scmp.ne.s32.totalorder %s330, %s332
      %p336 = scmp.eq.s32.totalorder %s50, 0
      %p337 = por %p335, %p336
      %p338 = scmp.ne.s32.totalorder %s330, %s332
      %p339 = scmp.eq.s32.totalorder %s55, 1
      %p340 = por %p338, %p339
      %p341 = scmp.ne.s32.totalorder %s332, %s333
      %p342 = scmp.eq.s32.totalorder %s55, 0
      %p343 = por %p341, %p342
      %p344 = scmp.ne.s32.totalorder %s332, %s333
      %p345 = scmp.eq.s32.totalorder %s56, 1
      %p346 = por %p344, %p345
      %p348 = scmp.ne.s32.totalorder %s333, %s347
      %p349 = scmp.eq.s32.totalorder %s56, 0
      %p350 = por %p348, %p349
      %s352 = sadd.s32 %s351, 1
      %p355 = scmp.eq.s32.totalorder %s50, 1
      %p356 = scmp.ne.s32.totalorder %s351, %s353
      %p357 = scmp.eq.s32.totalorder %s50, 0
      %p358 = por %p356, %p357
      %p359 = scmp.ne.s32.totalorder %s351, %s353
      %p360 = scmp.eq.s32.totalorder %s55, 1
      %p361 = por %p359, %p360
      %p362 = scmp.ne.s32.totalorder %s353, %s354
      %p363 = scmp.eq.s32.totalorder %s55, 0
      %p364 = por %p362, %p363
      %p365 = scmp.ne.s32.totalorder %s353, %s354
      %p366 = scmp.eq.s32.totalorder %s56, 1
      %p367 = por %p365, %p366
      %p369 = scmp.ne.s32.totalorder %s354, %s368
      %p370 = scmp.eq.s32.totalorder %s56, 0
      %p371 = por %p369, %p370
      %s373 = sadd.s32 %s372, 1
      %p376 = scmp.eq.s32.totalorder %s50, 1
      %p377 = scmp.ne.s32.totalorder %s372, %s374
      %p378 = scmp.eq.s32.totalorder %s50, 0
      %p379 = por %p377, %p378
      %p380 = scmp.ne.s32.totalorder %s372, %s374
      %p381 = scmp.eq.s32.totalorder %s55, 1
      %p382 = por %p380, %p381
      %p383 = scmp.ne.s32.totalorder %s374, %s375
      %p384 = scmp.eq.s32.totalorder %s55, 0
      %p385 = por %p383, %p384
      %p386 = scmp.ne.s32.totalorder %s374, %s375
      %p387 = scmp.eq.s32.totalorder %s56, 1
      %p388 = por %p386, %p387
      %p390 = scmp.ne.s32.totalorder %s375, %s389
      %p391 = scmp.eq.s32.totalorder %s56, 0
      %p392 = por %p390, %p391
      %s394 = sadd.s32 %s393, 1
      %p397 = scmp.eq.s32.totalorder %s50, 1
      %p398 = scmp.ne.s32.totalorder %s393, %s395
      %p399 = scmp.eq.s32.totalorder %s50, 0
      %p400 = por %p398, %p399
      %p401 = scmp.ne.s32.totalorder %s393, %s395
      %p402 = scmp.eq.s32.totalorder %s55, 1
      %p403 = por %p401, %p402
      %p404 = scmp.ne.s32.totalorder %s395, %s396
      %p405 = scmp.eq.s32.totalorder %s55, 0
      %p406 = por %p404, %p405
      %p407 = scmp.ne.s32.totalorder %s395, %s396
      %p408 = scmp.eq.s32.totalorder %s56, 1
      %p409 = por %p407, %p408
      %p411 = scmp.ne.s32.totalorder %s396, %s410
      %p412 = scmp.eq.s32.totalorder %s56, 0
      %p413 = por %p411, %p412
      %s415 = sadd.s32 %s414, 1
      %p418 = scmp.eq.s32.totalorder %s50, 1
      %p419 = scmp.ne.s32.totalorder %s414, %s416
      %p420 = scmp.eq.s32.totalorder %s50, 0
      %p421 = por %p419, %p420
      %p422 = scmp.ne.s32.totalorder %s414, %s416
      %p423 = scmp.eq.s32.totalorder %s55, 1
      %p424 = por %p422, %p423
      %p425 = scmp.ne.s32.totalorder %s416, %s417
      %p426 = scmp.eq.s32.totalorder %s55, 0
      %p427 = por %p425, %p426
      %p428 = scmp.ne.s32.totalorder %s416, %s417
      %p429 = scmp.eq.s32.totalorder %s56, 1
      %p430 = por %p428, %p429
      %p432 = scmp.ne.s32.totalorder %s417, %s431
      %p433 = scmp.eq.s32.totalorder %s56, 0
      %p434 = por %p432, %p433
      %s436 = sadd.s32 %s435, 1
      %p439 = scmp.eq.s32.totalorder %s50, 1
      %p440 = scmp.ne.s32.totalorder %s435, %s437
      %p441 = scmp.eq.s32.totalorder %s50, 0
      %p442 = por %p440, %p441
      %p443 = scmp.ne.s32.totalorder %s435, %s437
      %p444 = scmp.eq.s32.totalorder %s55, 1
      %p445 = por %p443, %p444
      %p446 = scmp.ne.s32.totalorder %s437, %s438
      %p447 = scmp.eq.s32.totalorder %s55, 0
      %p448 = por %p446, %p447
      %p449 = scmp.ne.s32.totalorder %s437, %s438
      %p450 = scmp.eq.s32.totalorder %s56, 1
      %p451 = por %p449, %p450
      %p453 = scmp.ne.s32.totalorder %s438, %s452
      %p454 = scmp.eq.s32.totalorder %s56, 0
      %p455 = por %p453, %p454
      %s457 = sadd.s32 %s456, 1
      %p460 = scmp.eq.s32.totalorder %s50, 1
      %p461 = scmp.ne.s32.totalorder %s456, %s458
      %p462 = scmp.eq.s32.totalorder %s50, 0
      %p463 = por %p461, %p462
      %p464 = scmp.ne.s32.totalorder %s456, %s458
      %p465 = scmp.eq.s32.totalorder %s55, 1
      %p466 = por %p464, %p465
      %p467 = scmp.ne.s32.totalorder %s458, %s459
      %p468 = scmp.eq.s32.totalorder %s55, 0
      %p469 = por %p467, %p468
      %p470 = scmp.ne.s32.totalorder %s458, %s459
      %p471 = scmp.eq.s32.totalorder %s56, 1
      %p472 = por %p470, %p471
      %p474 = scmp.ne.s32.totalorder %s459, %s473
      %p475 = scmp.eq.s32.totalorder %s56, 0
      %p476 = por %p474, %p475
      %s478 = sadd.s32 %s477, 1
      %p481 = scmp.eq.s32.totalorder %s50, 1
      %p482 = scmp.ne.s32.totalorder %s477, %s479
      %p483 = scmp.eq.s32.totalorder %s50, 0
      %p484 = por %p482, %p483
      %p485 = scmp.ne.s32.totalorder %s477, %s479
      %p486 = scmp.eq.s32.totalorder %s55, 1
      %p487 = por %p485, %p486
      %p488 = scmp.ne.s32.totalorder %s479, %s480
      %p489 = scmp.eq.s32.totalorder %s55, 0
      %p490 = por %p488, %p489
      %p491 = scmp.ne.s32.totalorder %s479, %s480
      %p492 = scmp.eq.s32.totalorder %s56, 1
      %p493 = por %p491, %p492
      %p495 = scmp.ne.s32.totalorder %s480, %s494
      %p496 = scmp.eq.s32.totalorder %s56, 0
      %p497 = por %p495, %p496
      %s499 = sadd.s32 %s498, 1
      %p502 = scmp.eq.s32.totalorder %s50, 1
      %p503 = scmp.ne.s32.totalorder %s498, %s500
      %p504 = scmp.eq.s32.totalorder %s50, 0
      %p505 = por %p503, %p504
      %p506 = scmp.ne.s32.totalorder %s498, %s500
      %p507 = scmp.eq.s32.totalorder %s55, 1
      %p508 = por %p506, %p507
      %p509 = scmp.ne.s32.totalorder %s500, %s501
      %p510 = scmp.eq.s32.totalorder %s55, 0
      %p511 = por %p509, %p510
      %p512 = scmp.ne.s32.totalorder %s500, %s501
      %p513 = scmp.eq.s32.totalorder %s56, 1
      %p514 = por %p512, %p513
      %p516 = scmp.ne.s32.totalorder %s501, %s515
      %p517 = scmp.eq.s32.totalorder %s56, 0
      %p518 = por %p516, %p517
      %s520 = sadd.s32 %s519, 1
      %p523 = scmp.eq.s32.totalorder %s50, 1
      %p524 = scmp.ne.s32.totalorder %s519, %s521
      %p525 = scmp.eq.s32.totalorder %s50, 0
      %p526 = por %p524, %p525
      %p527 = scmp.ne.s32.totalorder %s519, %s521
      %p528 = scmp.eq.s32.totalorder %s55, 1
      %p529 = por %p527, %p528
      %p530 = scmp.ne.s32.totalorder %s521, %s522
      %p531 = scmp.eq.s32.totalorder %s55, 0
      %p532 = por %p530, %p531
      %p533 = scmp.ne.s32.totalorder %s521, %s522
      %p534 = scmp.eq.s32.totalorder %s56, 1
      %p535 = por %p533, %p534
      %p537 = scmp.ne.s32.totalorder %s522, %s536
      %p538 = scmp.eq.s32.totalorder %s56, 0
      %p539 = por %p537, %p538
      %s541 = sadd.s32 %s540, 1
      %p544 = scmp.eq.s32.totalorder %s50, 1
      %p545 = scmp.ne.s32.totalorder %s540, %s542
      %p546 = scmp.eq.s32.totalorder %s50, 0
      %p547 = por %p545, %p546
      %p548 = scmp.ne.s32.totalorder %s540, %s542
      %p549 = scmp.eq.s32.totalorder %s55, 1
      %p550 = por %p548, %p549
      %p551 = scmp.ne.s32.totalorder %s542, %s543
      %p552 = scmp.eq.s32.totalorder %s55, 0
      %p553 = por %p551, %p552
      %p554 = scmp.ne.s32.totalorder %s542, %s543
      %p555 = scmp.eq.s32.totalorder %s56, 1
      %p556 = por %p554, %p555
      %p558 = scmp.ne.s32.totalorder %s543, %s557
      %p559 = scmp.eq.s32.totalorder %s56, 0
      %p560 = por %p558, %p559
      %s562 = sadd.s32 %s561, 1
      %p565 = scmp.eq.s32.totalorder %s50, 1
      %p566 = scmp.ne.s32.totalorder %s561, %s563
      %p567 = scmp.eq.s32.totalorder %s50, 0
      %p568 = por %p566, %p567
      %p569 = scmp.ne.s32.totalorder %s561, %s563
      %p570 = scmp.eq.s32.totalorder %s55, 1
      %p571 = por %p569, %p570
      %p572 = scmp.ne.s32.totalorder %s563, %s564
      %p573 = scmp.eq.s32.totalorder %s55, 0
      %p574 = por %p572, %p573
      %p575 = scmp.ne.s32.totalorder %s563, %s564
      %p576 = scmp.eq.s32.totalorder %s56, 1
      %p577 = por %p575, %p576
      %p579 = scmp.ne.s32.totalorder %s564, %s578
      %p580 = scmp.eq.s32.totalorder %s56, 0
      %p581 = por %p579, %p580
      %s582 = ssub.s32 %s50, %s57
      %p583 = scmp.eq.s32.totalorder %s582, 0
      %s585 = sadd.s32 %s584, 1
      %s586 = scalar_select %p583, %s584, %s585
      %p589 = pneg %p583
      %p590 = scmp.eq.s32.totalorder %s50, 1
      %p591 = por %p589, %p590
      %p592 = scmp.ne.s32.totalorder %s584, %s587
      %p593 = scmp.eq.s32.totalorder %s50, 0
      %p594 = por %p592, %p593
      %p595 = scmp.ne.s32.totalorder %s584, %s587
      %p596 = scmp.eq.s32.totalorder %s55, 1
      %p597 = por %p595, %p596
      %p598 = scmp.ne.s32.totalorder %s587, %s588
      %p599 = scmp.eq.s32.totalorder %s55, 0
      %p600 = por %p598, %p599
      %p601 = scmp.ne.s32.totalorder %s587, %s588
      %p602 = scmp.eq.s32.totalorder %s56, 1
      %p603 = por %p601, %p602
      %p605 = scmp.ne.s32.totalorder %s588, %s604
      %p606 = scmp.eq.s32.totalorder %s56, 0
      %p607 = por %p605, %p606
      %p608 = scmp.le.s32.totalorder 1, %s50
      %p609 = scmp.lt.s32.totalorder %s50, 3
      %p610 = pnand %p608, %p609
      %p611 = pneg %p610
      // Predicated region
      $region9: #{tpu_custom_call.1} parent=5 // pred_check
        _
      $region10: #{tpu_custom_call.1} parent=5 // pred_check_branch
        %613 = sbr.rel (%p610) target = $region12
      $region11: #{tpu_custom_call.1} parent=5 // pred_region
        %s614 = ssub.s32 %s50, 1
        // Predicated region
        $region13: #{tpu_custom_call.1} parent=11 // pred_check
          %p615 = pneg %p175
        $region14: #{tpu_custom_call.1} parent=11 // pred_check_branch
          %617 = sbr.rel (%p615) target = $region16
        $region15: #{tpu_custom_call.1} parent=11 // pred_region
          %s619 = ssub.s32 256, 256
          %620 = vsyncadd [#allocation11], %s619
          %s621 = sshll.u32 [#allocation12], 4
          %s622 = int_to_ptr.vmem [resolvable:$true] %s621
          %627 = dma.hbm_to_vmem [thread:$0]  %s4, 256, %s622, [#allocation11], 64, 64, 4
        $region16: #{tpu_custom_call.1} parent=11 // pred_fallthru
          _
        // Predicated region
        $region17: #{tpu_custom_call.1} parent=11 // pred_check
          %p628 = pneg %p196
        $region18: #{tpu_custom_call.1} parent=11 // pred_check_branch
          %630 = sbr.rel (%p628) target = $region20
        $region19: #{tpu_custom_call.1} parent=11 // pred_region
          %s632 = ssub.s32 16, 16
          %633 = vsyncadd [#allocation14], %s632
          %s635 = sshll.u32 [#allocation13], 4
          %s636 = int_to_ptr.vmem [resolvable:$true] %s635
          %638 = dma.hbm_to_vmem [thread:$0]  %s5, 16, %s636, [#allocation14]
        $region20: #{tpu_custom_call.1} parent=11 // pred_fallthru
          _
        // Predicated region
        $region21: #{tpu_custom_call.1} parent=11 // pred_check
          %p639 = pneg %p217
        $region22: #{tpu_custom_call.1} parent=11 // pred_check_branch
          %641 = sbr.rel (%p639) target = $region24
        $region23: #{tpu_custom_call.1} parent=11 // pred_region
          %s643 = ssub.s32 256, 256
          %644 = vsyncadd [#allocation14], %s643
          %s645 = sshll.u32 [#allocation15], 4
          %s646 = int_to_ptr.vmem [resolvable:$true] %s645
          %651 = dma.hbm_to_vmem [thread:$0]  %s6, 256, %s646, [#allocation14], 64, 64, 4
        $region24: #{tpu_custom_call.1} parent=11 // pred_fallthru
          _
        // Predicated region
        $region25: #{tpu_custom_call.1} parent=11 // pred_check
          %p652 = pneg %p238
        $region26: #{tpu_custom_call.1} parent=11 // pred_check_branch
          %654 = sbr.rel (%p652) target = $region28
        $region27: #{tpu_custom_call.1} parent=11 // pred_region
          %s656 = ssub.s32 16, 16
          %657 = vsyncadd [#allocation17], %s656
          %s659 = sshll.u32 [#allocation16], 4
          %s660 = int_to_ptr.vmem [resolvable:$true] %s659
          %662 = dma.hbm_to_vmem [thread:$0]  %s7, 16, %s660, [#allocation17]
        $region28: #{tpu_custom_call.1} parent=11 // pred_fallthru
          _
        // Predicated region
        $region29: #{tpu_custom_call.1} parent=11 // pred_check
          %p663 = pneg %p259
        $region30: #{tpu_custom_call.1} parent=11 // pred_check_branch
          %665 = sbr.rel (%p663) target = $region32
        $region31: #{tpu_custom_call.1} parent=11 // pred_region
          %s667 = ssub.s32 256, 256
          %668 = vsyncadd [#allocation17], %s667
          %s669 = sshll.u32 [#allocation18], 4
          %s670 = int_to_ptr.vmem [resolvable:$true] %s669
          %675 = dma.hbm_to_vmem [thread:$0]  %s8, 256, %s670, [#allocation17], 64, 64, 4
        $region32: #{tpu_custom_call.1} parent=11 // pred_fallthru
          _
        // Predicated region
        $region33: #{tpu_custom_call.1} parent=11 // pred_check
          %p676 = pneg %p280
        $region34: #{tpu_custom_call.1} parent=11 // pred_check_branch
          %678 = sbr.rel (%p676) target = $region36
        $region35: #{tpu_custom_call.1} parent=11 // pred_region
          %s680 = ssub.s32 16, 16
          %681 = vsyncadd [#allocation20], %s680
          %s683 = sshll.u32 [#allocation19], 4
          %s684 = int_to_ptr.vmem [resolvable:$true] %s683
          %686 = dma.hbm_to_vmem [thread:$0]  %s9, 16, %s684, [#allocation20]
        $region36: #{tpu_custom_call.1} parent=11 // pred_fallthru
          _
        // Predicated region
        $region37: #{tpu_custom_call.1} parent=11 // pred_check
          %p687 = pneg %p301
        $region38: #{tpu_custom_call.1} parent=11 // pred_check_branch
          %689 = sbr.rel (%p687) target = $region40
        $region39: #{tpu_custom_call.1} parent=11 // pred_region
          %s691 = ssub.s32 256, 256
          %692 = vsyncadd [#allocation20], %s691
          %s693 = sshll.u32 [#allocation21], 4
          %s694 = int_to_ptr.vmem [resolvable:$true] %s693
          %699 = dma.hbm_to_vmem [thread:$0]  %s10, 256, %s694, [#allocation20], 64, 64, 4
        $region40: #{tpu_custom_call.1} parent=11 // pred_fallthru
          _
        // Predicated region
        $region41: #{tpu_custom_call.1} parent=11 // pred_check
          %p700 = pneg %p322
        $region42: #{tpu_custom_call.1} parent=11 // pred_check_branch
          %702 = sbr.rel (%p700) target = $region44
        $region43: #{tpu_custom_call.1} parent=11 // pred_region
          %s704 = ssub.s32 16, 16
          %705 = vsyncadd [#allocation23], %s704
          %s707 = sshll.u32 [#allocation22], 4
          %s708 = int_to_ptr.vmem [resolvable:$true] %s707
          %710 = dma.hbm_to_vmem [thread:$0]  %s11, 16, %s708, [#allocation23]
        $region44: #{tpu_custom_call.1} parent=11 // pred_fallthru
          _
        // Predicated region
        $region45: #{tpu_custom_call.1} parent=11 // pred_check
          %p711 = pneg %p343
        $region46: #{tpu_custom_call.1} parent=11 // pred_check_branch
          %713 = sbr.rel (%p711) target = $region48
        $region47: #{tpu_custom_call.1} parent=11 // pred_region
          %s715 = ssub.s32 768, 768
          %716 = vsyncadd [#allocation23], %s715
          %s717 = sshll.u32 [#allocation24], 4
          %s718 = int_to_ptr.vmem [resolvable:$true] %s717
          %723 = dma.hbm_to_vmem [thread:$0]  %s12, 768, %s718, [#allocation23], 64, 64, 4
        $region48: #{tpu_custom_call.1} parent=11 // pred_fallthru
          _
        // Predicated region
        $region49: #{tpu_custom_call.1} parent=11 // pred_check
          %p724 = pneg %p364
        $region50: #{tpu_custom_call.1} parent=11 // pred_check_branch
          %726 = sbr.rel (%p724) target = $region52
        $region51: #{tpu_custom_call.1} parent=11 // pred_region
          %s728 = ssub.s32 16, 16
          %729 = vsyncadd [#allocation26], %s728
          %s731 = sshll.u32 [#allocation25], 4
          %s732 = int_to_ptr.vmem [resolvable:$true] %s731
          %734 = dma.hbm_to_vmem [thread:$0]  %s13, 16, %s732, [#allocation26]
        $region52: #{tpu_custom_call.1} parent=11 // pred_fallthru
          _
        // Predicated region
        $region53: #{tpu_custom_call.1} parent=11 // pred_check
          %p735 = pneg %p385
        $region54: #{tpu_custom_call.1} parent=11 // pred_check_branch
          %737 = sbr.rel (%p735) target = $region56
        $region55: #{tpu_custom_call.1} parent=11 // pred_region
          _
        $region56: #{tpu_custom_call.1} parent=11 // pred_fallthru
          _
        // Predicated region
        $region57: #{tpu_custom_call.1} parent=11 // pred_check
          %p738 = pneg %p406
        $region58: #{tpu_custom_call.1} parent=11 // pred_check_branch
          %740 = sbr.rel (%p738) target = $region60
        $region59: #{tpu_custom_call.1} parent=11 // pred_region
          %s742 = ssub.s32 16, 16
          %743 = vsyncadd [#allocation26], %s742
          %s745 = sshll.u32 [#allocation27], 4
          %s746 = int_to_ptr.vmem [resolvable:$true] %s745
          %748 = dma.hbm_to_vmem [thread:$0]  %s15, 16, %s746, [#allocation26]
        $region60: #{tpu_custom_call.1} parent=11 // pred_fallthru
          _
        // Predicated region
        $region61: #{tpu_custom_call.1} parent=11 // pred_check
          %p749 = pneg %p427
        $region62: #{tpu_custom_call.1} parent=11 // pred_check_branch
          %751 = sbr.rel (%p749) target = $region64
        $region63: #{tpu_custom_call.1} parent=11 // pred_region
          %s753 = ssub.s32 768, 768
          %754 = vsyncadd [#allocation29], %s753
          %s755 = sshll.u32 [#allocation28], 4
          %s756 = int_to_ptr.vmem [resolvable:$true] %s755
          %761 = dma.hbm_to_vmem [thread:$0]  %s16, 768, %s756, [#allocation29], 64, 64, 4
        $region64: #{tpu_custom_call.1} parent=11 // pred_fallthru
          _
        // Predicated region
        $region65: #{tpu_custom_call.1} parent=11 // pred_check
          %p762 = pneg %p448
        $region66: #{tpu_custom_call.1} parent=11 // pred_check_branch
          %764 = sbr.rel (%p762) target = $region68
        $region67: #{tpu_custom_call.1} parent=11 // pred_region
          _
        $region68: #{tpu_custom_call.1} parent=11 // pred_fallthru
          _
        // Predicated region
        $region69: #{tpu_custom_call.1} parent=11 // pred_check
          %p765 = pneg %p469
        $region70: #{tpu_custom_call.1} parent=11 // pred_check_branch
          %767 = sbr.rel (%p765) target = $region72
        $region71: #{tpu_custom_call.1} parent=11 // pred_region
          _
        $region72: #{tpu_custom_call.1} parent=11 // pred_fallthru
          _
        // Predicated region
        $region73: #{tpu_custom_call.1} parent=11 // pred_check
          %p768 = pneg %p490
        $region74: #{tpu_custom_call.1} parent=11 // pred_check_branch
          %770 = sbr.rel (%p768) target = $region76
        $region75: #{tpu_custom_call.1} parent=11 // pred_region
          _
        $region76: #{tpu_custom_call.1} parent=11 // pred_fallthru
          _
        // Predicated region
        $region77: #{tpu_custom_call.1} parent=11 // pred_check
          %p771 = pneg %p511
        $region78: #{tpu_custom_call.1} parent=11 // pred_check_branch
          %773 = sbr.rel (%p771) target = $region80
        $region79: #{tpu_custom_call.1} parent=11 // pred_region
          _
        $region80: #{tpu_custom_call.1} parent=11 // pred_fallthru
          _
        // Predicated region
        $region81: #{tpu_custom_call.1} parent=11 // pred_check
          %p774 = pneg %p532
        $region82: #{tpu_custom_call.1} parent=11 // pred_check_branch
          %776 = sbr.rel (%p774) target = $region84
        $region83: #{tpu_custom_call.1} parent=11 // pred_region
          _
        $region84: #{tpu_custom_call.1} parent=11 // pred_fallthru
          _
        // Predicated region
        $region85: #{tpu_custom_call.1} parent=11 // pred_check
          %p777 = pneg %p553
        $region86: #{tpu_custom_call.1} parent=11 // pred_check_branch
          %779 = sbr.rel (%p777) target = $region88
        $region87: #{tpu_custom_call.1} parent=11 // pred_region
          %s781 = ssub.s32 256, 256
          %782 = vsyncadd [#allocation29], %s781
          %s783 = sshll.u32 [#allocation30], 4
          %s784 = int_to_ptr.vmem [resolvable:$true] %s783
          %789 = dma.hbm_to_vmem [thread:$0]  %s22, 256, %s784, [#allocation29], 64, 64, 4
        $region88: #{tpu_custom_call.1} parent=11 // pred_fallthru
          _
        // Predicated region
        $region89: #{tpu_custom_call.1} parent=11 // pred_check
          %p790 = pneg %p574
        $region90: #{tpu_custom_call.1} parent=11 // pred_check_branch
          %792 = sbr.rel (%p790) target = $region92
        $region91: #{tpu_custom_call.1} parent=11 // pred_region
          _
        $region92: #{tpu_custom_call.1} parent=11 // pred_fallthru
          _
      $region12: #{tpu_custom_call.1} parent=5 // pred_fallthru
        _
      %p793 = scmp.lt.s32.totalorder %s50, 2
      // Predicated region
      $region93: #{tpu_custom_call.1} parent=5 // pred_check
        %p794 = pneg %p793
      $region94: #{tpu_custom_call.1} parent=5 // pred_check_branch
        %796 = sbr.rel (%p794) target = $region96
      $region95: #{tpu_custom_call.1} parent=5 // pred_region
        // Predicated region
        $region97: #{tpu_custom_call.1} parent=95 // pred_check
          %p797 = pneg %p70
        $region98: #{tpu_custom_call.1} parent=95 // pred_check_branch
          %799 = sbr.rel (%p797) target = $region100
        $region99: #{tpu_custom_call.1} parent=95 // pred_region
          %s800 = sand.u32 %s60, 1
          %s801 = scalar_lea.sflag [#allocation5], %s800
          %s802 = sand.u32 %s60, 1
          %s803 = smul.addr %s802, 16
          %s804 = scalar_lea.vmem [#allocation4], %s803
          %s805 = smul.u32 2, %s50
          %s807 = ssub.s32 256, 256
          %808 = vsyncadd %s801, %s807
          %s809 = smul.addr %s805, 128
          %s810 = scalar_lea.hbm %s0, %s809
          %s811 = sshll.u32 %s804, 4
          %s812 = int_to_ptr.vmem [resolvable:$true] %s811
          %817 = dma.hbm_to_vmem [thread:$0]  %s810, 256, %s812, %s801, 128, 128, 8
        $region100: #{tpu_custom_call.1} parent=95 // pred_fallthru
          _
        // Predicated region
        $region101: #{tpu_custom_call.1} parent=95 // pred_check
          %p818 = pneg %p96
        $region102: #{tpu_custom_call.1} parent=95 // pred_check_branch
          %820 = sbr.rel (%p818) target = $region104
        $region103: #{tpu_custom_call.1} parent=95 // pred_region
          %s821 = sand.u32 %s50, 1
          %s822 = scalar_lea.sflag [#allocation8], %s821
          %s823 = sand.u32 %s86, 1
          %s824 = smul.addr %s823, 16
          %s825 = scalar_lea.vmem [#allocation7], %s824
          %s826 = smul.u32 2, %s50
          %s828 = ssub.s32 256, 256
          %829 = vsyncadd %s822, %s828
          %s830 = smul.addr %s826, 128
          %s831 = scalar_lea.hbm %s1, %s830
          %s832 = sshll.u32 %s825, 4
          %s833 = int_to_ptr.vmem [resolvable:$true] %s832
          %838 = dma.hbm_to_vmem [thread:$0]  %s831, 256, %s833, %s822, 128, 128, 8
        $region104: #{tpu_custom_call.1} parent=95 // pred_fallthru
          _
        // Predicated region
        $region105: #{tpu_custom_call.1} parent=95 // pred_check
          %p839 = pneg %p122
        $region106: #{tpu_custom_call.1} parent=95 // pred_check_branch
          %841 = sbr.rel (%p839) target = $region108
        $region107: #{tpu_custom_call.1} parent=95 // pred_region
          %s842 = sand.u32 %s50, 1
          %s843 = scalar_lea.sflag [#allocation8], %s842
          %s844 = sand.u32 %s112, 1
          %s845 = smul.addr %s844, 16
          %s846 = scalar_lea.vmem [#allocation9], %s845
          %s847 = smul.u32 2, %s50
          %s849 = ssub.s32 256, 256
          %850 = vsyncadd %s843, %s849
          %s851 = smul.addr %s847, 128
          %s852 = scalar_lea.hbm %s2, %s851
          %s853 = sshll.u32 %s846, 4
          %s854 = int_to_ptr.vmem [resolvable:$true] %s853
          %859 = dma.hbm_to_vmem [thread:$0]  %s852, 256, %s854, %s843, 128, 128, 8
        $region108: #{tpu_custom_call.1} parent=95 // pred_fallthru
          _
        // Predicated region
        $region109: #{tpu_custom_call.1} parent=95 // pred_check
          %p860 = pneg %p148
        $region110: #{tpu_custom_call.1} parent=95 // pred_check_branch
          %862 = sbr.rel (%p860) target = $region112
        $region111: #{tpu_custom_call.1} parent=95 // pred_region
          %s863 = sand.u32 %s50, 1
          %s864 = scalar_lea.sflag [#allocation11], %s863
          %s865 = sand.u32 %s138, 1
          %s866 = smul.addr %s865, 2
          %s867 = scalar_lea.vmem [#allocation10], %s866
          %s868 = smul.u32 2, %s50
          %s870 = ssub.s32 32, 32
          %871 = vsyncadd %s864, %s870
          %s872 = smul.addr %s868, 16
          %s873 = scalar_lea.hbm %s3, %s872
          %s874 = sshll.u32 %s867, 4
          %s875 = int_to_ptr.vmem [resolvable:$true] %s874
          %880 = dma.hbm_to_vmem [thread:$0]  %s873, 32, %s875, %s864, 16, 16, 1
        $region112: #{tpu_custom_call.1} parent=95 // pred_fallthru
          _
      $region96: #{tpu_custom_call.1} parent=5 // pred_fallthru
        _
      %p881 = scmp.le.s32.totalorder 1, %s50
      %p882 = scmp.lt.s32.totalorder %s50, 3
      %p883 = pnand %p881, %p882
      %p884 = pneg %p883
      // Predicated region
      $region113: #{tpu_custom_call.1} parent=5 // pred_check
        _
      $region114: #{tpu_custom_call.1} parent=5 // pred_check_branch
        %886 = sbr.rel (%p883) target = $region116
      $region115: #{tpu_custom_call.1} parent=5 // pred_region
        %s887 = ssub.s32 %s50, 1
        %s888 = sand.u32 %s63, 1
        %s889 = scalar_lea.sflag [#allocation5], %s888
        %s890 = sand.u32 %s63, 1
        %s891 = smul.addr %s890, 16
        %s892 = scalar_lea.vmem [#allocation4], %s891
        // Predicated region
        $region117: #{tpu_custom_call.1} parent=115 // pred_check
          %p893 = pneg %p76
        $region118: #{tpu_custom_call.1} parent=115 // pred_check_branch
          %895 = sbr.rel (%p893) target = $region120
        $region119: #{tpu_custom_call.1} parent=115 // pred_region
          %896 = dma.done %s889, 256
        $region120: #{tpu_custom_call.1} parent=115 // pred_fallthru
          _
        %s897 = sand.u32 %s55, 1
        %s898 = scalar_lea.sflag [#allocation8], %s897
        %s899 = sand.u32 %s89, 1
        %s900 = smul.addr %s899, 16
        %s901 = scalar_lea.vmem [#allocation7], %s900
        // Predicated region
        $region121: #{tpu_custom_call.1} parent=115 // pred_check
          %p902 = pneg %p102
        $region122: #{tpu_custom_call.1} parent=115 // pred_check_branch
          %904 = sbr.rel (%p902) target = $region124
        $region123: #{tpu_custom_call.1} parent=115 // pred_region
          %905 = dma.done %s898, 256
        $region124: #{tpu_custom_call.1} parent=115 // pred_fallthru
          _
        %s906 = sand.u32 %s55, 1
        %s907 = scalar_lea.sflag [#allocation8], %s906
        %s908 = sand.u32 %s115, 1
        %s909 = smul.addr %s908, 16
        %s910 = scalar_lea.vmem [#allocation9], %s909
        // Predicated region
        $region125: #{tpu_custom_call.1} parent=115 // pred_check
          %p911 = pneg %p128
        $region126: #{tpu_custom_call.1} parent=115 // pred_check_branch
          %913 = sbr.rel (%p911) target = $region128
        $region127: #{tpu_custom_call.1} parent=115 // pred_region
          %914 = dma.done %s907, 256
        $region128: #{tpu_custom_call.1} parent=115 // pred_fallthru
          _
        %s915 = sand.u32 %s55, 1
        %s916 = scalar_lea.sflag [#allocation11], %s915
        %s917 = sand.u32 %s141, 1
        %s918 = smul.addr %s917, 2
        %s919 = scalar_lea.vmem [#allocation10], %s918
        // Predicated region
        $region129: #{tpu_custom_call.1} parent=115 // pred_check
          %p920 = pneg %p154
        $region130: #{tpu_custom_call.1} parent=115 // pred_check_branch
          %922 = sbr.rel (%p920) target = $region132
        $region131: #{tpu_custom_call.1} parent=115 // pred_region
          %923 = dma.done %s916, 32
        $region132: #{tpu_custom_call.1} parent=115 // pred_fallthru
          _
        // Predicated region
        $region133: #{tpu_custom_call.1} parent=115 // pred_check
          %p924 = pneg %p175
        $region134: #{tpu_custom_call.1} parent=115 // pred_check_branch
          %926 = sbr.rel (%p924) target = $region136
        $region135: #{tpu_custom_call.1} parent=115 // pred_region
          %927 = dma.done [#allocation11], 256
        $region136: #{tpu_custom_call.1} parent=115 // pred_fallthru
          _
        // Predicated region
        $region137: #{tpu_custom_call.1} parent=115 // pred_check
          %p928 = pneg %p196
        $region138: #{tpu_custom_call.1} parent=115 // pred_check_branch
          %930 = sbr.rel (%p928) target = $region140
        $region139: #{tpu_custom_call.1} parent=115 // pred_region
          %931 = dma.done [#allocation14], 16
        $region140: #{tpu_custom_call.1} parent=115 // pred_fallthru
          _
        // Predicated region
        $region141: #{tpu_custom_call.1} parent=115 // pred_check
          %p932 = pneg %p217
        $region142: #{tpu_custom_call.1} parent=115 // pred_check_branch
          %934 = sbr.rel (%p932) target = $region144
        $region143: #{tpu_custom_call.1} parent=115 // pred_region
          %935 = dma.done [#allocation14], 256
        $region144: #{tpu_custom_call.1} parent=115 // pred_fallthru
          _
        // Predicated region
        $region145: #{tpu_custom_call.1} parent=115 // pred_check
          %p936 = pneg %p238
        $region146: #{tpu_custom_call.1} parent=115 // pred_check_branch
          %938 = sbr.rel (%p936) target = $region148
        $region147: #{tpu_custom_call.1} parent=115 // pred_region
          %939 = dma.done [#allocation17], 16
        $region148: #{tpu_custom_call.1} parent=115 // pred_fallthru
          _
        // Predicated region
        $region149: #{tpu_custom_call.1} parent=115 // pred_check
          %p940 = pneg %p259
        $region150: #{tpu_custom_call.1} parent=115 // pred_check_branch
          %942 = sbr.rel (%p940) target = $region152
        $region151: #{tpu_custom_call.1} parent=115 // pred_region
          %943 = dma.done [#allocation17], 256
        $region152: #{tpu_custom_call.1} parent=115 // pred_fallthru
          _
        // Predicated region
        $region153: #{tpu_custom_call.1} parent=115 // pred_check
          %p944 = pneg %p280
        $region154: #{tpu_custom_call.1} parent=115 // pred_check_branch
          %946 = sbr.rel (%p944) target = $region156
        $region155: #{tpu_custom_call.1} parent=115 // pred_region
          %947 = dma.done [#allocation20], 16
        $region156: #{tpu_custom_call.1} parent=115 // pred_fallthru
          _
        // Predicated region
        $region157: #{tpu_custom_call.1} parent=115 // pred_check
          %p948 = pneg %p301
        $region158: #{tpu_custom_call.1} parent=115 // pred_check_branch
          %950 = sbr.rel (%p948) target = $region160
        $region159: #{tpu_custom_call.1} parent=115 // pred_region
          %951 = dma.done [#allocation20], 256
        $region160: #{tpu_custom_call.1} parent=115 // pred_fallthru
          _
        // Predicated region
        $region161: #{tpu_custom_call.1} parent=115 // pred_check
          %p952 = pneg %p322
        $region162: #{tpu_custom_call.1} parent=115 // pred_check_branch
          %954 = sbr.rel (%p952) target = $region164
        $region163: #{tpu_custom_call.1} parent=115 // pred_region
          %955 = dma.done [#allocation23], 16
        $region164: #{tpu_custom_call.1} parent=115 // pred_fallthru
          _
        // Predicated region
        $region165: #{tpu_custom_call.1} parent=115 // pred_check
          %p956 = pneg %p343
        $region166: #{tpu_custom_call.1} parent=115 // pred_check_branch
          %958 = sbr.rel (%p956) target = $region168
        $region167: #{tpu_custom_call.1} parent=115 // pred_region
          %959 = dma.done [#allocation23], 768
        $region168: #{tpu_custom_call.1} parent=115 // pred_fallthru
          _
        // Predicated region
        $region169: #{tpu_custom_call.1} parent=115 // pred_check
          %p960 = pneg %p364
        $region170: #{tpu_custom_call.1} parent=115 // pred_check_branch
          %962 = sbr.rel (%p960) target = $region172
        $region171: #{tpu_custom_call.1} parent=115 // pred_region
          %963 = dma.done [#allocation26], 16
        $region172: #{tpu_custom_call.1} parent=115 // pred_fallthru
          _
        // Predicated region
        $region173: #{tpu_custom_call.1} parent=115 // pred_check
          %p964 = pneg %p406
        $region174: #{tpu_custom_call.1} parent=115 // pred_check_branch
          %966 = sbr.rel (%p964) target = $region176
        $region175: #{tpu_custom_call.1} parent=115 // pred_region
          %967 = dma.done [#allocation26], 16
        $region176: #{tpu_custom_call.1} parent=115 // pred_fallthru
          _
        // Predicated region
        $region177: #{tpu_custom_call.1} parent=115 // pred_check
          %p968 = pneg %p427
        $region178: #{tpu_custom_call.1} parent=115 // pred_check_branch
          %970 = sbr.rel (%p968) target = $region180
        $region179: #{tpu_custom_call.1} parent=115 // pred_region
          %971 = dma.done [#allocation29], 768
        $region180: #{tpu_custom_call.1} parent=115 // pred_fallthru
          _
        // Predicated region
        $region181: #{tpu_custom_call.1} parent=115 // pred_check
          %p972 = pneg %p553
        $region182: #{tpu_custom_call.1} parent=115 // pred_check_branch
          %974 = sbr.rel (%p972) target = $region184
        $region183: #{tpu_custom_call.1} parent=115 // pred_region
          %975 = dma.done [#allocation29], 256
        $region184: #{tpu_custom_call.1} parent=115 // pred_fallthru
          _
        %s976 = sand.u32 %s63, 1
        %s977 = scalar_lea.sflag [#allocation5], %s976
        %s978 = sand.u32 %s63, 1
        %s979 = smul.addr %s978, 16
        %s980 = scalar_lea.vmem [#allocation4], %s979
        %p981 = pneg %p76
        %p982 = pneg %p73
        %s983 = sand.u32 %s55, 1
        %s984 = scalar_lea.sflag [#allocation8], %s983
        %s985 = sand.u32 %s89, 1
        %s986 = smul.addr %s985, 16
        %s987 = scalar_lea.vmem [#allocation7], %s986
        %p988 = pneg %p102
        %p989 = pneg %p99
        %s990 = sand.u32 %s55, 1
        %s991 = scalar_lea.sflag [#allocation8], %s990
        %s992 = sand.u32 %s115, 1
        %s993 = smul.addr %s992, 16
        %s994 = scalar_lea.vmem [#allocation9], %s993
        %p995 = pneg %p128
        %p996 = pneg %p125
        %s997 = sand.u32 %s55, 1
        %s998 = scalar_lea.sflag [#allocation11], %s997
        %s999 = sand.u32 %s141, 1
        %s1000 = smul.addr %s999, 2
        %s1001 = scalar_lea.vmem [#allocation10], %s1000
        %p1002 = pneg %p154
        %p1003 = pneg %p151
        %p1004 = pneg %p175
        %p1005 = pneg %p172
        %p1006 = pneg %p196
        %p1007 = pneg %p193
        %p1008 = pneg %p217
        %p1009 = pneg %p214
        %p1010 = pneg %p238
        %p1011 = pneg %p235
        %p1012 = pneg %p259
        %p1013 = pneg %p256
        %p1014 = pneg %p280
        %p1015 = pneg %p277
        %p1016 = pneg %p301
        %p1017 = pneg %p298
        %p1018 = pneg %p322
        %p1019 = pneg %p319
        %p1020 = pneg %p343
        %p1021 = pneg %p340
        %p1022 = pneg %p364
        %p1023 = pneg %p361
        %p1024 = pneg %p385
        %p1025 = pneg %p382
        %p1026 = pneg %p406
        %p1027 = pneg %p403
        %p1028 = pneg %p427
        %p1029 = pneg %p424
        %p1030 = pneg %p448
        %p1031 = pneg %p445
        %p1032 = pneg %p469
        %p1033 = pneg %p466
        %p1034 = pneg %p490
        %p1035 = pneg %p487
        %p1036 = pneg %p511
        %p1037 = pneg %p508
        %p1038 = pneg %p532
        %p1039 = pneg %p529
        %p1040 = pneg %p553
        %p1041 = pneg %p550
        %p1042 = pneg %p574
        %p1043 = pneg %p571
        %p1044 = pneg %p600
        %p1045 = pneg %p597
        %s1046 = sand.u32 %s587, 1
        %s1047 = scalar_lea.sflag [#allocation6], %s1046
        %s1048 = sand.u32 %s587, 1
        %s1049 = smul.addr %s1048, 16
        %s1050 = scalar_lea.vmem [#allocation31], %s1049
        %s1051 = smul.u32 2, %s55
        %s1052 = smul.u32 2, %s55
        %s1053 = smul.u32 2, %s55
        %s1054 = smul.u32 2, %s55
        %s1055 = smul.u32 2, %s55
        %vm1057 = vcmask 254976
        %1058 = vst.msk [vmem:[#allocation2] sm:$0x3] %vm1057, 0.0
        %1059 = vst.msk [vmem:[#allocation2 + $0xa] sm:$0x3] %vm1057, 0.0
        %v1060 = vld [vmem:[%s892] sm:$0xff]
        %v1061 = vld [vmem:[%s892 + $0x8] sm:$0xff]
        %v1062 = vpack.c.bf16 %v1061, %v1060
        %v1063 = vld [vmem:[#allocation18] sm:$0xf]
        %v1064 = vld [vmem:[#allocation18 + $0x4] sm:$0xf]
        %v1065 = vld [vmem:[#allocation18 + $0x8] sm:$0xf]
        %v1066 = vld [vmem:[#allocation18 + $0xc] sm:$0xf]
        %v1067 = vld [vmem:[#allocation19] sm:$0x1]
        %v1069 = vlaneseq
        %v1070 = vshrl.u32 %v1069, 7
        %v1071 = vsub.s32 0, %v1070
        %v1072 = vrot.slane %v1067, %v1071
        %v1078 = vunpack.c.l.b16 %v1063
        %v1079 = vunpack.c.l.b16 %v1064
        %v1080 = vunpack.c.l.b16 %v1065
        %v1081 = vunpack.c.l.b16 %v1066
        %v1082 = vpack.c.b16 %v1079, %v1078
        %v1083 = vpack.c.b16 %v1081, %v1080
        %vm1086 = vcmask 261120
        %v1088 = vsel %vm1086, %v1062, 0
        %1090 = vmatprep.subr.bf16.mxu0 0
        %1091 = vmatpush1.bf16.msra.mxu0 0
        %1092 = vmatprep.subr.bf16.mxu0 0
        %1093 = vmatpush1.bf16.msra.mxu0 0
        %1094 = vmatprep.subr.bf16.mxu0 0
        %1095 = vmatpush1.bf16.msra.mxu0 0
        %1096 = vmatprep.subr.bf16.mxu0 0
        %1097 = vmatpush1.bf16.msra.mxu0 0
        %1098 = vmatprep.subr.bf16.mxu0 0
        %1099 = vmatpush1.bf16.msra.mxu0 0
        %1100 = vmatprep.subr.bf16.mxu0 0
        %1101 = vmatpush1.bf16.msra.mxu0 0
        %1102 = vmatprep.subr.bf16.mxu0 0
        %1103 = vmatpush1.bf16.msra.mxu0 %v1083
        %1104 = vmatprep.subr.bf16.mxu0 0
        %1105 = vmatpush1.bf16.msra.mxu0 %v1082
        %1106 = vmatprep.subr.bf16.mxu0 0
        %1107 = vmatpush2.bf16.msra.mxu0 0
        %1108 = vmatprep.subr.bf16.mxu0 0
        %1109 = vmatpush2.bf16.msra.mxu0 0
        %1110 = vmatprep.subr.bf16.mxu0 0
        %1111 = vmatpush2.bf16.msra.mxu0 0
        %1112 = vmatprep.subr.bf16.mxu0 0
        %1113 = vmatpush2.bf16.msra.mxu0 0
        %1114 = vmatprep.subr.bf16.mxu0 0
        %1115 = vmatpush2.bf16.msra.mxu0 0
        %1116 = vmatprep.subr.bf16.mxu0 0
        %1117 = vmatpush2.bf16.msra.mxu0 0
        %1118 = vmatprep.subr.bf16.mxu0 0
        %1119 = vmatpush2.bf16.msra.mxu0 0
        %1120 = vmatprep.subr.bf16.mxu0 0
        %1121 = vmatpush2.bf16.msra.mxu0 0
        %1122 = vmatprep.mubr.bf16.mxu0 0
        %1123 = vmatmul.mubr.bf16.gmra.mxu0 %v1088
        %v1124 = vpop.f32.mrf.mxu0
        %v1125 = vadd.f32 %v1072, %v1124
        %v1126 = vpop.f32.mrf.mxu0
        %v1127 = vpop.f32.mrf.mxu0
        %v1128 = vadd.f32 %v1072, %v1127
        %v1129 = vpop.f32.mrf.mxu0
        %1130 = vdwg.mxu0
        %v1131 = vld [vmem:[%s901] sm:$0xff]
        %v1132 = vld [vmem:[%s901 + $0x8] sm:$0xff]
        %v1133 = vpack.c.bf16 %v1132, %v1131
        %v1134 = vld [vmem:[#allocation15] sm:$0xf]
        %v1135 = vld [vmem:[#allocation15 + $0x4] sm:$0xf]
        %v1136 = vld [vmem:[#allocation15 + $0x8] sm:$0xf]
        %v1137 = vld [vmem:[#allocation15 + $0xc] sm:$0xf]
        %v1138 = vld [vmem:[#allocation16] sm:$0x1]
        %v1140 = vlaneseq
        %v1141 = vshrl.u32 %v1140, 7
        %v1142 = vsub.s32 0, %v1141
        %v1143 = vrot.slane %v1138, %v1142
        %v1149 = vunpack.c.l.b16 %v1134
        %v1150 = vunpack.c.l.b16 %v1135
        %v1151 = vunpack.c.l.b16 %v1136
        %v1152 = vunpack.c.l.b16 %v1137
        %v1153 = vpack.c.b16 %v1150, %v1149
        %v1154 = vpack.c.b16 %v1152, %v1151
        %v1158 = vsel %vm1086, %v1133, 0
        %1160 = vmatprep.subr.bf16.mxu0 0
        %1161 = vmatpush1.bf16.msra.mxu0 0
        %1162 = vmatprep.subr.bf16.mxu0 0
        %1163 = vmatpush1.bf16.msra.mxu0 0
        %1164 = vmatprep.subr.bf16.mxu0 0
        %1165 = vmatpush1.bf16.msra.mxu0 0
        %1166 = vmatprep.subr.bf16.mxu0 0
        %1167 = vmatpush1.bf16.msra.mxu0 0
        %1168 = vmatprep.subr.bf16.mxu0 0
        %1169 = vmatpush1.bf16.msra.mxu0 0
        %1170 = vmatprep.subr.bf16.mxu0 0
        %1171 = vmatpush1.bf16.msra.mxu0 0
        %1172 = vmatprep.subr.bf16.mxu0 0
        %1173 = vmatpush1.bf16.msra.mxu0 %v1154
        %1174 = vmatprep.subr.bf16.mxu0 0
        %1175 = vmatpush1.bf16.msra.mxu0 %v1153
        %1176 = vmatprep.subr.bf16.mxu0 0
        %1177 = vmatpush2.bf16.msra.mxu0 0
        %1178 = vmatprep.subr.bf16.mxu0 0
        %1179 = vmatpush2.bf16.msra.mxu0 0
        %1180 = vmatprep.subr.bf16.mxu0 0
        %1181 = vmatpush2.bf16.msra.mxu0 0
        %1182 = vmatprep.subr.bf16.mxu0 0
        %1183 = vmatpush2.bf16.msra.mxu0 0
        %1184 = vmatprep.subr.bf16.mxu0 0
        %1185 = vmatpush2.bf16.msra.mxu0 0
        %1186 = vmatprep.subr.bf16.mxu0 0
        %1187 = vmatpush2.bf16.msra.mxu0 0
        %1188 = vmatprep.subr.bf16.mxu0 0
        %1189 = vmatpush2.bf16.msra.mxu0 0
        %1190 = vmatprep.subr.bf16.mxu0 0
        %1191 = vmatpush2.bf16.msra.mxu0 0
        %1192 = vmatprep.mubr.bf16.mxu0 0
        %1193 = vmatmul.mubr.bf16.gmra.mxu0 %v1158
        %v1194 = vpop.f32.mrf.mxu0
        %v1195 = vadd.f32 %v1143, %v1194
        %v1196 = vpop.f32.mrf.mxu0
        %v1197 = vpop.f32.mrf.mxu0
        %v1198 = vadd.f32 %v1143, %v1197
        %v1199 = vpop.f32.mrf.mxu0
        %1200 = vdwg.mxu0
        %v1201 = vld [vmem:[%s910] sm:$0xff]
        %v1202 = vld [vmem:[%s910 + $0x8] sm:$0xff]
        %v1203 = vpack.c.bf16 %v1202, %v1201
        %v1204 = vld [vmem:[#allocation12] sm:$0xf]
        %v1205 = vld [vmem:[#allocation12 + $0x4] sm:$0xf]
        %v1206 = vld [vmem:[#allocation12 + $0x8] sm:$0xf]
        %v1207 = vld [vmem:[#allocation12 + $0xc] sm:$0xf]
        %v1208 = vld [vmem:[#allocation13] sm:$0x1]
        %v1210 = vlaneseq
        %v1211 = vshrl.u32 %v1210, 7
        %v1212 = vsub.s32 0, %v1211
        %v1213 = vrot.slane %v1208, %v1212
        %v1219 = vunpack.c.l.b16 %v1204
        %v1220 = vunpack.c.l.b16 %v1205
        %v1221 = vunpack.c.l.b16 %v1206
        %v1222 = vunpack.c.l.b16 %v1207
        %v1223 = vpack.c.b16 %v1220, %v1219
        %v1224 = vpack.c.b16 %v1222, %v1221
        %v1228 = vsel %vm1086, %v1203, 0
        %1230 = vmatprep.subr.bf16.mxu0 0
        %1231 = vmatpush1.bf16.msra.mxu0 0
        %1232 = vmatprep.subr.bf16.mxu0 0
        %1233 = vmatpush1.bf16.msra.mxu0 0
        %1234 = vmatprep.subr.bf16.mxu0 0
        %1235 = vmatpush1.bf16.msra.mxu0 0
        %1236 = vmatprep.subr.bf16.mxu0 0
        %1237 = vmatpush1.bf16.msra.mxu0 0
        %1238 = vmatprep.subr.bf16.mxu0 0
        %1239 = vmatpush1.bf16.msra.mxu0 0
        %1240 = vmatprep.subr.bf16.mxu0 0
        %1241 = vmatpush1.bf16.msra.mxu0 0
        %1242 = vmatprep.subr.bf16.mxu0 0
        %1243 = vmatpush1.bf16.msra.mxu0 %v1224
        %1244 = vmatprep.subr.bf16.mxu0 0
        %1245 = vmatpush1.bf16.msra.mxu0 %v1223
        %1246 = vmatprep.subr.bf16.mxu0 0
        %1247 = vmatpush2.bf16.msra.mxu0 0
        %1248 = vmatprep.subr.bf16.mxu0 0
        %1249 = vmatpush2.bf16.msra.mxu0 0
        %1250 = vmatprep.subr.bf16.mxu0 0
        %1251 = vmatpush2.bf16.msra.mxu0 0
        %1252 = vmatprep.subr.bf16.mxu0 0
        %1253 = vmatpush2.bf16.msra.mxu0 0
        %1254 = vmatprep.subr.bf16.mxu0 0
        %1255 = vmatpush2.bf16.msra.mxu0 0
        %1256 = vmatprep.subr.bf16.mxu0 0
        %1257 = vmatpush2.bf16.msra.mxu0 0
        %1258 = vmatprep.subr.bf16.mxu0 0
        %1259 = vmatpush2.bf16.msra.mxu0 0
        %1260 = vmatprep.subr.bf16.mxu0 0
        %1261 = vmatpush2.bf16.msra.mxu0 0
        %1262 = vmatprep.mubr.bf16.mxu0 0
        %1263 = vmatmul.mubr.bf16.gmra.mxu0 %v1228
        %v1264 = vpop.f32.mrf.mxu0
        %v1265 = vadd.f32 %v1213, %v1264
        %v1266 = vpop.f32.mrf.mxu0
        %v1267 = vpop.f32.mrf.mxu0
        %v1268 = vadd.f32 %v1213, %v1267
        %v1269 = vpop.f32.mrf.mxu0
        %1270 = vdwg.mxu0
        %v1271 = vmul.f32 %v1265, 0.35355338
        %v1272 = vmul.f32 %v1268, 0.35355338
        %v1273 = vpack.c.bf16 %v1128, %v1125
        %v1274 = vpack.c.bf16 %v1272, %v1271
        %1275 = vxpose.xlu0.b32.start [1/16] %v1195, 128
        %1276 = vxpose.xlu0.b32.cont [2/16] %v1198, 128
        %1277 = vxpose.xlu0.b32.cont [3/16] 0.0, 128
        %1278 = vxpose.xlu0.b32.cont [4/16] 0.0, 128
        %1279 = vxpose.xlu0.b32.cont [5/16] 0.0, 128
        %1280 = vxpose.xlu0.b32.cont [6/16] 0.0, 128
        %1281 = vxpose.xlu0.b32.cont [7/16] 0.0, 128
        %1282 = vxpose.xlu0.b32.cont [8/16] 0.0, 128
        %1283 = vxpose.xlu0.b32.cont [9/16] 0.0, 128
        %1284 = vxpose.xlu0.b32.cont [10/16] 0.0, 128
        %1285 = vxpose.xlu0.b32.cont [11/16] 0.0, 128
        %1286 = vxpose.xlu0.b32.cont [12/16] 0.0, 128
        %1287 = vxpose.xlu0.b32.cont [13/16] 0.0, 128
        %1288 = vxpose.xlu0.b32.cont [14/16] 0.0, 128
        %1289 = vxpose.xlu0.b32.cont [15/16] 0.0, 128
        %1290 = vxpose.xlu0.b32.end [16/16] 0.0, 128
        %v1291 = vpop.trf.xlu0
        %v1292 = vpop.trf.xlu0
        %v1293 = vpop.trf.xlu0
        %v1294 = vpop.trf.xlu0
        %v1295 = vpop.trf.xlu0
        %v1296 = vpop.trf.xlu0
        %v1297 = vpop.trf.xlu0
        %v1298 = vpop.trf.xlu0
        %v1299 = vpop.trf.xlu0
        %v1300 = vpop.trf.xlu0
        %v1301 = vpop.trf.xlu0
        %v1302 = vpop.trf.xlu0
        %v1303 = vpop.trf.xlu0
        %v1304 = vpop.trf.xlu0
        %v1305 = vpop.trf.xlu0
        %v1306 = vpop.trf.xlu0
        %v1307 = vpack.c.bf16 %v1292, %v1291
        %v1308 = vpack.c.bf16 %v1294, %v1293
        %v1309 = vld [vmem:[%s919] sm:$0x1]
        %v1310 = vmul.f32 %v1309, -1e+09
        %v1312 = vlaneseq
        %v1313 = vshrl.u32 %v1312, 7
        %v1314 = vsub.s32 0, %v1313
        %v1315 = vrot.slane %v1310, %v1314
        %vm1317 = vcmask 64512
        %v1319 = vsel %vm1317, %v1274, 0
        %vm1321 = vcmask 1043456
        %v1323 = vsel %vm1321, %v1307, 0
        %1325 = vmatprep.subr.bf16.mxu0 0
        %1326 = vmatpush1.bf16.msra.mxu0 0
        %1327 = vmatprep.subr.bf16.mxu0 0
        %1328 = vmatpush1.bf16.msra.mxu0 0
        %1329 = vmatprep.subr.bf16.mxu0 0
        %1330 = vmatpush1.bf16.msra.mxu0 0
        %1331 = vmatprep.subr.bf16.mxu0 0
        %1332 = vmatpush1.bf16.msra.mxu0 0
        %1333 = vmatprep.subr.bf16.mxu0 0
        %1334 = vmatpush1.bf16.msra.mxu0 0
        %1335 = vmatprep.subr.bf16.mxu0 0
        %1336 = vmatpush1.bf16.msra.mxu0 0
        %1337 = vmatprep.subr.bf16.mxu0 0
        %1338 = vmatpush1.bf16.msra.mxu0 0
        %1339 = vmatprep.subr.bf16.mxu0 0
        %1340 = vmatpush1.bf16.msra.mxu0 %v1323
        %1341 = vmatprep.subr.bf16.mxu0 0
        %1342 = vmatpush2.bf16.msra.mxu0 0
        %1343 = vmatprep.subr.bf16.mxu0 0
        %1344 = vmatpush2.bf16.msra.mxu0 0
        %1345 = vmatprep.subr.bf16.mxu0 0
        %1346 = vmatpush2.bf16.msra.mxu0 0
        %1347 = vmatprep.subr.bf16.mxu0 0
        %1348 = vmatpush2.bf16.msra.mxu0 0
        %1349 = vmatprep.subr.bf16.mxu0 0
        %1350 = vmatpush2.bf16.msra.mxu0 0
        %1351 = vmatprep.subr.bf16.mxu0 0
        %1352 = vmatpush2.bf16.msra.mxu0 0
        %1353 = vmatprep.subr.bf16.mxu0 0
        %1354 = vmatpush2.bf16.msra.mxu0 0
        %1355 = vmatprep.subr.bf16.mxu0 0
        %1356 = vmatpush2.bf16.msra.mxu0 0
        %1357 = vmatprep.mubr.bf16.mxu0 0
        %1358 = vmatmul.mubr.bf16.gmra.mxu0 %v1319
        %v1359 = vpop.f32.mrf.mxu0
        %v1360 = vadd.f32 %v1315, %v1359
        %v1361 = vpop.f32.mrf.mxu0
        %v1362 = vpop.f32.mrf.mxu0
        %v1363 = vpop.f32.mrf.mxu0
        %1364 = vdwg.mxu0
        %v1365 = vsel %vm1317, %v1360, -inf
        %1366 = vmax.xlane.f32.xlu0 %v1365
        %v1367 = vpop.xlane.xlu0 %1366
        %v1368 = vsub.f32 %v1360, %v1367
        %v1369 = vmul.f32 %v1368, 1.442695
        %v1370 = vpow.pop %v1369
        %v1371 = vsel %vm1317, %v1370, 0.0
        %1372 = vadd.xlane.f32.xlu0 %v1371
        %v1373 = vpop.xlane.xlu0 %1372
        %v1374 = vpack.c.bf16 %v1370, %v1370
        %v1376 = vsel %vm1317, %v1374, 0
        %v1379 = vsel %vm1321, %v1273, 0
        %1381 = vmatprep.subr.bf16.mxu0 0
        %1382 = vmatpush1.bf16.msra.mxu0 0
        %1383 = vmatprep.subr.bf16.mxu0 0
        %1384 = vmatpush1.bf16.msra.mxu0 0
        %1385 = vmatprep.subr.bf16.mxu0 0
        %1386 = vmatpush1.bf16.msra.mxu0 0
        %1387 = vmatprep.subr.bf16.mxu0 0
        %1388 = vmatpush1.bf16.msra.mxu0 0
        %1389 = vmatprep.subr.bf16.mxu0 0
        %1390 = vmatpush1.bf16.msra.mxu0 0
        %1391 = vmatprep.subr.bf16.mxu0 0
        %1392 = vmatpush1.bf16.msra.mxu0 0
        %1393 = vmatprep.subr.bf16.mxu0 0
        %1394 = vmatpush1.bf16.msra.mxu0 0
        %1395 = vmatprep.subr.bf16.mxu0 0
        %1396 = vmatpush1.bf16.msra.mxu0 %v1379
        %1397 = vmatprep.subr.bf16.mxu0 0
        %1398 = vmatpush2.bf16.msra.mxu0 0
        %1399 = vmatprep.subr.bf16.mxu0 0
        %1400 = vmatpush2.bf16.msra.mxu0 0
        %1401 = vmatprep.subr.bf16.mxu0 0
        %1402 = vmatpush2.bf16.msra.mxu0 0
        %1403 = vmatprep.subr.bf16.mxu0 0
        %1404 = vmatpush2.bf16.msra.mxu0 0
        %1405 = vmatprep.subr.bf16.mxu0 0
        %1406 = vmatpush2.bf16.msra.mxu0 0
        %1407 = vmatprep.subr.bf16.mxu0 0
        %1408 = vmatpush2.bf16.msra.mxu0 0
        %1409 = vmatprep.subr.bf16.mxu0 0
        %1410 = vmatpush2.bf16.msra.mxu0 0
        %1411 = vmatprep.subr.bf16.mxu0 0
        %1412 = vmatpush2.bf16.msra.mxu0 0
        %1413 = vmatprep.mubr.bf16.mxu0 0
        %1414 = vmatmul.mubr.bf16.gmra.mxu0 %v1376
        %v1415 = vpop.f32.mrf.mxu0
        %v1416 = vadd.f32 0.0, %v1415
        %v1417 = vpop.f32.mrf.mxu0
        %v1418 = vpop.f32.mrf.mxu0
        %v1419 = vpop.f32.mrf.mxu0
        %1420 = vdwg.mxu0
        %v1421 = vrcp.pop %v1373
        %v1422 = vmul.f32 %v1416, %v1421
        %1424 = vrot.lane.b32.xlu0 %v1274, 120
        %v1425 = vpop.permute.xlu0 %1424
        %v1427 = vrot.slane %v1307, 4
        %v1429 = vsel %vm1317, %v1425, 0
        %v1432 = vsel %vm1321, %v1427, 0
        %1434 = vmatprep.subr.bf16.mxu0 0
        %1435 = vmatpush1.bf16.msra.mxu0 0
        %1436 = vmatprep.subr.bf16.mxu0 0
        %1437 = vmatpush1.bf16.msra.mxu0 0
        %1438 = vmatprep.subr.bf16.mxu0 0
        %1439 = vmatpush1.bf16.msra.mxu0 0
        %1440 = vmatprep.subr.bf16.mxu0 0
        %1441 = vmatpush1.bf16.msra.mxu0 0
        %1442 = vmatprep.subr.bf16.mxu0 0
        %1443 = vmatpush1.bf16.msra.mxu0 0
        %1444 = vmatprep.subr.bf16.mxu0 0
        %1445 = vmatpush1.bf16.msra.mxu0 0
        %1446 = vmatprep.subr.bf16.mxu0 0
        %1447 = vmatpush1.bf16.msra.mxu0 0
        %1448 = vmatprep.subr.bf16.mxu0 0
        %1449 = vmatpush1.bf16.msra.mxu0 %v1432
        %1450 = vmatprep.subr.bf16.mxu0 0
        %1451 = vmatpush2.bf16.msra.mxu0 0
        %1452 = vmatprep.subr.bf16.mxu0 0
        %1453 = vmatpush2.bf16.msra.mxu0 0
        %1454 = vmatprep.subr.bf16.mxu0 0
        %1455 = vmatpush2.bf16.msra.mxu0 0
        %1456 = vmatprep.subr.bf16.mxu0 0
        %1457 = vmatpush2.bf16.msra.mxu0 0
        %1458 = vmatprep.subr.bf16.mxu0 0
        %1459 = vmatpush2.bf16.msra.mxu0 0
        %1460 = vmatprep.subr.bf16.mxu0 0
        %1461 = vmatpush2.bf16.msra.mxu0 0
        %1462 = vmatprep.subr.bf16.mxu0 0
        %1463 = vmatpush2.bf16.msra.mxu0 0
        %1464 = vmatprep.subr.bf16.mxu0 0
        %1465 = vmatpush2.bf16.msra.mxu0 0
        %1466 = vmatprep.mubr.bf16.mxu0 0
        %1467 = vmatmul.mubr.bf16.gmra.mxu0 %v1429
        %v1468 = vpop.f32.mrf.mxu0
        %v1469 = vadd.f32 %v1315, %v1468
        %v1470 = vpop.f32.mrf.mxu0
        %v1471 = vpop.f32.mrf.mxu0
        %v1472 = vpop.f32.mrf.mxu0
        %1473 = vdwg.mxu0
        %v1474 = vsel %vm1317, %v1469, -inf
        %1475 = vmax.xlane.f32.xlu0 %v1474
        %v1476 = vpop.xlane.xlu0 %1475
        %v1477 = vsub.f32 %v1469, %v1476
        %v1478 = vmul.f32 %v1477, 1.442695
        %v1479 = vpow.pop %v1478
        %v1480 = vsel %vm1317, %v1479, 0.0
        %1481 = vadd.xlane.f32.xlu0 %v1480
        %v1482 = vpop.xlane.xlu0 %1481
        %v1483 = vpack.c.bf16 %v1479, %v1479
        %1485 = vrot.lane.b32.xlu0 %v1273, 120
        %v1486 = vpop.permute.xlu0 %1485
        %v1488 = vsel %vm1317, %v1483, 0
        %v1491 = vsel %vm1321, %v1486, 0
        %1493 = vmatprep.subr.bf16.mxu0 0
        %1494 = vmatpush1.bf16.msra.mxu0 0
        %1495 = vmatprep.subr.bf16.mxu0 0
        %1496 = vmatpush1.bf16.msra.mxu0 0
        %1497 = vmatprep.subr.bf16.mxu0 0
        %1498 = vmatpush1.bf16.msra.mxu0 0
        %1499 = vmatprep.subr.bf16.mxu0 0
        %1500 = vmatpush1.bf16.msra.mxu0 0
        %1501 = vmatprep.subr.bf16.mxu0 0
        %1502 = vmatpush1.bf16.msra.mxu0 0
        %1503 = vmatprep.subr.bf16.mxu0 0
        %1504 = vmatpush1.bf16.msra.mxu0 0
        %1505 = vmatprep.subr.bf16.mxu0 0
        %1506 = vmatpush1.bf16.msra.mxu0 0
        %1507 = vmatprep.subr.bf16.mxu0 0
        %1508 = vmatpush1.bf16.msra.mxu0 %v1491
        %1509 = vmatprep.subr.bf16.mxu0 0
        %1510 = vmatpush2.bf16.msra.mxu0 0
        %1511 = vmatprep.subr.bf16.mxu0 0
        %1512 = vmatpush2.bf16.msra.mxu0 0
        %1513 = vmatprep.subr.bf16.mxu0 0
        %1514 = vmatpush2.bf16.msra.mxu0 0
        %1515 = vmatprep.subr.bf16.mxu0 0
        %1516 = vmatpush2.bf16.msra.mxu0 0
        %1517 = vmatprep.subr.bf16.mxu0 0
        %1518 = vmatpush2.bf16.msra.mxu0 0
        %1519 = vmatprep.subr.bf16.mxu0 0
        %1520 = vmatpush2.bf16.msra.mxu0 0
        %1521 = vmatprep.subr.bf16.mxu0 0
        %1522 = vmatpush2.bf16.msra.mxu0 0
        %1523 = vmatprep.subr.bf16.mxu0 0
        %1524 = vmatpush2.bf16.msra.mxu0 0
        %1525 = vmatprep.mubr.bf16.mxu0 0
        %1526 = vmatmul.mubr.bf16.gmra.mxu0 %v1488
        %v1527 = vpop.f32.mrf.mxu0
        %v1528 = vadd.f32 0.0, %v1527
        %v1529 = vpop.f32.mrf.mxu0
        %v1530 = vpop.f32.mrf.mxu0
        %v1531 = vpop.f32.mrf.mxu0
        %1532 = vdwg.mxu0
        %v1533 = vrcp.pop %v1482
        %v1534 = vmul.f32 %v1528, %v1533
        %1535 = vrot.lane.b32.xlu0 %v1274, 112
        %v1536 = vpop.permute.xlu0 %1535
        %v1538 = vsel %vm1317, %v1536, 0
        %v1541 = vsel %vm1321, %v1308, 0
        %1543 = vmatprep.subr.bf16.mxu0 0
        %1544 = vmatpush1.bf16.msra.mxu0 0
        %1545 = vmatprep.subr.bf16.mxu0 0
        %1546 = vmatpush1.bf16.msra.mxu0 0
        %1547 = vmatprep.subr.bf16.mxu0 0
        %1548 = vmatpush1.bf16.msra.mxu0 0
        %1549 = vmatprep.subr.bf16.mxu0 0
        %1550 = vmatpush1.bf16.msra.mxu0 0
        %1551 = vmatprep.subr.bf16.mxu0 0
        %1552 = vmatpush1.bf16.msra.mxu0 0
        %1553 = vmatprep.subr.bf16.mxu0 0
        %1554 = vmatpush1.bf16.msra.mxu0 0
        %1555 = vmatprep.subr.bf16.mxu0 0
        %1556 = vmatpush1.bf16.msra.mxu0 0
        %1557 = vmatprep.subr.bf16.mxu0 0
        %1558 = vmatpush1.bf16.msra.mxu0 %v1541
        %1559 = vmatprep.subr.bf16.mxu0 0
        %1560 = vmatpush2.bf16.msra.mxu0 0
        %1561 = vmatprep.subr.bf16.mxu0 0
        %1562 = vmatpush2.bf16.msra.mxu0 0
        %1563 = vmatprep.subr.bf16.mxu0 0
        %1564 = vmatpush2.bf16.msra.mxu0 0
        %1565 = vmatprep.subr.bf16.mxu0 0
        %1566 = vmatpush2.bf16.msra.mxu0 0
        %1567 = vmatprep.subr.bf16.mxu0 0
        %1568 = vmatpush2.bf16.msra.mxu0 0
        %1569 = vmatprep.subr.bf16.mxu0 0
        %1570 = vmatpush2.bf16.msra.mxu0 0
        %1571 = vmatprep.subr.bf16.mxu0 0
        %1572 = vmatpush2.bf16.msra.mxu0 0
        %1573 = vmatprep.subr.bf16.mxu0 0
        %1574 = vmatpush2.bf16.msra.mxu0 0
        %1575 = vmatprep.mubr.bf16.mxu0 0
        %1576 = vmatmul.mubr.bf16.gmra.mxu0 %v1538
        %v1577 = vpop.f32.mrf.mxu0
        %v1578 = vadd.f32 %v1315, %v1577
        %v1579 = vpop.f32.mrf.mxu0
        %v1580 = vpop.f32.mrf.mxu0
        %v1581 = vpop.f32.mrf.mxu0
        %1582 = vdwg.mxu0
        %v1583 = vsel %vm1317, %v1578, -inf
        %1584 = vmax.xlane.f32.xlu0 %v1583
        %v1585 = vpop.xlane.xlu0 %1584
        %v1586 = vsub.f32 %v1578, %v1585
        %v1587 = vmul.f32 %v1586, 1.442695
        %v1588 = vpow.pop %v1587
        %v1589 = vsel %vm1317, %v1588, 0.0
        %1590 = vadd.xlane.f32.xlu0 %v1589
        %v1591 = vpop.xlane.xlu0 %1590
        %v1592 = vpack.c.bf16 %v1588, %v1588
        %1593 = vrot.lane.b32.xlu0 %v1273, 112
        %v1594 = vpop.permute.xlu0 %1593
        %v1596 = vsel %vm1317, %v1592, 0
        %v1599 = vsel %vm1321, %v1594, 0
        %1601 = vmatprep.subr.bf16.mxu0 0
        %1602 = vmatpush1.bf16.msra.mxu0 0
        %1603 = vmatprep.subr.bf16.mxu0 0
        %1604 = vmatpush1.bf16.msra.mxu0 0
        %1605 = vmatprep.subr.bf16.mxu0 0
        %1606 = vmatpush1.bf16.msra.mxu0 0
        %1607 = vmatprep.subr.bf16.mxu0 0
        %1608 = vmatpush1.bf16.msra.mxu0 0
        %1609 = vmatprep.subr.bf16.mxu0 0
        %1610 = vmatpush1.bf16.msra.mxu0 0
        %1611 = vmatprep.subr.bf16.mxu0 0
        %1612 = vmatpush1.bf16.msra.mxu0 0
        %1613 = vmatprep.subr.bf16.mxu0 0
        %1614 = vmatpush1.bf16.msra.mxu0 0
        %1615 = vmatprep.subr.bf16.mxu0 0
        %1616 = vmatpush1.bf16.msra.mxu0 %v1599
        %1617 = vmatprep.subr.bf16.mxu0 0
        %1618 = vmatpush2.bf16.msra.mxu0 0
        %1619 = vmatprep.subr.bf16.mxu0 0
        %1620 = vmatpush2.bf16.msra.mxu0 0
        %1621 = vmatprep.subr.bf16.mxu0 0
        %1622 = vmatpush2.bf16.msra.mxu0 0
        %1623 = vmatprep.subr.bf16.mxu0 0
        %1624 = vmatpush2.bf16.msra.mxu0 0
        %1625 = vmatprep.subr.bf16.mxu0 0
        %1626 = vmatpush2.bf16.msra.mxu0 0
        %1627 = vmatprep.subr.bf16.mxu0 0
        %1628 = vmatpush2.bf16.msra.mxu0 0
        %1629 = vmatprep.subr.bf16.mxu0 0
        %1630 = vmatpush2.bf16.msra.mxu0 0
        %1631 = vmatprep.subr.bf16.mxu0 0
        %1632 = vmatpush2.bf16.msra.mxu0 0
        %1633 = vmatprep.mubr.bf16.mxu0 0
        %1634 = vmatmul.mubr.bf16.gmra.mxu0 %v1596
        %v1635 = vpop.f32.mrf.mxu0
        %v1636 = vadd.f32 0.0, %v1635
        %v1637 = vpop.f32.mrf.mxu0
        %v1638 = vpop.f32.mrf.mxu0
        %v1639 = vpop.f32.mrf.mxu0
        %1640 = vdwg.mxu0
        %v1641 = vrcp.pop %v1591
        %v1642 = vmul.f32 %v1636, %v1641
        %1643 = vrot.lane.b32.xlu0 %v1274, 104
        %v1644 = vpop.permute.xlu0 %1643
        %v1646 = vrot.slane %v1308, 4
        %v1648 = vsel %vm1317, %v1644, 0
        %v1651 = vsel %vm1321, %v1646, 0
        %1653 = vmatprep.subr.bf16.mxu0 0
        %1654 = vmatpush1.bf16.msra.mxu0 0
        %1655 = vmatprep.subr.bf16.mxu0 0
        %1656 = vmatpush1.bf16.msra.mxu0 0
        %1657 = vmatprep.subr.bf16.mxu0 0
        %1658 = vmatpush1.bf16.msra.mxu0 0
        %1659 = vmatprep.subr.bf16.mxu0 0
        %1660 = vmatpush1.bf16.msra.mxu0 0
        %1661 = vmatprep.subr.bf16.mxu0 0
        %1662 = vmatpush1.bf16.msra.mxu0 0
        %1663 = vmatprep.subr.bf16.mxu0 0
        %1664 = vmatpush1.bf16.msra.mxu0 0
        %1665 = vmatprep.subr.bf16.mxu0 0
        %1666 = vmatpush1.bf16.msra.mxu0 0
        %1667 = vmatprep.subr.bf16.mxu0 0
        %1668 = vmatpush1.bf16.msra.mxu0 %v1651
        %1669 = vmatprep.subr.bf16.mxu0 0
        %1670 = vmatpush2.bf16.msra.mxu0 0
        %1671 = vmatprep.subr.bf16.mxu0 0
        %1672 = vmatpush2.bf16.msra.mxu0 0
        %1673 = vmatprep.subr.bf16.mxu0 0
        %1674 = vmatpush2.bf16.msra.mxu0 0
        %1675 = vmatprep.subr.bf16.mxu0 0
        %1676 = vmatpush2.bf16.msra.mxu0 0
        %1677 = vmatprep.subr.bf16.mxu0 0
        %1678 = vmatpush2.bf16.msra.mxu0 0
        %1679 = vmatprep.subr.bf16.mxu0 0
        %1680 = vmatpush2.bf16.msra.mxu0 0
        %1681 = vmatprep.subr.bf16.mxu0 0
        %1682 = vmatpush2.bf16.msra.mxu0 0
        %1683 = vmatprep.subr.bf16.mxu0 0
        %1684 = vmatpush2.bf16.msra.mxu0 0
        %1685 = vmatprep.mubr.bf16.mxu0 0
        %1686 = vmatmul.mubr.bf16.gmra.mxu0 %v1648
        %v1687 = vpop.f32.mrf.mxu0
        %v1688 = vadd.f32 %v1315, %v1687
        %v1689 = vpop.f32.mrf.mxu0
        %v1690 = vpop.f32.mrf.mxu0
        %v1691 = vpop.f32.mrf.mxu0
        %1692 = vdwg.mxu0
        %v1693 = vsel %vm1317, %v1688, -inf
        %1694 = vmax.xlane.f32.xlu0 %v1693
        %v1695 = vpop.xlane.xlu0 %1694
        %v1696 = vsub.f32 %v1688, %v1695
        %v1697 = vmul.f32 %v1696, 1.442695
        %v1698 = vpow.pop %v1697
        %v1699 = vsel %vm1317, %v1698, 0.0
        %1700 = vadd.xlane.f32.xlu0 %v1699
        %v1701 = vpop.xlane.xlu0 %1700
        %v1702 = vpack.c.bf16 %v1698, %v1698
        %1703 = vrot.lane.b32.xlu0 %v1273, 104
        %v1704 = vpop.permute.xlu0 %1703
        %v1706 = vsel %vm1317, %v1702, 0
        %v1709 = vsel %vm1321, %v1704, 0
        %1711 = vmatprep.subr.bf16.mxu0 0
        %1712 = vmatpush1.bf16.msra.mxu0 0
        %1713 = vmatprep.subr.bf16.mxu0 0
        %1714 = vmatpush1.bf16.msra.mxu0 0
        %1715 = vmatprep.subr.bf16.mxu0 0
        %1716 = vmatpush1.bf16.msra.mxu0 0
        %1717 = vmatprep.subr.bf16.mxu0 0
        %1718 = vmatpush1.bf16.msra.mxu0 0
        %1719 = vmatprep.subr.bf16.mxu0 0
        %1720 = vmatpush1.bf16.msra.mxu0 0
        %1721 = vmatprep.subr.bf16.mxu0 0
        %1722 = vmatpush1.bf16.msra.mxu0 0
        %1723 = vmatprep.subr.bf16.mxu0 0
        %1724 = vmatpush1.bf16.msra.mxu0 0
        %1725 = vmatprep.subr.bf16.mxu0 0
        %1726 = vmatpush1.bf16.msra.mxu0 %v1709
        %1727 = vmatprep.subr.bf16.mxu0 0
        %1728 = vmatpush2.bf16.msra.mxu0 0
        %1729 = vmatprep.subr.bf16.mxu0 0
        %1730 = vmatpush2.bf16.msra.mxu0 0
        %1731 = vmatprep.subr.bf16.mxu0 0
        %1732 = vmatpush2.bf16.msra.mxu0 0
        %1733 = vmatprep.subr.bf16.mxu0 0
        %1734 = vmatpush2.bf16.msra.mxu0 0
        %1735 = vmatprep.subr.bf16.mxu0 0
        %1736 = vmatpush2.bf16.msra.mxu0 0
        %1737 = vmatprep.subr.bf16.mxu0 0
        %1738 = vmatpush2.bf16.msra.mxu0 0
        %1739 = vmatprep.subr.bf16.mxu0 0
        %1740 = vmatpush2.bf16.msra.mxu0 0
        %1741 = vmatprep.subr.bf16.mxu0 0
        %1742 = vmatpush2.bf16.msra.mxu0 0
        %1743 = vmatprep.mubr.bf16.mxu0 0
        %1744 = vmatmul.mubr.bf16.gmra.mxu0 %v1706
        %v1745 = vpop.f32.mrf.mxu0
        %v1746 = vadd.f32 0.0, %v1745
        %v1747 = vpop.f32.mrf.mxu0
        %v1748 = vpop.f32.mrf.mxu0
        %v1749 = vpop.f32.mrf.mxu0
        %1750 = vdwg.mxu0
        %v1751 = vrcp.pop %v1701
        %v1752 = vmul.f32 %v1746, %v1751
        %1754 = vrot.lane.b32.xlu0 %v1534, 8
        %v1755 = vpop.permute.xlu0 %1754
        %1758 = vrot.lane.b32.xlu0 %v1642, 16
        %v1759 = vpop.permute.xlu0 %1758
        %1762 = vrot.lane.b32.xlu0 %v1752, 24
        %v1763 = vpop.permute.xlu0 %1762
        %v1765 = vsel %vm1317, %v1422, %v1755
        %vm1766 = vcmask 130048
        %v1767 = vsel %vm1766, %v1765, %v1759
        %vm1768 = vcmask 195584
        %v1769 = vsel %vm1768, %v1767, %v1763
        %v1770 = vpack.c.bf16 %v1769, %v1769
        %1771 = vst.msk [vmem:[#allocation2 + $0x2] sm:$0xff] %vm1086, %v1769
        %v1772 = vld [vmem:[#allocation2 + $0x1] sm:$0xff]
        %v1773 = vpack.c.bf16 %v1772, %v1772
        %v1774 = vld [vmem:[#allocation24] sm:$0xf]
        %v1775 = vld [vmem:[#allocation24 + $0x4] sm:$0xf]
        %v1776 = vld [vmem:[#allocation24 + $0x8] sm:$0xf]
        %v1777 = vld [vmem:[#allocation24 + $0xc] sm:$0xf]
        %s1778 = scalar_lea.vmem [#allocation24], 16
        %v1779 = vld [vmem:[%s1778] sm:$0xf]
        %v1780 = vld [vmem:[%s1778 + $0x4] sm:$0xf]
        %v1781 = vld [vmem:[%s1778 + $0x8] sm:$0xf]
        %v1782 = vld [vmem:[%s1778 + $0xc] sm:$0xf]
        %v1787 = vunpack.c.l.b16 %v1779
        %v1788 = vunpack.c.l.b16 %v1780
        %v1789 = vunpack.c.l.b16 %v1781
        %v1790 = vunpack.c.l.b16 %v1782
        %v1791 = vpack.c.b16 %v1788, %v1787
        %v1792 = vpack.c.b16 %v1790, %v1789
        %v1796 = vsel %vm1086, %v1770, 0
        %1798 = vmatprep.subr.bf16.mxu0 0
        %1799 = vmatpush1.bf16.msra.mxu0 0
        %1800 = vmatprep.subr.bf16.mxu0 0
        %1801 = vmatpush1.bf16.msra.mxu0 0
        %1802 = vmatprep.subr.bf16.mxu0 0
        %1803 = vmatpush1.bf16.msra.mxu0 0
        %1804 = vmatprep.subr.bf16.mxu0 0
        %1805 = vmatpush1.bf16.msra.mxu0 0
        %1806 = vmatprep.subr.bf16.mxu0 0
        %1807 = vmatpush1.bf16.msra.mxu0 0
        %1808 = vmatprep.subr.bf16.mxu0 0
        %1809 = vmatpush1.bf16.msra.mxu0 0
        %1810 = vmatprep.subr.bf16.mxu0 0
        %1811 = vmatpush1.bf16.msra.mxu0 %v1792
        %1812 = vmatprep.subr.bf16.mxu0 0
        %1813 = vmatpush1.bf16.msra.mxu0 %v1791
        %1814 = vmatprep.subr.bf16.mxu0 0
        %1815 = vmatpush2.bf16.msra.mxu0 0
        %1816 = vmatprep.subr.bf16.mxu0 0
        %1817 = vmatpush2.bf16.msra.mxu0 0
        %1818 = vmatprep.subr.bf16.mxu0 0
        %1819 = vmatpush2.bf16.msra.mxu0 0
        %1820 = vmatprep.subr.bf16.mxu0 0
        %1821 = vmatpush2.bf16.msra.mxu0 0
        %1822 = vmatprep.subr.bf16.mxu0 0
        %1823 = vmatpush2.bf16.msra.mxu0 0
        %1824 = vmatprep.subr.bf16.mxu0 0
        %1825 = vmatpush2.bf16.msra.mxu0 0
        %1826 = vmatprep.subr.bf16.mxu0 0
        %1827 = vmatpush2.bf16.msra.mxu0 0
        %1828 = vmatprep.subr.bf16.mxu0 0
        %1829 = vmatpush2.bf16.msra.mxu0 0
        %1830 = vmatprep.mubr.bf16.mxu0 0
        %1831 = vmatmul.mubr.bf16.gmra.mxu0 %v1796
        %v1832 = vpop.f32.mrf.mxu0
        %v1833 = vadd.f32 0.0, %v1832
        %v1834 = vpop.f32.mrf.mxu0
        %v1835 = vpop.f32.mrf.mxu0
        %v1836 = vpop.f32.mrf.mxu0
        %1837 = vdwg.mxu0
        %v1842 = vunpack.c.l.b16 %v1774
        %v1843 = vunpack.c.l.b16 %v1775
        %v1844 = vunpack.c.l.b16 %v1776
        %v1845 = vunpack.c.l.b16 %v1777
        %v1846 = vpack.c.b16 %v1843, %v1842
        %v1847 = vpack.c.b16 %v1845, %v1844
        %v1851 = vsel %vm1086, %v1773, 0
        %1853 = vmatprep.subr.bf16.mxu0 0
        %1854 = vmatpush1.bf16.msra.mxu0 0
        %1855 = vmatprep.subr.bf16.mxu0 0
        %1856 = vmatpush1.bf16.msra.mxu0 0
        %1857 = vmatprep.subr.bf16.mxu0 0
        %1858 = vmatpush1.bf16.msra.mxu0 0
        %1859 = vmatprep.subr.bf16.mxu0 0
        %1860 = vmatpush1.bf16.msra.mxu0 0
        %1861 = vmatprep.subr.bf16.mxu0 0
        %1862 = vmatpush1.bf16.msra.mxu0 0
        %1863 = vmatprep.subr.bf16.mxu0 0
        %1864 = vmatpush1.bf16.msra.mxu0 0
        %1865 = vmatprep.subr.bf16.mxu0 0
        %1866 = vmatpush1.bf16.msra.mxu0 %v1847
        %1867 = vmatprep.subr.bf16.mxu0 0
        %1868 = vmatpush1.bf16.msra.mxu0 %v1846
        %1869 = vmatprep.subr.bf16.mxu0 0
        %1870 = vmatpush2.bf16.msra.mxu0 0
        %1871 = vmatprep.subr.bf16.mxu0 0
        %1872 = vmatpush2.bf16.msra.mxu0 0
        %1873 = vmatprep.subr.bf16.mxu0 0
        %1874 = vmatpush2.bf16.msra.mxu0 0
        %1875 = vmatprep.subr.bf16.mxu0 0
        %1876 = vmatpush2.bf16.msra.mxu0 0
        %1877 = vmatprep.subr.bf16.mxu0 0
        %1878 = vmatpush2.bf16.msra.mxu0 0
        %1879 = vmatprep.subr.bf16.mxu0 0
        %1880 = vmatpush2.bf16.msra.mxu0 0
        %1881 = vmatprep.subr.bf16.mxu0 0
        %1882 = vmatpush2.bf16.msra.mxu0 0
        %1883 = vmatprep.subr.bf16.mxu0 0
        %1884 = vmatpush2.bf16.msra.mxu0 0
        %1885 = vmatprep.mubr.bf16.mxu0 0
        %1886 = vmatmul.mubr.bf16.gmra.mxu0 %v1851
        %v1887 = vpop.f32.mrf.mxu0
        %v1888 = vadd.f32 %v1833, %v1887
        %v1889 = vpop.f32.mrf.mxu0
        %v1890 = vpop.f32.mrf.mxu0
        %v1891 = vpop.f32.mrf.mxu0
        %1892 = vdwg.mxu0
        %v1893 = vld [vmem:[#allocation2 + $0x3] sm:$0xff]
        %v1894 = vpack.c.bf16 %v1893, %v1893
        %s1895 = scalar_lea.vmem [#allocation24], 32
        %v1896 = vld [vmem:[%s1895] sm:$0xf]
        %v1897 = vld [vmem:[%s1895 + $0x4] sm:$0xf]
        %v1898 = vld [vmem:[%s1895 + $0x8] sm:$0xf]
        %v1899 = vld [vmem:[%s1895 + $0xc] sm:$0xf]
        %v1904 = vunpack.c.l.b16 %v1896
        %v1905 = vunpack.c.l.b16 %v1897
        %v1906 = vunpack.c.l.b16 %v1898
        %v1907 = vunpack.c.l.b16 %v1899
        %v1908 = vpack.c.b16 %v1905, %v1904
        %v1909 = vpack.c.b16 %v1907, %v1906
        %v1913 = vsel %vm1086, %v1894, 0
        %1915 = vmatprep.subr.bf16.mxu0 0
        %1916 = vmatpush1.bf16.msra.mxu0 0
        %1917 = vmatprep.subr.bf16.mxu0 0
        %1918 = vmatpush1.bf16.msra.mxu0 0
        %1919 = vmatprep.subr.bf16.mxu0 0
        %1920 = vmatpush1.bf16.msra.mxu0 0
        %1921 = vmatprep.subr.bf16.mxu0 0
        %1922 = vmatpush1.bf16.msra.mxu0 0
        %1923 = vmatprep.subr.bf16.mxu0 0
        %1924 = vmatpush1.bf16.msra.mxu0 0
        %1925 = vmatprep.subr.bf16.mxu0 0
        %1926 = vmatpush1.bf16.msra.mxu0 0
        %1927 = vmatprep.subr.bf16.mxu0 0
        %1928 = vmatpush1.bf16.msra.mxu0 %v1909
        %1929 = vmatprep.subr.bf16.mxu0 0
        %1930 = vmatpush1.bf16.msra.mxu0 %v1908
        %1931 = vmatprep.subr.bf16.mxu0 0
        %1932 = vmatpush2.bf16.msra.mxu0 0
        %1933 = vmatprep.subr.bf16.mxu0 0
        %1934 = vmatpush2.bf16.msra.mxu0 0
        %1935 = vmatprep.subr.bf16.mxu0 0
        %1936 = vmatpush2.bf16.msra.mxu0 0
        %1937 = vmatprep.subr.bf16.mxu0 0
        %1938 = vmatpush2.bf16.msra.mxu0 0
        %1939 = vmatprep.subr.bf16.mxu0 0
        %1940 = vmatpush2.bf16.msra.mxu0 0
        %1941 = vmatprep.subr.bf16.mxu0 0
        %1942 = vmatpush2.bf16.msra.mxu0 0
        %1943 = vmatprep.subr.bf16.mxu0 0
        %1944 = vmatpush2.bf16.msra.mxu0 0
        %1945 = vmatprep.subr.bf16.mxu0 0
        %1946 = vmatpush2.bf16.msra.mxu0 0
        %1947 = vmatprep.mubr.bf16.mxu0 0
        %1948 = vmatmul.mubr.bf16.gmra.mxu0 %v1913
        %v1949 = vpop.f32.mrf.mxu0
        %v1950 = vadd.f32 0.0, %v1949
        %v1951 = vpop.f32.mrf.mxu0
        %v1952 = vpop.f32.mrf.mxu0
        %v1953 = vpop.f32.mrf.mxu0
        %1954 = vdwg.mxu0
        %v1955 = vadd.f32 %v1888, %v1950
        %v1956 = vld [vmem:[#allocation25] sm:$0x1]
        %v1958 = vlaneseq
        %v1959 = vshrl.u32 %v1958, 7
        %v1960 = vsub.s32 0, %v1959
        %v1961 = vrot.slane %v1956, %v1960
        %v1963 = vadd.f32 %v1955, %v1961
        %v1964 = vmax.f32 %v1963, 0.0
        %v1965 = vpack.c.bf16 %v1964, %v1964
        %v1966 = vld [vmem:[#allocation28] sm:$0xf]
        %v1967 = vld [vmem:[#allocation28 + $0x4] sm:$0xf]
        %v1968 = vld [vmem:[#allocation28 + $0x8] sm:$0xf]
        %v1969 = vld [vmem:[#allocation28 + $0xc] sm:$0xf]
        %v1970 = vld [vmem:[#allocation2] sm:$0xff]
        %v1971 = vpack.c.bf16 %v1970, %v1970
        %v1972 = vld [vmem:[%s14] sm:$0xf]
        %v1973 = vld [vmem:[%s14 + $0x4] sm:$0xf]
        %v1974 = vld [vmem:[%s14 + $0x8] sm:$0xf]
        %v1975 = vld [vmem:[%s14 + $0xc] sm:$0xf]
        %s1976 = scalar_lea.vmem %s14, 16
        %v1977 = vld [vmem:[%s1976] sm:$0xf]
        %v1978 = vld [vmem:[%s1976 + $0x4] sm:$0xf]
        %v1979 = vld [vmem:[%s1976 + $0x8] sm:$0xf]
        %v1980 = vld [vmem:[%s1976 + $0xc] sm:$0xf]
        %v1985 = vunpack.c.l.b16 %v1977
        %v1986 = vunpack.c.l.b16 %v1978
        %v1987 = vunpack.c.l.b16 %v1979
        %v1988 = vunpack.c.l.b16 %v1980
        %v1989 = vpack.c.b16 %v1986, %v1985
        %v1990 = vpack.c.b16 %v1988, %v1987
        %1993 = vmatprep.subr.bf16.mxu0 0
        %1994 = vmatpush1.bf16.msra.mxu0 0
        %1995 = vmatprep.subr.bf16.mxu0 0
        %1996 = vmatpush1.bf16.msra.mxu0 0
        %1997 = vmatprep.subr.bf16.mxu0 0
        %1998 = vmatpush1.bf16.msra.mxu0 0
        %1999 = vmatprep.subr.bf16.mxu0 0
        %2000 = vmatpush1.bf16.msra.mxu0 0
        %2001 = vmatprep.subr.bf16.mxu0 0
        %2002 = vmatpush1.bf16.msra.mxu0 0
        %2003 = vmatprep.subr.bf16.mxu0 0
        %2004 = vmatpush1.bf16.msra.mxu0 0
        %2005 = vmatprep.subr.bf16.mxu0 0
        %2006 = vmatpush1.bf16.msra.mxu0 %v1990
        %2007 = vmatprep.subr.bf16.mxu0 0
        %2008 = vmatpush1.bf16.msra.mxu0 %v1989
        %2009 = vmatprep.subr.bf16.mxu0 0
        %2010 = vmatpush2.bf16.msra.mxu0 0
        %2011 = vmatprep.subr.bf16.mxu0 0
        %2012 = vmatpush2.bf16.msra.mxu0 0
        %2013 = vmatprep.subr.bf16.mxu0 0
        %2014 = vmatpush2.bf16.msra.mxu0 0
        %2015 = vmatprep.subr.bf16.mxu0 0
        %2016 = vmatpush2.bf16.msra.mxu0 0
        %2017 = vmatprep.subr.bf16.mxu0 0
        %2018 = vmatpush2.bf16.msra.mxu0 0
        %2019 = vmatprep.subr.bf16.mxu0 0
        %2020 = vmatpush2.bf16.msra.mxu0 0
        %2021 = vmatprep.subr.bf16.mxu0 0
        %2022 = vmatpush2.bf16.msra.mxu0 0
        %2023 = vmatprep.subr.bf16.mxu0 0
        %2024 = vmatpush2.bf16.msra.mxu0 0
        %2025 = vmatprep.mubr.bf16.mxu0 0
        %2026 = vmatmul.mubr.bf16.gmra.mxu0 %v1851
        %v2027 = vpop.f32.mrf.mxu0
        %v2028 = vadd.f32 0.0, %v2027
        %v2029 = vpop.f32.mrf.mxu0
        %v2030 = vpop.f32.mrf.mxu0
        %v2031 = vpop.f32.mrf.mxu0
        %2032 = vdwg.mxu0
        %v2037 = vunpack.c.l.b16 %v1972
        %v2038 = vunpack.c.l.b16 %v1973
        %v2039 = vunpack.c.l.b16 %v1974
        %v2040 = vunpack.c.l.b16 %v1975
        %v2041 = vpack.c.b16 %v2038, %v2037
        %v2042 = vpack.c.b16 %v2040, %v2039
        %v2046 = vsel %vm1086, %v1971, 0
        %2048 = vmatprep.subr.bf16.mxu0 0
        %2049 = vmatpush1.bf16.msra.mxu0 0
        %2050 = vmatprep.subr.bf16.mxu0 0
        %2051 = vmatpush1.bf16.msra.mxu0 0
        %2052 = vmatprep.subr.bf16.mxu0 0
        %2053 = vmatpush1.bf16.msra.mxu0 0
        %2054 = vmatprep.subr.bf16.mxu0 0
        %2055 = vmatpush1.bf16.msra.mxu0 0
        %2056 = vmatprep.subr.bf16.mxu0 0
        %2057 = vmatpush1.bf16.msra.mxu0 0
        %2058 = vmatprep.subr.bf16.mxu0 0
        %2059 = vmatpush1.bf16.msra.mxu0 0
        %2060 = vmatprep.subr.bf16.mxu0 0
        %2061 = vmatpush1.bf16.msra.mxu0 %v2042
        %2062 = vmatprep.subr.bf16.mxu0 0
        %2063 = vmatpush1.bf16.msra.mxu0 %v2041
        %2064 = vmatprep.subr.bf16.mxu0 0
        %2065 = vmatpush2.bf16.msra.mxu0 0
        %2066 = vmatprep.subr.bf16.mxu0 0
        %2067 = vmatpush2.bf16.msra.mxu0 0
        %2068 = vmatprep.subr.bf16.mxu0 0
        %2069 = vmatpush2.bf16.msra.mxu0 0
        %2070 = vmatprep.subr.bf16.mxu0 0
        %2071 = vmatpush2.bf16.msra.mxu0 0
        %2072 = vmatprep.subr.bf16.mxu0 0
        %2073 = vmatpush2.bf16.msra.mxu0 0
        %2074 = vmatprep.subr.bf16.mxu0 0
        %2075 = vmatpush2.bf16.msra.mxu0 0
        %2076 = vmatprep.subr.bf16.mxu0 0
        %2077 = vmatpush2.bf16.msra.mxu0 0
        %2078 = vmatprep.subr.bf16.mxu0 0
        %2079 = vmatpush2.bf16.msra.mxu0 0
        %2080 = vmatprep.mubr.bf16.mxu0 0
        %2081 = vmatmul.mubr.bf16.gmra.mxu0 %v2046
        %v2082 = vpop.f32.mrf.mxu0
        %v2083 = vadd.f32 %v2028, %v2082
        %v2084 = vpop.f32.mrf.mxu0
        %v2085 = vpop.f32.mrf.mxu0
        %v2086 = vpop.f32.mrf.mxu0
        %2087 = vdwg.mxu0
        %s2088 = scalar_lea.vmem %s14, 32
        %v2089 = vld [vmem:[%s2088] sm:$0xf]
        %v2090 = vld [vmem:[%s2088 + $0x4] sm:$0xf]
        %v2091 = vld [vmem:[%s2088 + $0x8] sm:$0xf]
        %v2092 = vld [vmem:[%s2088 + $0xc] sm:$0xf]
        %v2097 = vunpack.c.l.b16 %v2089
        %v2098 = vunpack.c.l.b16 %v2090
        %v2099 = vunpack.c.l.b16 %v2091
        %v2100 = vunpack.c.l.b16 %v2092
        %v2101 = vpack.c.b16 %v2098, %v2097
        %v2102 = vpack.c.b16 %v2100, %v2099
        %2105 = vmatprep.subr.bf16.mxu0 0
        %2106 = vmatpush1.bf16.msra.mxu0 0
        %2107 = vmatprep.subr.bf16.mxu0 0
        %2108 = vmatpush1.bf16.msra.mxu0 0
        %2109 = vmatprep.subr.bf16.mxu0 0
        %2110 = vmatpush1.bf16.msra.mxu0 0
        %2111 = vmatprep.subr.bf16.mxu0 0
        %2112 = vmatpush1.bf16.msra.mxu0 0
        %2113 = vmatprep.subr.bf16.mxu0 0
        %2114 = vmatpush1.bf16.msra.mxu0 0
        %2115 = vmatprep.subr.bf16.mxu0 0
        %2116 = vmatpush1.bf16.msra.mxu0 0
        %2117 = vmatprep.subr.bf16.mxu0 0
        %2118 = vmatpush1.bf16.msra.mxu0 %v2102
        %2119 = vmatprep.subr.bf16.mxu0 0
        %2120 = vmatpush1.bf16.msra.mxu0 %v2101
        %2121 = vmatprep.subr.bf16.mxu0 0
        %2122 = vmatpush2.bf16.msra.mxu0 0
        %2123 = vmatprep.subr.bf16.mxu0 0
        %2124 = vmatpush2.bf16.msra.mxu0 0
        %2125 = vmatprep.subr.bf16.mxu0 0
        %2126 = vmatpush2.bf16.msra.mxu0 0
        %2127 = vmatprep.subr.bf16.mxu0 0
        %2128 = vmatpush2.bf16.msra.mxu0 0
        %2129 = vmatprep.subr.bf16.mxu0 0
        %2130 = vmatpush2.bf16.msra.mxu0 0
        %2131 = vmatprep.subr.bf16.mxu0 0
        %2132 = vmatpush2.bf16.msra.mxu0 0
        %2133 = vmatprep.subr.bf16.mxu0 0
        %2134 = vmatpush2.bf16.msra.mxu0 0
        %2135 = vmatprep.subr.bf16.mxu0 0
        %2136 = vmatpush2.bf16.msra.mxu0 0
        %2137 = vmatprep.mubr.bf16.mxu0 0
        %2138 = vmatmul.mubr.bf16.gmra.mxu0 %v1796
        %v2139 = vpop.f32.mrf.mxu0
        %v2140 = vadd.f32 0.0, %v2139
        %v2141 = vpop.f32.mrf.mxu0
        %v2142 = vpop.f32.mrf.mxu0
        %v2143 = vpop.f32.mrf.mxu0
        %2144 = vdwg.mxu0
        %v2145 = vadd.f32 %v2083, %v2140
        %s2146 = scalar_lea.vmem %s14, 48
        %v2147 = vld [vmem:[%s2146] sm:$0xf]
        %v2148 = vld [vmem:[%s2146 + $0x4] sm:$0xf]
        %v2149 = vld [vmem:[%s2146 + $0x8] sm:$0xf]
        %v2150 = vld [vmem:[%s2146 + $0xc] sm:$0xf]
        %v2155 = vunpack.c.l.b16 %v2147
        %v2156 = vunpack.c.l.b16 %v2148
        %v2157 = vunpack.c.l.b16 %v2149
        %v2158 = vunpack.c.l.b16 %v2150
        %v2159 = vpack.c.b16 %v2156, %v2155
        %v2160 = vpack.c.b16 %v2158, %v2157
        %2163 = vmatprep.subr.bf16.mxu0 0
        %2164 = vmatpush1.bf16.msra.mxu0 0
        %2165 = vmatprep.subr.bf16.mxu0 0
        %2166 = vmatpush1.bf16.msra.mxu0 0
        %2167 = vmatprep.subr.bf16.mxu0 0
        %2168 = vmatpush1.bf16.msra.mxu0 0
        %2169 = vmatprep.subr.bf16.mxu0 0
        %2170 = vmatpush1.bf16.msra.mxu0 0
        %2171 = vmatprep.subr.bf16.mxu0 0
        %2172 = vmatpush1.bf16.msra.mxu0 0
        %2173 = vmatprep.subr.bf16.mxu0 0
        %2174 = vmatpush1.bf16.msra.mxu0 0
        %2175 = vmatprep.subr.bf16.mxu0 0
        %2176 = vmatpush1.bf16.msra.mxu0 %v2160
        %2177 = vmatprep.subr.bf16.mxu0 0
        %2178 = vmatpush1.bf16.msra.mxu0 %v2159
        %2179 = vmatprep.subr.bf16.mxu0 0
        %2180 = vmatpush2.bf16.msra.mxu0 0
        %2181 = vmatprep.subr.bf16.mxu0 0
        %2182 = vmatpush2.bf16.msra.mxu0 0
        %2183 = vmatprep.subr.bf16.mxu0 0
        %2184 = vmatpush2.bf16.msra.mxu0 0
        %2185 = vmatprep.subr.bf16.mxu0 0
        %2186 = vmatpush2.bf16.msra.mxu0 0
        %2187 = vmatprep.subr.bf16.mxu0 0
        %2188 = vmatpush2.bf16.msra.mxu0 0
        %2189 = vmatprep.subr.bf16.mxu0 0
        %2190 = vmatpush2.bf16.msra.mxu0 0
        %2191 = vmatprep.subr.bf16.mxu0 0
        %2192 = vmatpush2.bf16.msra.mxu0 0
        %2193 = vmatprep.subr.bf16.mxu0 0
        %2194 = vmatpush2.bf16.msra.mxu0 0
        %2195 = vmatprep.mubr.bf16.mxu0 0
        %2196 = vmatmul.mubr.bf16.gmra.mxu0 %v1913
        %v2197 = vpop.f32.mrf.mxu0
        %v2198 = vadd.f32 0.0, %v2197
        %v2199 = vpop.f32.mrf.mxu0
        %v2200 = vpop.f32.mrf.mxu0
        %v2201 = vpop.f32.mrf.mxu0
        %2202 = vdwg.mxu0
        %v2203 = vadd.f32 %v2145, %v2198
        %v2204 = vld [vmem:[#allocation2 + $0x4] sm:$0xff]
        %v2205 = vpack.c.bf16 %v2204, %v2204
        %s2206 = scalar_lea.vmem %s14, 64
        %v2207 = vld [vmem:[%s2206] sm:$0xf]
        %v2208 = vld [vmem:[%s2206 + $0x4] sm:$0xf]
        %v2209 = vld [vmem:[%s2206 + $0x8] sm:$0xf]
        %v2210 = vld [vmem:[%s2206 + $0xc] sm:$0xf]
        %v2215 = vunpack.c.l.b16 %v2207
        %v2216 = vunpack.c.l.b16 %v2208
        %v2217 = vunpack.c.l.b16 %v2209
        %v2218 = vunpack.c.l.b16 %v2210
        %v2219 = vpack.c.b16 %v2216, %v2215
        %v2220 = vpack.c.b16 %v2218, %v2217
        %v2224 = vsel %vm1086, %v2205, 0
        %2226 = vmatprep.subr.bf16.mxu0 0
        %2227 = vmatpush1.bf16.msra.mxu0 0
        %2228 = vmatprep.subr.bf16.mxu0 0
        %2229 = vmatpush1.bf16.msra.mxu0 0
        %2230 = vmatprep.subr.bf16.mxu0 0
        %2231 = vmatpush1.bf16.msra.mxu0 0
        %2232 = vmatprep.subr.bf16.mxu0 0
        %2233 = vmatpush1.bf16.msra.mxu0 0
        %2234 = vmatprep.subr.bf16.mxu0 0
        %2235 = vmatpush1.bf16.msra.mxu0 0
        %2236 = vmatprep.subr.bf16.mxu0 0
        %2237 = vmatpush1.bf16.msra.mxu0 0
        %2238 = vmatprep.subr.bf16.mxu0 0
        %2239 = vmatpush1.bf16.msra.mxu0 %v2220
        %2240 = vmatprep.subr.bf16.mxu0 0
        %2241 = vmatpush1.bf16.msra.mxu0 %v2219
        %2242 = vmatprep.subr.bf16.mxu0 0
        %2243 = vmatpush2.bf16.msra.mxu0 0
        %2244 = vmatprep.subr.bf16.mxu0 0
        %2245 = vmatpush2.bf16.msra.mxu0 0
        %2246 = vmatprep.subr.bf16.mxu0 0
        %2247 = vmatpush2.bf16.msra.mxu0 0
        %2248 = vmatprep.subr.bf16.mxu0 0
        %2249 = vmatpush2.bf16.msra.mxu0 0
        %2250 = vmatprep.subr.bf16.mxu0 0
        %2251 = vmatpush2.bf16.msra.mxu0 0
        %2252 = vmatprep.subr.bf16.mxu0 0
        %2253 = vmatpush2.bf16.msra.mxu0 0
        %2254 = vmatprep.subr.bf16.mxu0 0
        %2255 = vmatpush2.bf16.msra.mxu0 0
        %2256 = vmatprep.subr.bf16.mxu0 0
        %2257 = vmatpush2.bf16.msra.mxu0 0
        %2258 = vmatprep.mubr.bf16.mxu0 0
        %2259 = vmatmul.mubr.bf16.gmra.mxu0 %v2224
        %v2260 = vpop.f32.mrf.mxu0
        %v2261 = vadd.f32 0.0, %v2260
        %v2262 = vpop.f32.mrf.mxu0
        %v2263 = vpop.f32.mrf.mxu0
        %v2264 = vpop.f32.mrf.mxu0
        %2265 = vdwg.mxu0
        %v2266 = vadd.f32 %v2203, %v2261
        %v2267 = vld [vmem:[#allocation27] sm:$0x1]
        %v2269 = vlaneseq
        %v2270 = vshrl.u32 %v2269, 7
        %v2271 = vsub.s32 0, %v2270
        %v2272 = vrot.slane %v2267, %v2271
        %v2274 = vadd.f32 %v2266, %v2272
        %v2275 = vmax.f32 %v2274, 0.0
        %v2276 = vpack.c.bf16 %v2275, %v2275
        %s2277 = scalar_lea.vmem [#allocation28], 16
        %v2278 = vld [vmem:[%s2277] sm:$0xf]
        %v2279 = vld [vmem:[%s2277 + $0x4] sm:$0xf]
        %v2280 = vld [vmem:[%s2277 + $0x8] sm:$0xf]
        %v2281 = vld [vmem:[%s2277 + $0xc] sm:$0xf]
        %v2286 = vunpack.c.l.b16 %v2278
        %v2287 = vunpack.c.l.b16 %v2279
        %v2288 = vunpack.c.l.b16 %v2280
        %v2289 = vunpack.c.l.b16 %v2281
        %v2290 = vpack.c.b16 %v2287, %v2286
        %v2291 = vpack.c.b16 %v2289, %v2288
        %v2295 = vsel %vm1086, %v2276, 0
        %2297 = vmatprep.subr.bf16.mxu0 0
        %2298 = vmatpush1.bf16.msra.mxu0 0
        %2299 = vmatprep.subr.bf16.mxu0 0
        %2300 = vmatpush1.bf16.msra.mxu0 0
        %2301 = vmatprep.subr.bf16.mxu0 0
        %2302 = vmatpush1.bf16.msra.mxu0 0
        %2303 = vmatprep.subr.bf16.mxu0 0
        %2304 = vmatpush1.bf16.msra.mxu0 0
        %2305 = vmatprep.subr.bf16.mxu0 0
        %2306 = vmatpush1.bf16.msra.mxu0 0
        %2307 = vmatprep.subr.bf16.mxu0 0
        %2308 = vmatpush1.bf16.msra.mxu0 0
        %2309 = vmatprep.subr.bf16.mxu0 0
        %2310 = vmatpush1.bf16.msra.mxu0 %v2291
        %2311 = vmatprep.subr.bf16.mxu0 0
        %2312 = vmatpush1.bf16.msra.mxu0 %v2290
        %2313 = vmatprep.subr.bf16.mxu0 0
        %2314 = vmatpush2.bf16.msra.mxu0 0
        %2315 = vmatprep.subr.bf16.mxu0 0
        %2316 = vmatpush2.bf16.msra.mxu0 0
        %2317 = vmatprep.subr.bf16.mxu0 0
        %2318 = vmatpush2.bf16.msra.mxu0 0
        %2319 = vmatprep.subr.bf16.mxu0 0
        %2320 = vmatpush2.bf16.msra.mxu0 0
        %2321 = vmatprep.subr.bf16.mxu0 0
        %2322 = vmatpush2.bf16.msra.mxu0 0
        %2323 = vmatprep.subr.bf16.mxu0 0
        %2324 = vmatpush2.bf16.msra.mxu0 0
        %2325 = vmatprep.subr.bf16.mxu0 0
        %2326 = vmatpush2.bf16.msra.mxu0 0
        %2327 = vmatprep.subr.bf16.mxu0 0
        %2328 = vmatpush2.bf16.msra.mxu0 0
        %2329 = vmatprep.mubr.bf16.mxu0 0
        %2330 = vmatmul.mubr.bf16.gmra.mxu0 %v2295
        %v2331 = vpop.f32.mrf.mxu0
        %v2332 = vadd.f32 0.0, %v2331
        %v2333 = vpop.f32.mrf.mxu0
        %v2334 = vpop.f32.mrf.mxu0
        %v2335 = vpop.f32.mrf.mxu0
        %2336 = vdwg.mxu0
        %v2341 = vunpack.c.l.b16 %v1966
        %v2342 = vunpack.c.l.b16 %v1967
        %v2343 = vunpack.c.l.b16 %v1968
        %v2344 = vunpack.c.l.b16 %v1969
        %v2345 = vpack.c.b16 %v2342, %v2341
        %v2346 = vpack.c.b16 %v2344, %v2343
        %v2350 = vsel %vm1086, %v1965, 0
        %2352 = vmatprep.subr.bf16.mxu0 0
        %2353 = vmatpush1.bf16.msra.mxu0 0
        %2354 = vmatprep.subr.bf16.mxu0 0
        %2355 = vmatpush1.bf16.msra.mxu0 0
        %2356 = vmatprep.subr.bf16.mxu0 0
        %2357 = vmatpush1.bf16.msra.mxu0 0
        %2358 = vmatprep.subr.bf16.mxu0 0
        %2359 = vmatpush1.bf16.msra.mxu0 0
        %2360 = vmatprep.subr.bf16.mxu0 0
        %2361 = vmatpush1.bf16.msra.mxu0 0
        %2362 = vmatprep.subr.bf16.mxu0 0
        %2363 = vmatpush1.bf16.msra.mxu0 0
        %2364 = vmatprep.subr.bf16.mxu0 0
        %2365 = vmatpush1.bf16.msra.mxu0 %v2346
        %2366 = vmatprep.subr.bf16.mxu0 0
        %2367 = vmatpush1.bf16.msra.mxu0 %v2345
        %2368 = vmatprep.subr.bf16.mxu0 0
        %2369 = vmatpush2.bf16.msra.mxu0 0
        %2370 = vmatprep.subr.bf16.mxu0 0
        %2371 = vmatpush2.bf16.msra.mxu0 0
        %2372 = vmatprep.subr.bf16.mxu0 0
        %2373 = vmatpush2.bf16.msra.mxu0 0
        %2374 = vmatprep.subr.bf16.mxu0 0
        %2375 = vmatpush2.bf16.msra.mxu0 0
        %2376 = vmatprep.subr.bf16.mxu0 0
        %2377 = vmatpush2.bf16.msra.mxu0 0
        %2378 = vmatprep.subr.bf16.mxu0 0
        %2379 = vmatpush2.bf16.msra.mxu0 0
        %2380 = vmatprep.subr.bf16.mxu0 0
        %2381 = vmatpush2.bf16.msra.mxu0 0
        %2382 = vmatprep.subr.bf16.mxu0 0
        %2383 = vmatpush2.bf16.msra.mxu0 0
        %2384 = vmatprep.mubr.bf16.mxu0 0
        %2385 = vmatmul.mubr.bf16.gmra.mxu0 %v2350
        %v2386 = vpop.f32.mrf.mxu0
        %v2387 = vadd.f32 %v2332, %v2386
        %v2388 = vpop.f32.mrf.mxu0
        %v2389 = vpop.f32.mrf.mxu0
        %v2390 = vpop.f32.mrf.mxu0
        %2391 = vdwg.mxu0
        %v2392 = vld [vmem:[#allocation21] sm:$0xf]
        %v2393 = vld [vmem:[#allocation21 + $0x4] sm:$0xf]
        %v2394 = vld [vmem:[#allocation21 + $0x8] sm:$0xf]
        %v2395 = vld [vmem:[#allocation21 + $0xc] sm:$0xf]
        %v2396 = vld [vmem:[#allocation22] sm:$0x1]
        %v2398 = vlaneseq
        %v2399 = vshrl.u32 %v2398, 7
        %v2400 = vsub.s32 0, %v2399
        %v2401 = vrot.slane %v2396, %v2400
        %v2407 = vunpack.c.l.b16 %v2392
        %v2408 = vunpack.c.l.b16 %v2393
        %v2409 = vunpack.c.l.b16 %v2394
        %v2410 = vunpack.c.l.b16 %v2395
        %v2411 = vpack.c.b16 %v2408, %v2407
        %v2412 = vpack.c.b16 %v2410, %v2409
        %2415 = vmatprep.subr.bf16.mxu0 0
        %2416 = vmatpush1.bf16.msra.mxu0 0
        %2417 = vmatprep.subr.bf16.mxu0 0
        %2418 = vmatpush1.bf16.msra.mxu0 0
        %2419 = vmatprep.subr.bf16.mxu0 0
        %2420 = vmatpush1.bf16.msra.mxu0 0
        %2421 = vmatprep.subr.bf16.mxu0 0
        %2422 = vmatpush1.bf16.msra.mxu0 0
        %2423 = vmatprep.subr.bf16.mxu0 0
        %2424 = vmatpush1.bf16.msra.mxu0 0
        %2425 = vmatprep.subr.bf16.mxu0 0
        %2426 = vmatpush1.bf16.msra.mxu0 0
        %2427 = vmatprep.subr.bf16.mxu0 0
        %2428 = vmatpush1.bf16.msra.mxu0 %v2412
        %2429 = vmatprep.subr.bf16.mxu0 0
        %2430 = vmatpush1.bf16.msra.mxu0 %v2411
        %2431 = vmatprep.subr.bf16.mxu0 0
        %2432 = vmatpush2.bf16.msra.mxu0 0
        %2433 = vmatprep.subr.bf16.mxu0 0
        %2434 = vmatpush2.bf16.msra.mxu0 0
        %2435 = vmatprep.subr.bf16.mxu0 0
        %2436 = vmatpush2.bf16.msra.mxu0 0
        %2437 = vmatprep.subr.bf16.mxu0 0
        %2438 = vmatpush2.bf16.msra.mxu0 0
        %2439 = vmatprep.subr.bf16.mxu0 0
        %2440 = vmatpush2.bf16.msra.mxu0 0
        %2441 = vmatprep.subr.bf16.mxu0 0
        %2442 = vmatpush2.bf16.msra.mxu0 0
        %2443 = vmatprep.subr.bf16.mxu0 0
        %2444 = vmatpush2.bf16.msra.mxu0 0
        %2445 = vmatprep.subr.bf16.mxu0 0
        %2446 = vmatpush2.bf16.msra.mxu0 0
        %2447 = vmatprep.mubr.bf16.mxu0 0
        %2448 = vmatmul.mubr.bf16.gmra.mxu0 %v1796
        %v2449 = vpop.f32.mrf.mxu0
        %v2450 = vadd.f32 %v2401, %v2449
        %v2451 = vpop.f32.mrf.mxu0
        %v2452 = vpop.f32.mrf.mxu0
        %v2453 = vpop.f32.mrf.mxu0
        %2454 = vdwg.mxu0
        %v2455 = vmax.f32 %v2450, 0.0
        %v2456 = vpack.c.bf16 %v2455, %v2455
        %s2457 = scalar_lea.vmem [#allocation28], 32
        %v2458 = vld [vmem:[%s2457] sm:$0xf]
        %v2459 = vld [vmem:[%s2457 + $0x4] sm:$0xf]
        %v2460 = vld [vmem:[%s2457 + $0x8] sm:$0xf]
        %v2461 = vld [vmem:[%s2457 + $0xc] sm:$0xf]
        %v2466 = vunpack.c.l.b16 %v2458
        %v2467 = vunpack.c.l.b16 %v2459
        %v2468 = vunpack.c.l.b16 %v2460
        %v2469 = vunpack.c.l.b16 %v2461
        %v2470 = vpack.c.b16 %v2467, %v2466
        %v2471 = vpack.c.b16 %v2469, %v2468
        %v2475 = vsel %vm1086, %v2456, 0
        %2477 = vmatprep.subr.bf16.mxu0 0
        %2478 = vmatpush1.bf16.msra.mxu0 0
        %2479 = vmatprep.subr.bf16.mxu0 0
        %2480 = vmatpush1.bf16.msra.mxu0 0
        %2481 = vmatprep.subr.bf16.mxu0 0
        %2482 = vmatpush1.bf16.msra.mxu0 0
        %2483 = vmatprep.subr.bf16.mxu0 0
        %2484 = vmatpush1.bf16.msra.mxu0 0
        %2485 = vmatprep.subr.bf16.mxu0 0
        %2486 = vmatpush1.bf16.msra.mxu0 0
        %2487 = vmatprep.subr.bf16.mxu0 0
        %2488 = vmatpush1.bf16.msra.mxu0 0
        %2489 = vmatprep.subr.bf16.mxu0 0
        %2490 = vmatpush1.bf16.msra.mxu0 %v2471
        %2491 = vmatprep.subr.bf16.mxu0 0
        %2492 = vmatpush1.bf16.msra.mxu0 %v2470
        %2493 = vmatprep.subr.bf16.mxu0 0
        %2494 = vmatpush2.bf16.msra.mxu0 0
        %2495 = vmatprep.subr.bf16.mxu0 0
        %2496 = vmatpush2.bf16.msra.mxu0 0
        %2497 = vmatprep.subr.bf16.mxu0 0
        %2498 = vmatpush2.bf16.msra.mxu0 0
        %2499 = vmatprep.subr.bf16.mxu0 0
        %2500 = vmatpush2.bf16.msra.mxu0 0
        %2501 = vmatprep.subr.bf16.mxu0 0
        %2502 = vmatpush2.bf16.msra.mxu0 0
        %2503 = vmatprep.subr.bf16.mxu0 0
        %2504 = vmatpush2.bf16.msra.mxu0 0
        %2505 = vmatprep.subr.bf16.mxu0 0
        %2506 = vmatpush2.bf16.msra.mxu0 0
        %2507 = vmatprep.subr.bf16.mxu0 0
        %2508 = vmatpush2.bf16.msra.mxu0 0
        %2509 = vmatprep.mubr.bf16.mxu0 0
        %2510 = vmatmul.mubr.bf16.gmra.mxu0 %v2475
        %v2511 = vpop.f32.mrf.mxu0
        %v2512 = vadd.f32 0.0, %v2511
        %v2513 = vpop.f32.mrf.mxu0
        %v2514 = vpop.f32.mrf.mxu0
        %v2515 = vpop.f32.mrf.mxu0
        %2516 = vdwg.mxu0
        %v2517 = vadd.f32 %v2387, %v2512
        %v2518 = vld [vmem:[%s17] sm:$0x1]
        %v2520 = vlaneseq
        %v2521 = vshrl.u32 %v2520, 7
        %v2522 = vsub.s32 0, %v2521
        %v2523 = vrot.slane %v2518, %v2522
        %v2525 = vadd.f32 %v2517, %v2523
        %v2526 = vmax.f32 %v2525, 0.0
        %v2527 = vsel %vm1086, %v1769, 0.0
        %v2528 = vrot.slane %v2527, 4
        %v2529 = vadd.f32 %v2527, %v2528
        %v2530 = vrot.slane %v2529, 2
        %v2531 = vadd.f32 %v2529, %v2530
        %v2532 = vrot.slane %v2531, 1
        %v2533 = vadd.f32 %v2531, %v2532
        %v2534 = vrcp.pop 8.0
        %v2535 = vmul.f32 %v2533, %v2534
        %v2536 = vld [vmem:[%s18] sm:$0xff]
        %v2537 = vld [vmem:[%s18 + $0x8] sm:$0xff]
        %v2538 = vld [vmem:[%s18 + $0x10] sm:$0xff]
        %v2539 = vld [vmem:[%s18 + $0x18] sm:$0xff]
        %v2540 = vld [vmem:[%s19] sm:$0x1]
        %v2542 = vsel %vm1086, %v2535, 0
        %2544 = vmatprep.subr.mxu0 0.0
        %2545 = vmatpush1.msra.mxu0 0.0
        %2546 = vmatprep.subr.mxu0 0.0
        %2547 = vmatpush1.msra.mxu0 0.0
        %2548 = vmatprep.subr.mxu0 0.0
        %2549 = vmatpush1.msra.mxu0 0.0
        %2550 = vmatprep.subr.mxu0 0.0
        %2551 = vmatpush1.msra.mxu0 0.0
        %2552 = vmatprep.subr.mxu0 0.0
        %2553 = vmatpush1.msra.mxu0 0.0
        %2554 = vmatprep.subr.mxu0 0.0
        %2555 = vmatpush1.msra.mxu0 0.0
        %2556 = vmatprep.subr.mxu0 0.0
        %2557 = vmatpush1.msra.mxu0 0.0
        %2558 = vmatprep.subr.mxu0 0.0
        %2559 = vmatpush1.msra.mxu0 0.0
        %2560 = vmatprep.subr.mxu0 0.0
        %2561 = vmatpush1.msra.mxu0 0.0
        %2562 = vmatprep.subr.mxu0 0.0
        %2563 = vmatpush1.msra.mxu0 0.0
        %2564 = vmatprep.subr.mxu0 0.0
        %2565 = vmatpush1.msra.mxu0 0.0
        %2566 = vmatprep.subr.mxu0 0.0
        %2567 = vmatpush1.msra.mxu0 0.0
        %2568 = vmatprep.subr.mxu0 0.0
        %2569 = vmatpush1.msra.mxu0 %v2539
        %2570 = vmatprep.subr.mxu0 0.0
        %2571 = vmatpush1.msra.mxu0 %v2538
        %2572 = vmatprep.subr.mxu0 0.0
        %2573 = vmatpush1.msra.mxu0 %v2537
        %2574 = vmatprep.subr.mxu0 0.0
        %2575 = vmatpush1.msra.mxu0 %v2536
        %2576 = vmatprep.subr.mxu0 0.0
        %2577 = vmatpush2.msra.mxu0 0.0
        %2578 = vmatprep.subr.mxu0 0.0
        %2579 = vmatpush2.msra.mxu0 0.0
        %2580 = vmatprep.subr.mxu0 0.0
        %2581 = vmatpush2.msra.mxu0 0.0
        %2582 = vmatprep.subr.mxu0 0.0
        %2583 = vmatpush2.msra.mxu0 0.0
        %2584 = vmatprep.subr.mxu0 0.0
        %2585 = vmatpush2.msra.mxu0 0.0
        %2586 = vmatprep.subr.mxu0 0.0
        %2587 = vmatpush2.msra.mxu0 0.0
        %2588 = vmatprep.subr.mxu0 0.0
        %2589 = vmatpush2.msra.mxu0 0.0
        %2590 = vmatprep.subr.mxu0 0.0
        %2591 = vmatpush2.msra.mxu0 0.0
        %2592 = vmatprep.subr.mxu0 0.0
        %2593 = vmatpush2.msra.mxu0 0.0
        %2594 = vmatprep.subr.mxu0 0.0
        %2595 = vmatpush2.msra.mxu0 0.0
        %2596 = vmatprep.subr.mxu0 0.0
        %2597 = vmatpush2.msra.mxu0 0.0
        %2598 = vmatprep.subr.mxu0 0.0
        %2599 = vmatpush2.msra.mxu0 0.0
        %2600 = vmatprep.subr.mxu0 0.0
        %2601 = vmatpush2.msra.mxu0 0.0
        %2602 = vmatprep.subr.mxu0 0.0
        %2603 = vmatpush2.msra.mxu0 0.0
        %2604 = vmatprep.subr.mxu0 0.0
        %2605 = vmatpush2.msra.mxu0 0.0
        %2606 = vmatprep.subr.mxu0 0.0
        %2607 = vmatpush2.msra.mxu0 0.0
        %2608 = vmatprep.mubr.f32.mxu0 0.0
        %2609 = vmatmul.mubr.f32.gmra.mxu0 %v2542
        %v2610 = vpop.f32.mrf.mxu0
        %v2611 = vadd.f32 %v2540, %v2610
        %v2612 = vpop.f32.mrf.mxu0
        %2613 = vdwg.mxu0
        %v2614 = vmax.f32 %v2611, 0.0
        %v2615 = vld [vmem:[%s20] sm:$0xff]
        %v2616 = vld [vmem:[%s20 + $0x8] sm:$0xff]
        %v2617 = vld [vmem:[#allocation3] sm:$0x1]
        %v2619 = vsel %vm1766, %v2614, 0
        %2621 = vmatprep.subr.mxu0 0.0
        %2622 = vmatpush1.msra.mxu0 0.0
        %2623 = vmatprep.subr.mxu0 0.0
        %2624 = vmatpush1.msra.mxu0 0.0
        %2625 = vmatprep.subr.mxu0 0.0
        %2626 = vmatpush1.msra.mxu0 0.0
        %2627 = vmatprep.subr.mxu0 0.0
        %2628 = vmatpush1.msra.mxu0 0.0
        %2629 = vmatprep.subr.mxu0 0.0
        %2630 = vmatpush1.msra.mxu0 0.0
        %2631 = vmatprep.subr.mxu0 0.0
        %2632 = vmatpush1.msra.mxu0 0.0
        %2633 = vmatprep.subr.mxu0 0.0
        %2634 = vmatpush1.msra.mxu0 0.0
        %2635 = vmatprep.subr.mxu0 0.0
        %2636 = vmatpush1.msra.mxu0 0.0
        %2637 = vmatprep.subr.mxu0 0.0
        %2638 = vmatpush1.msra.mxu0 0.0
        %2639 = vmatprep.subr.mxu0 0.0
        %2640 = vmatpush1.msra.mxu0 0.0
        %2641 = vmatprep.subr.mxu0 0.0
        %2642 = vmatpush1.msra.mxu0 0.0
        %2643 = vmatprep.subr.mxu0 0.0
        %2644 = vmatpush1.msra.mxu0 0.0
        %2645 = vmatprep.subr.mxu0 0.0
        %2646 = vmatpush1.msra.mxu0 0.0
        %2647 = vmatprep.subr.mxu0 0.0
        %2648 = vmatpush1.msra.mxu0 0.0
        %2649 = vmatprep.subr.mxu0 0.0
        %2650 = vmatpush1.msra.mxu0 %v2616
        %2651 = vmatprep.subr.mxu0 0.0
        %2652 = vmatpush1.msra.mxu0 %v2615
        %2653 = vmatprep.subr.mxu0 0.0
        %2654 = vmatpush2.msra.mxu0 0.0
        %2655 = vmatprep.subr.mxu0 0.0
        %2656 = vmatpush2.msra.mxu0 0.0
        %2657 = vmatprep.subr.mxu0 0.0
        %2658 = vmatpush2.msra.mxu0 0.0
        %2659 = vmatprep.subr.mxu0 0.0
        %2660 = vmatpush2.msra.mxu0 0.0
        %2661 = vmatprep.subr.mxu0 0.0
        %2662 = vmatpush2.msra.mxu0 0.0
        %2663 = vmatprep.subr.mxu0 0.0
        %2664 = vmatpush2.msra.mxu0 0.0
        %2665 = vmatprep.subr.mxu0 0.0
        %2666 = vmatpush2.msra.mxu0 0.0
        %2667 = vmatprep.subr.mxu0 0.0
        %2668 = vmatpush2.msra.mxu0 0.0
        %2669 = vmatprep.subr.mxu0 0.0
        %2670 = vmatpush2.msra.mxu0 0.0
        %2671 = vmatprep.subr.mxu0 0.0
        %2672 = vmatpush2.msra.mxu0 0.0
        %2673 = vmatprep.subr.mxu0 0.0
        %2674 = vmatpush2.msra.mxu0 0.0
        %2675 = vmatprep.subr.mxu0 0.0
        %2676 = vmatpush2.msra.mxu0 0.0
        %2677 = vmatprep.subr.mxu0 0.0
        %2678 = vmatpush2.msra.mxu0 0.0
        %2679 = vmatprep.subr.mxu0 0.0
        %2680 = vmatpush2.msra.mxu0 0.0
        %2681 = vmatprep.subr.mxu0 0.0
        %2682 = vmatpush2.msra.mxu0 0.0
        %2683 = vmatprep.subr.mxu0 0.0
        %2684 = vmatpush2.msra.mxu0 0.0
        %2685 = vmatprep.mubr.f32.mxu0 0.0
        %2686 = vmatmul.mubr.f32.gmra.mxu0 %v2619
        %v2687 = vpop.f32.mrf.mxu0
        %v2688 = vadd.f32 %v2617, %v2687
        %v2689 = vpop.f32.mrf.mxu0
        %2690 = vdwg.mxu0
        %v2691 = vxor.u32 %v2688, 2147483648
        %v2692 = vmul.f32 %v2691, 1.442695
        %v2693 = vpow.pop %v2692
        %v2694 = vadd.f32 %v2693, 1.0
        %v2695 = vrcp.pop %v2694
        %v2696 = vmul.f32 1.0, %v2695
        %v2697 = vsub.f32 %v2526, %v1769
        %s2699 = vtos %v2696
        %v2700 = vstv %s2699
        %v2702 = vmul.f32 %v2700, %v2697
        %v2703 = vadd.f32 %v1769, %v2702
        %s2704 = scalar_lea.vmem %s919, 1 [#allocation10]
        %v2705 = vld [vmem:[%s2704] sm:$0x1]
        %v2706 = vmul.f32 %v2705, -1e+09
        %v2708 = vlaneseq
        %v2709 = vshrl.u32 %v2708, 7
        %v2710 = vsub.s32 0, %v2709
        %v2711 = vrot.slane %v2706, %v2710
        %v2713 = vrot.slane %v1274, 4
        %2714 = vrot.lane.b32.xlu0 %v1307, 120
        %v2715 = vpop.permute.xlu0 %2714
        %v2717 = vsel %vm1317, %v2713, 0
        %v2720 = vsel %vm1321, %v2715, 0
        %2722 = vmatprep.subr.bf16.mxu0 0
        %2723 = vmatpush1.bf16.msra.mxu0 0
        %2724 = vmatprep.subr.bf16.mxu0 0
        %2725 = vmatpush1.bf16.msra.mxu0 0
        %2726 = vmatprep.subr.bf16.mxu0 0
        %2727 = vmatpush1.bf16.msra.mxu0 0
        %2728 = vmatprep.subr.bf16.mxu0 0
        %2729 = vmatpush1.bf16.msra.mxu0 0
        %2730 = vmatprep.subr.bf16.mxu0 0
        %2731 = vmatpush1.bf16.msra.mxu0 0
        %2732 = vmatprep.subr.bf16.mxu0 0
        %2733 = vmatpush1.bf16.msra.mxu0 0
        %2734 = vmatprep.subr.bf16.mxu0 0
        %2735 = vmatpush1.bf16.msra.mxu0 0
        %2736 = vmatprep.subr.bf16.mxu0 0
        %2737 = vmatpush1.bf16.msra.mxu0 %v2720
        %2738 = vmatprep.subr.bf16.mxu0 0
        %2739 = vmatpush2.bf16.msra.mxu0 0
        %2740 = vmatprep.subr.bf16.mxu0 0
        %2741 = vmatpush2.bf16.msra.mxu0 0
        %2742 = vmatprep.subr.bf16.mxu0 0
        %2743 = vmatpush2.bf16.msra.mxu0 0
        %2744 = vmatprep.subr.bf16.mxu0 0
        %2745 = vmatpush2.bf16.msra.mxu0 0
        %2746 = vmatprep.subr.bf16.mxu0 0
        %2747 = vmatpush2.bf16.msra.mxu0 0
        %2748 = vmatprep.subr.bf16.mxu0 0
        %2749 = vmatpush2.bf16.msra.mxu0 0
        %2750 = vmatprep.subr.bf16.mxu0 0
        %2751 = vmatpush2.bf16.msra.mxu0 0
        %2752 = vmatprep.subr.bf16.mxu0 0
        %2753 = vmatpush2.bf16.msra.mxu0 0
        %2754 = vmatprep.mubr.bf16.mxu0 0
        %2755 = vmatmul.mubr.bf16.gmra.mxu0 %v2717
        %v2756 = vpop.f32.mrf.mxu0
        %v2757 = vadd.f32 %v2711, %v2756
        %v2758 = vpop.f32.mrf.mxu0
        %v2759 = vpop.f32.mrf.mxu0
        %v2760 = vpop.f32.mrf.mxu0
        %2761 = vdwg.mxu0
        %v2762 = vsel %vm1317, %v2757, -inf
        %2763 = vmax.xlane.f32.xlu0 %v2762
        %v2764 = vpop.xlane.xlu0 %2763
        %v2765 = vsub.f32 %v2757, %v2764
        %v2766 = vmul.f32 %v2765, 1.442695
        %v2767 = vpow.pop %v2766
        %v2768 = vsel %vm1317, %v2767, 0.0
        %2769 = vadd.xlane.f32.xlu0 %v2768
        %v2770 = vpop.xlane.xlu0 %2769
        %v2771 = vpack.c.bf16 %v2767, %v2767
        %v2772 = vrot.slane %v1273, 4
        %v2774 = vsel %vm1317, %v2771, 0
        %v2777 = vsel %vm1321, %v2772, 0
        %2779 = vmatprep.subr.bf16.mxu0 0
        %2780 = vmatpush1.bf16.msra.mxu0 0
        %2781 = vmatprep.subr.bf16.mxu0 0
        %2782 = vmatpush1.bf16.msra.mxu0 0
        %2783 = vmatprep.subr.bf16.mxu0 0
        %2784 = vmatpush1.bf16.msra.mxu0 0
        %2785 = vmatprep.subr.bf16.mxu0 0
        %2786 = vmatpush1.bf16.msra.mxu0 0
        %2787 = vmatprep.subr.bf16.mxu0 0
        %2788 = vmatpush1.bf16.msra.mxu0 0
        %2789 = vmatprep.subr.bf16.mxu0 0
        %2790 = vmatpush1.bf16.msra.mxu0 0
        %2791 = vmatprep.subr.bf16.mxu0 0
        %2792 = vmatpush1.bf16.msra.mxu0 0
        %2793 = vmatprep.subr.bf16.mxu0 0
        %2794 = vmatpush1.bf16.msra.mxu0 %v2777
        %2795 = vmatprep.subr.bf16.mxu0 0
        %2796 = vmatpush2.bf16.msra.mxu0 0
        %2797 = vmatprep.subr.bf16.mxu0 0
        %2798 = vmatpush2.bf16.msra.mxu0 0
        %2799 = vmatprep.subr.bf16.mxu0 0
        %2800 = vmatpush2.bf16.msra.mxu0 0
        %2801 = vmatprep.subr.bf16.mxu0 0
        %2802 = vmatpush2.bf16.msra.mxu0 0
        %2803 = vmatprep.subr.bf16.mxu0 0
        %2804 = vmatpush2.bf16.msra.mxu0 0
        %2805 = vmatprep.subr.bf16.mxu0 0
        %2806 = vmatpush2.bf16.msra.mxu0 0
        %2807 = vmatprep.subr.bf16.mxu0 0
        %2808 = vmatpush2.bf16.msra.mxu0 0
        %2809 = vmatprep.subr.bf16.mxu0 0
        %2810 = vmatpush2.bf16.msra.mxu0 0
        %2811 = vmatprep.mubr.bf16.mxu0 0
        %2812 = vmatmul.mubr.bf16.gmra.mxu0 %v2774
        %v2813 = vpop.f32.mrf.mxu0
        %v2814 = vadd.f32 0.0, %v2813
        %v2815 = vpop.f32.mrf.mxu0
        %v2816 = vpop.f32.mrf.mxu0
        %v2817 = vpop.f32.mrf.mxu0
        %2818 = vdwg.mxu0
        %v2819 = vrcp.pop %v2770
        %v2820 = vmul.f32 %v2814, %v2819
        %2821 = vrot.lane.b32.xlu0 %v2713, 120
        %v2822 = vpop.permute.xlu0 %2821
        %2823 = vrot.lane.b32.xlu0 %v1427, 120
        %v2824 = vpop.permute.xlu0 %2823
        %v2826 = vsel %vm1317, %v2822, 0
        %v2829 = vsel %vm1321, %v2824, 0
        %2831 = vmatprep.subr.bf16.mxu0 0
        %2832 = vmatpush1.bf16.msra.mxu0 0
        %2833 = vmatprep.subr.bf16.mxu0 0
        %2834 = vmatpush1.bf16.msra.mxu0 0
        %2835 = vmatprep.subr.bf16.mxu0 0
        %2836 = vmatpush1.bf16.msra.mxu0 0
        %2837 = vmatprep.subr.bf16.mxu0 0
        %2838 = vmatpush1.bf16.msra.mxu0 0
        %2839 = vmatprep.subr.bf16.mxu0 0
        %2840 = vmatpush1.bf16.msra.mxu0 0
        %2841 = vmatprep.subr.bf16.mxu0 0
        %2842 = vmatpush1.bf16.msra.mxu0 0
        %2843 = vmatprep.subr.bf16.mxu0 0
        %2844 = vmatpush1.bf16.msra.mxu0 0
        %2845 = vmatprep.subr.bf16.mxu0 0
        %2846 = vmatpush1.bf16.msra.mxu0 %v2829
        %2847 = vmatprep.subr.bf16.mxu0 0
        %2848 = vmatpush2.bf16.msra.mxu0 0
        %2849 = vmatprep.subr.bf16.mxu0 0
        %2850 = vmatpush2.bf16.msra.mxu0 0
        %2851 = vmatprep.subr.bf16.mxu0 0
        %2852 = vmatpush2.bf16.msra.mxu0 0
        %2853 = vmatprep.subr.bf16.mxu0 0
        %2854 = vmatpush2.bf16.msra.mxu0 0
        %2855 = vmatprep.subr.bf16.mxu0 0
        %2856 = vmatpush2.bf16.msra.mxu0 0
        %2857 = vmatprep.subr.bf16.mxu0 0
        %2858 = vmatpush2.bf16.msra.mxu0 0
        %2859 = vmatprep.subr.bf16.mxu0 0
        %2860 = vmatpush2.bf16.msra.mxu0 0
        %2861 = vmatprep.subr.bf16.mxu0 0
        %2862 = vmatpush2.bf16.msra.mxu0 0
        %2863 = vmatprep.mubr.bf16.mxu0 0
        %2864 = vmatmul.mubr.bf16.gmra.mxu0 %v2826
        %v2865 = vpop.f32.mrf.mxu0
        %v2866 = vadd.f32 %v2711, %v2865
        %v2867 = vpop.f32.mrf.mxu0
        %v2868 = vpop.f32.mrf.mxu0
        %v2869 = vpop.f32.mrf.mxu0
        %2870 = vdwg.mxu0
        %v2871 = vsel %vm1317, %v2866, -inf
        %2872 = vmax.xlane.f32.xlu0 %v2871
        %v2873 = vpop.xlane.xlu0 %2872
        %v2874 = vsub.f32 %v2866, %v2873
        %v2875 = vmul.f32 %v2874, 1.442695
        %v2876 = vpow.pop %v2875
        %v2877 = vsel %vm1317, %v2876, 0.0
        %2878 = vadd.xlane.f32.xlu0 %v2877
        %v2879 = vpop.xlane.xlu0 %2878
        %v2880 = vpack.c.bf16 %v2876, %v2876
        %2881 = vrot.lane.b32.xlu0 %v2772, 120
        %v2882 = vpop.permute.xlu0 %2881
        %v2884 = vsel %vm1317, %v2880, 0
        %v2887 = vsel %vm1321, %v2882, 0
        %2889 = vmatprep.subr.bf16.mxu0 0
        %2890 = vmatpush1.bf16.msra.mxu0 0
        %2891 = vmatprep.subr.bf16.mxu0 0
        %2892 = vmatpush1.bf16.msra.mxu0 0
        %2893 = vmatprep.subr.bf16.mxu0 0
        %2894 = vmatpush1.bf16.msra.mxu0 0
        %2895 = vmatprep.subr.bf16.mxu0 0
        %2896 = vmatpush1.bf16.msra.mxu0 0
        %2897 = vmatprep.subr.bf16.mxu0 0
        %2898 = vmatpush1.bf16.msra.mxu0 0
        %2899 = vmatprep.subr.bf16.mxu0 0
        %2900 = vmatpush1.bf16.msra.mxu0 0
        %2901 = vmatprep.subr.bf16.mxu0 0
        %2902 = vmatpush1.bf16.msra.mxu0 0
        %2903 = vmatprep.subr.bf16.mxu0 0
        %2904 = vmatpush1.bf16.msra.mxu0 %v2887
        %2905 = vmatprep.subr.bf16.mxu0 0
        %2906 = vmatpush2.bf16.msra.mxu0 0
        %2907 = vmatprep.subr.bf16.mxu0 0
        %2908 = vmatpush2.bf16.msra.mxu0 0
        %2909 = vmatprep.subr.bf16.mxu0 0
        %2910 = vmatpush2.bf16.msra.mxu0 0
        %2911 = vmatprep.subr.bf16.mxu0 0
        %2912 = vmatpush2.bf16.msra.mxu0 0
        %2913 = vmatprep.subr.bf16.mxu0 0
        %2914 = vmatpush2.bf16.msra.mxu0 0
        %2915 = vmatprep.subr.bf16.mxu0 0
        %2916 = vmatpush2.bf16.msra.mxu0 0
        %2917 = vmatprep.subr.bf16.mxu0 0
        %2918 = vmatpush2.bf16.msra.mxu0 0
        %2919 = vmatprep.subr.bf16.mxu0 0
        %2920 = vmatpush2.bf16.msra.mxu0 0
        %2921 = vmatprep.mubr.bf16.mxu0 0
        %2922 = vmatmul.mubr.bf16.gmra.mxu0 %v2884
        %v2923 = vpop.f32.mrf.mxu0
        %v2924 = vadd.f32 0.0, %v2923
        %v2925 = vpop.f32.mrf.mxu0
        %v2926 = vpop.f32.mrf.mxu0
        %v2927 = vpop.f32.mrf.mxu0
        %2928 = vdwg.mxu0
        %v2929 = vrcp.pop %v2879
        %v2930 = vmul.f32 %v2924, %v2929
        %2931 = vrot.lane.b32.xlu0 %v2713, 112
        %v2932 = vpop.permute.xlu0 %2931
        %2933 = vrot.lane.b32.xlu0 %v1308, 120
        %v2934 = vpop.permute.xlu0 %2933
        %v2936 = vsel %vm1317, %v2932, 0
        %v2939 = vsel %vm1321, %v2934, 0
        %2941 = vmatprep.subr.bf16.mxu0 0
        %2942 = vmatpush1.bf16.msra.mxu0 0
        %2943 = vmatprep.subr.bf16.mxu0 0
        %2944 = vmatpush1.bf16.msra.mxu0 0
        %2945 = vmatprep.subr.bf16.mxu0 0
        %2946 = vmatpush1.bf16.msra.mxu0 0
        %2947 = vmatprep.subr.bf16.mxu0 0
        %2948 = vmatpush1.bf16.msra.mxu0 0
        %2949 = vmatprep.subr.bf16.mxu0 0
        %2950 = vmatpush1.bf16.msra.mxu0 0
        %2951 = vmatprep.subr.bf16.mxu0 0
        %2952 = vmatpush1.bf16.msra.mxu0 0
        %2953 = vmatprep.subr.bf16.mxu0 0
        %2954 = vmatpush1.bf16.msra.mxu0 0
        %2955 = vmatprep.subr.bf16.mxu0 0
        %2956 = vmatpush1.bf16.msra.mxu0 %v2939
        %2957 = vmatprep.subr.bf16.mxu0 0
        %2958 = vmatpush2.bf16.msra.mxu0 0
        %2959 = vmatprep.subr.bf16.mxu0 0
        %2960 = vmatpush2.bf16.msra.mxu0 0
        %2961 = vmatprep.subr.bf16.mxu0 0
        %2962 = vmatpush2.bf16.msra.mxu0 0
        %2963 = vmatprep.subr.bf16.mxu0 0
        %2964 = vmatpush2.bf16.msra.mxu0 0
        %2965 = vmatprep.subr.bf16.mxu0 0
        %2966 = vmatpush2.bf16.msra.mxu0 0
        %2967 = vmatprep.subr.bf16.mxu0 0
        %2968 = vmatpush2.bf16.msra.mxu0 0
        %2969 = vmatprep.subr.bf16.mxu0 0
        %2970 = vmatpush2.bf16.msra.mxu0 0
        %2971 = vmatprep.subr.bf16.mxu0 0
        %2972 = vmatpush2.bf16.msra.mxu0 0
        %2973 = vmatprep.mubr.bf16.mxu0 0
        %2974 = vmatmul.mubr.bf16.gmra.mxu0 %v2936
        %v2975 = vpop.f32.mrf.mxu0
        %v2976 = vadd.f32 %v2711, %v2975
        %v2977 = vpop.f32.mrf.mxu0
        %v2978 = vpop.f32.mrf.mxu0
        %v2979 = vpop.f32.mrf.mxu0
        %2980 = vdwg.mxu0
        %v2981 = vsel %vm1317, %v2976, -inf
        %2982 = vmax.xlane.f32.xlu0 %v2981
        %v2983 = vpop.xlane.xlu0 %2982
        %v2984 = vsub.f32 %v2976, %v2983
        %v2985 = vmul.f32 %v2984, 1.442695
        %v2986 = vpow.pop %v2985
        %v2987 = vsel %vm1317, %v2986, 0.0
        %2988 = vadd.xlane.f32.xlu0 %v2987
        %v2989 = vpop.xlane.xlu0 %2988
        %v2990 = vpack.c.bf16 %v2986, %v2986
        %2991 = vrot.lane.b32.xlu0 %v2772, 112
        %v2992 = vpop.permute.xlu0 %2991
        %v2994 = vsel %vm1317, %v2990, 0
        %v2997 = vsel %vm1321, %v2992, 0
        %2999 = vmatprep.subr.bf16.mxu0 0
        %3000 = vmatpush1.bf16.msra.mxu0 0
        %3001 = vmatprep.subr.bf16.mxu0 0
        %3002 = vmatpush1.bf16.msra.mxu0 0
        %3003 = vmatprep.subr.bf16.mxu0 0
        %3004 = vmatpush1.bf16.msra.mxu0 0
        %3005 = vmatprep.subr.bf16.mxu0 0
        %3006 = vmatpush1.bf16.msra.mxu0 0
        %3007 = vmatprep.subr.bf16.mxu0 0
        %3008 = vmatpush1.bf16.msra.mxu0 0
        %3009 = vmatprep.subr.bf16.mxu0 0
        %3010 = vmatpush1.bf16.msra.mxu0 0
        %3011 = vmatprep.subr.bf16.mxu0 0
        %3012 = vmatpush1.bf16.msra.mxu0 0
        %3013 = vmatprep.subr.bf16.mxu0 0
        %3014 = vmatpush1.bf16.msra.mxu0 %v2997
        %3015 = vmatprep.subr.bf16.mxu0 0
        %3016 = vmatpush2.bf16.msra.mxu0 0
        %3017 = vmatprep.subr.bf16.mxu0 0
        %3018 = vmatpush2.bf16.msra.mxu0 0
        %3019 = vmatprep.subr.bf16.mxu0 0
        %3020 = vmatpush2.bf16.msra.mxu0 0
        %3021 = vmatprep.subr.bf16.mxu0 0
        %3022 = vmatpush2.bf16.msra.mxu0 0
        %3023 = vmatprep.subr.bf16.mxu0 0
        %3024 = vmatpush2.bf16.msra.mxu0 0
        %3025 = vmatprep.subr.bf16.mxu0 0
        %3026 = vmatpush2.bf16.msra.mxu0 0
        %3027 = vmatprep.subr.bf16.mxu0 0
        %3028 = vmatpush2.bf16.msra.mxu0 0
        %3029 = vmatprep.subr.bf16.mxu0 0
        %3030 = vmatpush2.bf16.msra.mxu0 0
        %3031 = vmatprep.mubr.bf16.mxu0 0
        %3032 = vmatmul.mubr.bf16.gmra.mxu0 %v2994
        %v3033 = vpop.f32.mrf.mxu0
        %v3034 = vadd.f32 0.0, %v3033
        %v3035 = vpop.f32.mrf.mxu0
        %v3036 = vpop.f32.mrf.mxu0
        %v3037 = vpop.f32.mrf.mxu0
        %3038 = vdwg.mxu0
        %v3039 = vrcp.pop %v2989
        %v3040 = vmul.f32 %v3034, %v3039
        %3041 = vrot.lane.b32.xlu0 %v2713, 104
        %v3042 = vpop.permute.xlu0 %3041
        %3043 = vrot.lane.b32.xlu0 %v1646, 120
        %v3044 = vpop.permute.xlu0 %3043
        %v3046 = vsel %vm1317, %v3042, 0
        %v3049 = vsel %vm1321, %v3044, 0
        %3051 = vmatprep.subr.bf16.mxu0 0
        %3052 = vmatpush1.bf16.msra.mxu0 0
        %3053 = vmatprep.subr.bf16.mxu0 0
        %3054 = vmatpush1.bf16.msra.mxu0 0
        %3055 = vmatprep.subr.bf16.mxu0 0
        %3056 = vmatpush1.bf16.msra.mxu0 0
        %3057 = vmatprep.subr.bf16.mxu0 0
        %3058 = vmatpush1.bf16.msra.mxu0 0
        %3059 = vmatprep.subr.bf16.mxu0 0
        %3060 = vmatpush1.bf16.msra.mxu0 0
        %3061 = vmatprep.subr.bf16.mxu0 0
        %3062 = vmatpush1.bf16.msra.mxu0 0
        %3063 = vmatprep.subr.bf16.mxu0 0
        %3064 = vmatpush1.bf16.msra.mxu0 0
        %3065 = vmatprep.subr.bf16.mxu0 0
        %3066 = vmatpush1.bf16.msra.mxu0 %v3049
        %3067 = vmatprep.subr.bf16.mxu0 0
        %3068 = vmatpush2.bf16.msra.mxu0 0
        %3069 = vmatprep.subr.bf16.mxu0 0
        %3070 = vmatpush2.bf16.msra.mxu0 0
        %3071 = vmatprep.subr.bf16.mxu0 0
        %3072 = vmatpush2.bf16.msra.mxu0 0
        %3073 = vmatprep.subr.bf16.mxu0 0
        %3074 = vmatpush2.bf16.msra.mxu0 0
        %3075 = vmatprep.subr.bf16.mxu0 0
        %3076 = vmatpush2.bf16.msra.mxu0 0
        %3077 = vmatprep.subr.bf16.mxu0 0
        %3078 = vmatpush2.bf16.msra.mxu0 0
        %3079 = vmatprep.subr.bf16.mxu0 0
        %3080 = vmatpush2.bf16.msra.mxu0 0
        %3081 = vmatprep.subr.bf16.mxu0 0
        %3082 = vmatpush2.bf16.msra.mxu0 0
        %3083 = vmatprep.mubr.bf16.mxu0 0
        %3084 = vmatmul.mubr.bf16.gmra.mxu0 %v3046
        %v3085 = vpop.f32.mrf.mxu0
        %v3086 = vadd.f32 %v2711, %v3085
        %v3087 = vpop.f32.mrf.mxu0
        %v3088 = vpop.f32.mrf.mxu0
        %v3089 = vpop.f32.mrf.mxu0
        %3090 = vdwg.mxu0
        %v3091 = vsel %vm1317, %v3086, -inf
        %3092 = vmax.xlane.f32.xlu0 %v3091
        %v3093 = vpop.xlane.xlu0 %3092
        %v3094 = vsub.f32 %v3086, %v3093
        %v3095 = vmul.f32 %v3094, 1.442695
        %v3096 = vpow.pop %v3095
        %v3097 = vsel %vm1317, %v3096, 0.0
        %3098 = vadd.xlane.f32.xlu0 %v3097
        %v3099 = vpop.xlane.xlu0 %3098
        %v3100 = vpack.c.bf16 %v3096, %v3096
        %3101 = vrot.lane.b32.xlu0 %v2772, 104
        %v3102 = vpop.permute.xlu0 %3101
        %v3104 = vsel %vm1317, %v3100, 0
        %v3107 = vsel %vm1321, %v3102, 0
        %3109 = vmatprep.subr.bf16.mxu0 0
        %3110 = vmatpush1.bf16.msra.mxu0 0
        %3111 = vmatprep.subr.bf16.mxu0 0
        %3112 = vmatpush1.bf16.msra.mxu0 0
        %3113 = vmatprep.subr.bf16.mxu0 0
        %3114 = vmatpush1.bf16.msra.mxu0 0
        %3115 = vmatprep.subr.bf16.mxu0 0
        %3116 = vmatpush1.bf16.msra.mxu0 0
        %3117 = vmatprep.subr.bf16.mxu0 0
        %3118 = vmatpush1.bf16.msra.mxu0 0
        %3119 = vmatprep.subr.bf16.mxu0 0
        %3120 = vmatpush1.bf16.msra.mxu0 0
        %3121 = vmatprep.subr.bf16.mxu0 0
        %3122 = vmatpush1.bf16.msra.mxu0 0
        %3123 = vmatprep.subr.bf16.mxu0 0
        %3124 = vmatpush1.bf16.msra.mxu0 %v3107
        %3125 = vmatprep.subr.bf16.mxu0 0
        %3126 = vmatpush2.bf16.msra.mxu0 0
        %3127 = vmatprep.subr.bf16.mxu0 0
        %3128 = vmatpush2.bf16.msra.mxu0 0
        %3129 = vmatprep.subr.bf16.mxu0 0
        %3130 = vmatpush2.bf16.msra.mxu0 0
        %3131 = vmatprep.subr.bf16.mxu0 0
        %3132 = vmatpush2.bf16.msra.mxu0 0
        %3133 = vmatprep.subr.bf16.mxu0 0
        %3134 = vmatpush2.bf16.msra.mxu0 0
        %3135 = vmatprep.subr.bf16.mxu0 0
        %3136 = vmatpush2.bf16.msra.mxu0 0
        %3137 = vmatprep.subr.bf16.mxu0 0
        %3138 = vmatpush2.bf16.msra.mxu0 0
        %3139 = vmatprep.subr.bf16.mxu0 0
        %3140 = vmatpush2.bf16.msra.mxu0 0
        %3141 = vmatprep.mubr.bf16.mxu0 0
        %3142 = vmatmul.mubr.bf16.gmra.mxu0 %v3104
        %v3143 = vpop.f32.mrf.mxu0
        %v3144 = vadd.f32 0.0, %v3143
        %v3145 = vpop.f32.mrf.mxu0
        %v3146 = vpop.f32.mrf.mxu0
        %v3147 = vpop.f32.mrf.mxu0
        %3148 = vdwg.mxu0
        %v3149 = vrcp.pop %v3099
        %v3150 = vmul.f32 %v3144, %v3149
        %3152 = vrot.lane.b32.xlu0 %v2930, 8
        %v3153 = vpop.permute.xlu0 %3152
        %3156 = vrot.lane.b32.xlu0 %v3040, 16
        %v3157 = vpop.permute.xlu0 %3156
        %3160 = vrot.lane.b32.xlu0 %v3150, 24
        %v3161 = vpop.permute.xlu0 %3160
        %v3163 = vsel %vm1317, %v2820, %v3153
        %v3164 = vsel %vm1766, %v3163, %v3157
        %v3165 = vsel %vm1768, %v3164, %v3161
        %v3166 = vpack.c.bf16 %v3165, %v3165
        %3167 = vst.msk [vmem:[#allocation2 + $0x2] sm:$0xff] %vm1086, %v3165
        %v3168 = vld [vmem:[#allocation2 + $0x1] sm:$0xff]
        %v3169 = vpack.c.bf16 %v3168, %v3168
        %v3170 = vld [vmem:[#allocation24] sm:$0xf]
        %v3171 = vld [vmem:[#allocation24 + $0x4] sm:$0xf]
        %v3172 = vld [vmem:[#allocation24 + $0x8] sm:$0xf]
        %v3173 = vld [vmem:[#allocation24 + $0xc] sm:$0xf]
        %v3174 = vld [vmem:[%s1778] sm:$0xf]
        %v3175 = vld [vmem:[%s1778 + $0x4] sm:$0xf]
        %v3176 = vld [vmem:[%s1778 + $0x8] sm:$0xf]
        %v3177 = vld [vmem:[%s1778 + $0xc] sm:$0xf]
        %v3182 = vunpack.c.l.b16 %v3174
        %v3183 = vunpack.c.l.b16 %v3175
        %v3184 = vunpack.c.l.b16 %v3176
        %v3185 = vunpack.c.l.b16 %v3177
        %v3186 = vpack.c.b16 %v3183, %v3182
        %v3187 = vpack.c.b16 %v3185, %v3184
        %v3191 = vsel %vm1086, %v3166, 0
        %3193 = vmatprep.subr.bf16.mxu0 0
        %3194 = vmatpush1.bf16.msra.mxu0 0
        %3195 = vmatprep.subr.bf16.mxu0 0
        %3196 = vmatpush1.bf16.msra.mxu0 0
        %3197 = vmatprep.subr.bf16.mxu0 0
        %3198 = vmatpush1.bf16.msra.mxu0 0
        %3199 = vmatprep.subr.bf16.mxu0 0
        %3200 = vmatpush1.bf16.msra.mxu0 0
        %3201 = vmatprep.subr.bf16.mxu0 0
        %3202 = vmatpush1.bf16.msra.mxu0 0
        %3203 = vmatprep.subr.bf16.mxu0 0
        %3204 = vmatpush1.bf16.msra.mxu0 0
        %3205 = vmatprep.subr.bf16.mxu0 0
        %3206 = vmatpush1.bf16.msra.mxu0 %v3187
        %3207 = vmatprep.subr.bf16.mxu0 0
        %3208 = vmatpush1.bf16.msra.mxu0 %v3186
        %3209 = vmatprep.subr.bf16.mxu0 0
        %3210 = vmatpush2.bf16.msra.mxu0 0
        %3211 = vmatprep.subr.bf16.mxu0 0
        %3212 = vmatpush2.bf16.msra.mxu0 0
        %3213 = vmatprep.subr.bf16.mxu0 0
        %3214 = vmatpush2.bf16.msra.mxu0 0
        %3215 = vmatprep.subr.bf16.mxu0 0
        %3216 = vmatpush2.bf16.msra.mxu0 0
        %3217 = vmatprep.subr.bf16.mxu0 0
        %3218 = vmatpush2.bf16.msra.mxu0 0
        %3219 = vmatprep.subr.bf16.mxu0 0
        %3220 = vmatpush2.bf16.msra.mxu0 0
        %3221 = vmatprep.subr.bf16.mxu0 0
        %3222 = vmatpush2.bf16.msra.mxu0 0
        %3223 = vmatprep.subr.bf16.mxu0 0
        %3224 = vmatpush2.bf16.msra.mxu0 0
        %3225 = vmatprep.mubr.bf16.mxu0 0
        %3226 = vmatmul.mubr.bf16.gmra.mxu0 %v3191
        %v3227 = vpop.f32.mrf.mxu0
        %v3228 = vadd.f32 0.0, %v3227
        %v3229 = vpop.f32.mrf.mxu0
        %v3230 = vpop.f32.mrf.mxu0
        %v3231 = vpop.f32.mrf.mxu0
        %3232 = vdwg.mxu0
        %v3237 = vunpack.c.l.b16 %v3170
        %v3238 = vunpack.c.l.b16 %v3171
        %v3239 = vunpack.c.l.b16 %v3172
        %v3240 = vunpack.c.l.b16 %v3173
        %v3241 = vpack.c.b16 %v3238, %v3237
        %v3242 = vpack.c.b16 %v3240, %v3239
        %v3246 = vsel %vm1086, %v3169, 0
        %3248 = vmatprep.subr.bf16.mxu0 0
        %3249 = vmatpush1.bf16.msra.mxu0 0
        %3250 = vmatprep.subr.bf16.mxu0 0
        %3251 = vmatpush1.bf16.msra.mxu0 0
        %3252 = vmatprep.subr.bf16.mxu0 0
        %3253 = vmatpush1.bf16.msra.mxu0 0
        %3254 = vmatprep.subr.bf16.mxu0 0
        %3255 = vmatpush1.bf16.msra.mxu0 0
        %3256 = vmatprep.subr.bf16.mxu0 0
        %3257 = vmatpush1.bf16.msra.mxu0 0
        %3258 = vmatprep.subr.bf16.mxu0 0
        %3259 = vmatpush1.bf16.msra.mxu0 0
        %3260 = vmatprep.subr.bf16.mxu0 0
        %3261 = vmatpush1.bf16.msra.mxu0 %v3242
        %3262 = vmatprep.subr.bf16.mxu0 0
        %3263 = vmatpush1.bf16.msra.mxu0 %v3241
        %3264 = vmatprep.subr.bf16.mxu0 0
        %3265 = vmatpush2.bf16.msra.mxu0 0
        %3266 = vmatprep.subr.bf16.mxu0 0
        %3267 = vmatpush2.bf16.msra.mxu0 0
        %3268 = vmatprep.subr.bf16.mxu0 0
        %3269 = vmatpush2.bf16.msra.mxu0 0
        %3270 = vmatprep.subr.bf16.mxu0 0
        %3271 = vmatpush2.bf16.msra.mxu0 0
        %3272 = vmatprep.subr.bf16.mxu0 0
        %3273 = vmatpush2.bf16.msra.mxu0 0
        %3274 = vmatprep.subr.bf16.mxu0 0
        %3275 = vmatpush2.bf16.msra.mxu0 0
        %3276 = vmatprep.subr.bf16.mxu0 0
        %3277 = vmatpush2.bf16.msra.mxu0 0
        %3278 = vmatprep.subr.bf16.mxu0 0
        %3279 = vmatpush2.bf16.msra.mxu0 0
        %3280 = vmatprep.mubr.bf16.mxu0 0
        %3281 = vmatmul.mubr.bf16.gmra.mxu0 %v3246
        %v3282 = vpop.f32.mrf.mxu0
        %v3283 = vadd.f32 %v3228, %v3282
        %v3284 = vpop.f32.mrf.mxu0
        %v3285 = vpop.f32.mrf.mxu0
        %v3286 = vpop.f32.mrf.mxu0
        %3287 = vdwg.mxu0
        %v3288 = vld [vmem:[#allocation2 + $0x3] sm:$0xff]
        %v3289 = vpack.c.bf16 %v3288, %v3288
        %v3290 = vld [vmem:[%s1895] sm:$0xf]
        %v3291 = vld [vmem:[%s1895 + $0x4] sm:$0xf]
        %v3292 = vld [vmem:[%s1895 + $0x8] sm:$0xf]
        %v3293 = vld [vmem:[%s1895 + $0xc] sm:$0xf]
        %v3298 = vunpack.c.l.b16 %v3290
        %v3299 = vunpack.c.l.b16 %v3291
        %v3300 = vunpack.c.l.b16 %v3292
        %v3301 = vunpack.c.l.b16 %v3293
        %v3302 = vpack.c.b16 %v3299, %v3298
        %v3303 = vpack.c.b16 %v3301, %v3300
        %v3307 = vsel %vm1086, %v3289, 0
        %3309 = vmatprep.subr.bf16.mxu0 0
        %3310 = vmatpush1.bf16.msra.mxu0 0
        %3311 = vmatprep.subr.bf16.mxu0 0
        %3312 = vmatpush1.bf16.msra.mxu0 0
        %3313 = vmatprep.subr.bf16.mxu0 0
        %3314 = vmatpush1.bf16.msra.mxu0 0
        %3315 = vmatprep.subr.bf16.mxu0 0
        %3316 = vmatpush1.bf16.msra.mxu0 0
        %3317 = vmatprep.subr.bf16.mxu0 0
        %3318 = vmatpush1.bf16.msra.mxu0 0
        %3319 = vmatprep.subr.bf16.mxu0 0
        %3320 = vmatpush1.bf16.msra.mxu0 0
        %3321 = vmatprep.subr.bf16.mxu0 0
        %3322 = vmatpush1.bf16.msra.mxu0 %v3303
        %3323 = vmatprep.subr.bf16.mxu0 0
        %3324 = vmatpush1.bf16.msra.mxu0 %v3302
        %3325 = vmatprep.subr.bf16.mxu0 0
        %3326 = vmatpush2.bf16.msra.mxu0 0
        %3327 = vmatprep.subr.bf16.mxu0 0
        %3328 = vmatpush2.bf16.msra.mxu0 0
        %3329 = vmatprep.subr.bf16.mxu0 0
        %3330 = vmatpush2.bf16.msra.mxu0 0
        %3331 = vmatprep.subr.bf16.mxu0 0
        %3332 = vmatpush2.bf16.msra.mxu0 0
        %3333 = vmatprep.subr.bf16.mxu0 0
        %3334 = vmatpush2.bf16.msra.mxu0 0
        %3335 = vmatprep.subr.bf16.mxu0 0
        %3336 = vmatpush2.bf16.msra.mxu0 0
        %3337 = vmatprep.subr.bf16.mxu0 0
        %3338 = vmatpush2.bf16.msra.mxu0 0
        %3339 = vmatprep.subr.bf16.mxu0 0
        %3340 = vmatpush2.bf16.msra.mxu0 0
        %3341 = vmatprep.mubr.bf16.mxu0 0
        %3342 = vmatmul.mubr.bf16.gmra.mxu0 %v3307
        %v3343 = vpop.f32.mrf.mxu0
        %v3344 = vadd.f32 0.0, %v3343
        %v3345 = vpop.f32.mrf.mxu0
        %v3346 = vpop.f32.mrf.mxu0
        %v3347 = vpop.f32.mrf.mxu0
        %3348 = vdwg.mxu0
        %v3349 = vadd.f32 %v3283, %v3344
        %v3350 = vld [vmem:[#allocation25] sm:$0x1]
        %v3352 = vlaneseq
        %v3353 = vshrl.u32 %v3352, 7
        %v3354 = vsub.s32 0, %v3353
        %v3355 = vrot.slane %v3350, %v3354
        %v3357 = vadd.f32 %v3349, %v3355
        %v3358 = vmax.f32 %v3357, 0.0
        %v3359 = vpack.c.bf16 %v3358, %v3358
        %v3360 = vld [vmem:[#allocation28] sm:$0xf]
        %v3361 = vld [vmem:[#allocation28 + $0x4] sm:$0xf]
        %v3362 = vld [vmem:[#allocation28 + $0x8] sm:$0xf]
        %v3363 = vld [vmem:[#allocation28 + $0xc] sm:$0xf]
        %v3364 = vld [vmem:[#allocation2] sm:$0xff]
        %v3365 = vpack.c.bf16 %v3364, %v3364
        %v3366 = vld [vmem:[%s14] sm:$0xf]
        %v3367 = vld [vmem:[%s14 + $0x4] sm:$0xf]
        %v3368 = vld [vmem:[%s14 + $0x8] sm:$0xf]
        %v3369 = vld [vmem:[%s14 + $0xc] sm:$0xf]
        %v3370 = vld [vmem:[%s1976] sm:$0xf]
        %v3371 = vld [vmem:[%s1976 + $0x4] sm:$0xf]
        %v3372 = vld [vmem:[%s1976 + $0x8] sm:$0xf]
        %v3373 = vld [vmem:[%s1976 + $0xc] sm:$0xf]
        %v3378 = vunpack.c.l.b16 %v3370
        %v3379 = vunpack.c.l.b16 %v3371
        %v3380 = vunpack.c.l.b16 %v3372
        %v3381 = vunpack.c.l.b16 %v3373
        %v3382 = vpack.c.b16 %v3379, %v3378
        %v3383 = vpack.c.b16 %v3381, %v3380
        %3386 = vmatprep.subr.bf16.mxu0 0
        %3387 = vmatpush1.bf16.msra.mxu0 0
        %3388 = vmatprep.subr.bf16.mxu0 0
        %3389 = vmatpush1.bf16.msra.mxu0 0
        %3390 = vmatprep.subr.bf16.mxu0 0
        %3391 = vmatpush1.bf16.msra.mxu0 0
        %3392 = vmatprep.subr.bf16.mxu0 0
        %3393 = vmatpush1.bf16.msra.mxu0 0
        %3394 = vmatprep.subr.bf16.mxu0 0
        %3395 = vmatpush1.bf16.msra.mxu0 0
        %3396 = vmatprep.subr.bf16.mxu0 0
        %3397 = vmatpush1.bf16.msra.mxu0 0
        %3398 = vmatprep.subr.bf16.mxu0 0
        %3399 = vmatpush1.bf16.msra.mxu0 %v3383
        %3400 = vmatprep.subr.bf16.mxu0 0
        %3401 = vmatpush1.bf16.msra.mxu0 %v3382
        %3402 = vmatprep.subr.bf16.mxu0 0
        %3403 = vmatpush2.bf16.msra.mxu0 0
        %3404 = vmatprep.subr.bf16.mxu0 0
        %3405 = vmatpush2.bf16.msra.mxu0 0
        %3406 = vmatprep.subr.bf16.mxu0 0
        %3407 = vmatpush2.bf16.msra.mxu0 0
        %3408 = vmatprep.subr.bf16.mxu0 0
        %3409 = vmatpush2.bf16.msra.mxu0 0
        %3410 = vmatprep.subr.bf16.mxu0 0
        %3411 = vmatpush2.bf16.msra.mxu0 0
        %3412 = vmatprep.subr.bf16.mxu0 0
        %3413 = vmatpush2.bf16.msra.mxu0 0
        %3414 = vmatprep.subr.bf16.mxu0 0
        %3415 = vmatpush2.bf16.msra.mxu0 0
        %3416 = vmatprep.subr.bf16.mxu0 0
        %3417 = vmatpush2.bf16.msra.mxu0 0
        %3418 = vmatprep.mubr.bf16.mxu0 0
        %3419 = vmatmul.mubr.bf16.gmra.mxu0 %v3246
        %v3420 = vpop.f32.mrf.mxu0
        %v3421 = vadd.f32 0.0, %v3420
        %v3422 = vpop.f32.mrf.mxu0
        %v3423 = vpop.f32.mrf.mxu0
        %v3424 = vpop.f32.mrf.mxu0
        %3425 = vdwg.mxu0
        %v3430 = vunpack.c.l.b16 %v3366
        %v3431 = vunpack.c.l.b16 %v3367
        %v3432 = vunpack.c.l.b16 %v3368
        %v3433 = vunpack.c.l.b16 %v3369
        %v3434 = vpack.c.b16 %v3431, %v3430
        %v3435 = vpack.c.b16 %v3433, %v3432
        %v3439 = vsel %vm1086, %v3365, 0
        %3441 = vmatprep.subr.bf16.mxu0 0
        %3442 = vmatpush1.bf16.msra.mxu0 0
        %3443 = vmatprep.subr.bf16.mxu0 0
        %3444 = vmatpush1.bf16.msra.mxu0 0
        %3445 = vmatprep.subr.bf16.mxu0 0
        %3446 = vmatpush1.bf16.msra.mxu0 0
        %3447 = vmatprep.subr.bf16.mxu0 0
        %3448 = vmatpush1.bf16.msra.mxu0 0
        %3449 = vmatprep.subr.bf16.mxu0 0
        %3450 = vmatpush1.bf16.msra.mxu0 0
        %3451 = vmatprep.subr.bf16.mxu0 0
        %3452 = vmatpush1.bf16.msra.mxu0 0
        %3453 = vmatprep.subr.bf16.mxu0 0
        %3454 = vmatpush1.bf16.msra.mxu0 %v3435
        %3455 = vmatprep.subr.bf16.mxu0 0
        %3456 = vmatpush1.bf16.msra.mxu0 %v3434
        %3457 = vmatprep.subr.bf16.mxu0 0
        %3458 = vmatpush2.bf16.msra.mxu0 0
        %3459 = vmatprep.subr.bf16.mxu0 0
        %3460 = vmatpush2.bf16.msra.mxu0 0
        %3461 = vmatprep.subr.bf16.mxu0 0
        %3462 = vmatpush2.bf16.msra.mxu0 0
        %3463 = vmatprep.subr.bf16.mxu0 0
        %3464 = vmatpush2.bf16.msra.mxu0 0
        %3465 = vmatprep.subr.bf16.mxu0 0
        %3466 = vmatpush2.bf16.msra.mxu0 0
        %3467 = vmatprep.subr.bf16.mxu0 0
        %3468 = vmatpush2.bf16.msra.mxu0 0
        %3469 = vmatprep.subr.bf16.mxu0 0
        %3470 = vmatpush2.bf16.msra.mxu0 0
        %3471 = vmatprep.subr.bf16.mxu0 0
        %3472 = vmatpush2.bf16.msra.mxu0 0
        %3473 = vmatprep.mubr.bf16.mxu0 0
        %3474 = vmatmul.mubr.bf16.gmra.mxu0 %v3439
        %v3475 = vpop.f32.mrf.mxu0
        %v3476 = vadd.f32 %v3421, %v3475
        %v3477 = vpop.f32.mrf.mxu0
        %v3478 = vpop.f32.mrf.mxu0
        %v3479 = vpop.f32.mrf.mxu0
        %3480 = vdwg.mxu0
        %v3481 = vld [vmem:[%s2088] sm:$0xf]
        %v3482 = vld [vmem:[%s2088 + $0x4] sm:$0xf]
        %v3483 = vld [vmem:[%s2088 + $0x8] sm:$0xf]
        %v3484 = vld [vmem:[%s2088 + $0xc] sm:$0xf]
        %v3489 = vunpack.c.l.b16 %v3481
        %v3490 = vunpack.c.l.b16 %v3482
        %v3491 = vunpack.c.l.b16 %v3483
        %v3492 = vunpack.c.l.b16 %v3484
        %v3493 = vpack.c.b16 %v3490, %v3489
        %v3494 = vpack.c.b16 %v3492, %v3491
        %3497 = vmatprep.subr.bf16.mxu0 0
        %3498 = vmatpush1.bf16.msra.mxu0 0
        %3499 = vmatprep.subr.bf16.mxu0 0
        %3500 = vmatpush1.bf16.msra.mxu0 0
        %3501 = vmatprep.subr.bf16.mxu0 0
        %3502 = vmatpush1.bf16.msra.mxu0 0
        %3503 = vmatprep.subr.bf16.mxu0 0
        %3504 = vmatpush1.bf16.msra.mxu0 0
        %3505 = vmatprep.subr.bf16.mxu0 0
        %3506 = vmatpush1.bf16.msra.mxu0 0
        %3507 = vmatprep.subr.bf16.mxu0 0
        %3508 = vmatpush1.bf16.msra.mxu0 0
        %3509 = vmatprep.subr.bf16.mxu0 0
        %3510 = vmatpush1.bf16.msra.mxu0 %v3494
        %3511 = vmatprep.subr.bf16.mxu0 0
        %3512 = vmatpush1.bf16.msra.mxu0 %v3493
        %3513 = vmatprep.subr.bf16.mxu0 0
        %3514 = vmatpush2.bf16.msra.mxu0 0
        %3515 = vmatprep.subr.bf16.mxu0 0
        %3516 = vmatpush2.bf16.msra.mxu0 0
        %3517 = vmatprep.subr.bf16.mxu0 0
        %3518 = vmatpush2.bf16.msra.mxu0 0
        %3519 = vmatprep.subr.bf16.mxu0 0
        %3520 = vmatpush2.bf16.msra.mxu0 0
        %3521 = vmatprep.subr.bf16.mxu0 0
        %3522 = vmatpush2.bf16.msra.mxu0 0
        %3523 = vmatprep.subr.bf16.mxu0 0
        %3524 = vmatpush2.bf16.msra.mxu0 0
        %3525 = vmatprep.subr.bf16.mxu0 0
        %3526 = vmatpush2.bf16.msra.mxu0 0
        %3527 = vmatprep.subr.bf16.mxu0 0
        %3528 = vmatpush2.bf16.msra.mxu0 0
        %3529 = vmatprep.mubr.bf16.mxu0 0
        %3530 = vmatmul.mubr.bf16.gmra.mxu0 %v3191
        %v3531 = vpop.f32.mrf.mxu0
        %v3532 = vadd.f32 0.0, %v3531
        %v3533 = vpop.f32.mrf.mxu0
        %v3534 = vpop.f32.mrf.mxu0
        %v3535 = vpop.f32.mrf.mxu0
        %3536 = vdwg.mxu0
        %v3537 = vadd.f32 %v3476, %v3532
        %v3538 = vld [vmem:[%s2146] sm:$0xf]
        %v3539 = vld [vmem:[%s2146 + $0x4] sm:$0xf]
        %v3540 = vld [vmem:[%s2146 + $0x8] sm:$0xf]
        %v3541 = vld [vmem:[%s2146 + $0xc] sm:$0xf]
        %v3546 = vunpack.c.l.b16 %v3538
        %v3547 = vunpack.c.l.b16 %v3539
        %v3548 = vunpack.c.l.b16 %v3540
        %v3549 = vunpack.c.l.b16 %v3541
        %v3550 = vpack.c.b16 %v3547, %v3546
        %v3551 = vpack.c.b16 %v3549, %v3548
        %3554 = vmatprep.subr.bf16.mxu0 0
        %3555 = vmatpush1.bf16.msra.mxu0 0
        %3556 = vmatprep.subr.bf16.mxu0 0
        %3557 = vmatpush1.bf16.msra.mxu0 0
        %3558 = vmatprep.subr.bf16.mxu0 0
        %3559 = vmatpush1.bf16.msra.mxu0 0
        %3560 = vmatprep.subr.bf16.mxu0 0
        %3561 = vmatpush1.bf16.msra.mxu0 0
        %3562 = vmatprep.subr.bf16.mxu0 0
        %3563 = vmatpush1.bf16.msra.mxu0 0
        %3564 = vmatprep.subr.bf16.mxu0 0
        %3565 = vmatpush1.bf16.msra.mxu0 0
        %3566 = vmatprep.subr.bf16.mxu0 0
        %3567 = vmatpush1.bf16.msra.mxu0 %v3551
        %3568 = vmatprep.subr.bf16.mxu0 0
        %3569 = vmatpush1.bf16.msra.mxu0 %v3550
        %3570 = vmatprep.subr.bf16.mxu0 0
        %3571 = vmatpush2.bf16.msra.mxu0 0
        %3572 = vmatprep.subr.bf16.mxu0 0
        %3573 = vmatpush2.bf16.msra.mxu0 0
        %3574 = vmatprep.subr.bf16.mxu0 0
        %3575 = vmatpush2.bf16.msra.mxu0 0
        %3576 = vmatprep.subr.bf16.mxu0 0
        %3577 = vmatpush2.bf16.msra.mxu0 0
        %3578 = vmatprep.subr.bf16.mxu0 0
        %3579 = vmatpush2.bf16.msra.mxu0 0
        %3580 = vmatprep.subr.bf16.mxu0 0
        %3581 = vmatpush2.bf16.msra.mxu0 0
        %3582 = vmatprep.subr.bf16.mxu0 0
        %3583 = vmatpush2.bf16.msra.mxu0 0
        %3584 = vmatprep.subr.bf16.mxu0 0
        %3585 = vmatpush2.bf16.msra.mxu0 0
        %3586 = vmatprep.mubr.bf16.mxu0 0
        %3587 = vmatmul.mubr.bf16.gmra.mxu0 %v3307
        %v3588 = vpop.f32.mrf.mxu0
        %v3589 = vadd.f32 0.0, %v3588
        %v3590 = vpop.f32.mrf.mxu0
        %v3591 = vpop.f32.mrf.mxu0
        %v3592 = vpop.f32.mrf.mxu0
        %3593 = vdwg.mxu0
        %v3594 = vadd.f32 %v3537, %v3589
        %v3595 = vld [vmem:[#allocation2 + $0x4] sm:$0xff]
        %v3596 = vpack.c.bf16 %v3595, %v3595
        %v3597 = vld [vmem:[%s2206] sm:$0xf]
        %v3598 = vld [vmem:[%s2206 + $0x4] sm:$0xf]
        %v3599 = vld [vmem:[%s2206 + $0x8] sm:$0xf]
        %v3600 = vld [vmem:[%s2206 + $0xc] sm:$0xf]
        %v3605 = vunpack.c.l.b16 %v3597
        %v3606 = vunpack.c.l.b16 %v3598
        %v3607 = vunpack.c.l.b16 %v3599
        %v3608 = vunpack.c.l.b16 %v3600
        %v3609 = vpack.c.b16 %v3606, %v3605
        %v3610 = vpack.c.b16 %v3608, %v3607
        %v3614 = vsel %vm1086, %v3596, 0
        %3616 = vmatprep.subr.bf16.mxu0 0
        %3617 = vmatpush1.bf16.msra.mxu0 0
        %3618 = vmatprep.subr.bf16.mxu0 0
        %3619 = vmatpush1.bf16.msra.mxu0 0
        %3620 = vmatprep.subr.bf16.mxu0 0
        %3621 = vmatpush1.bf16.msra.mxu0 0
        %3622 = vmatprep.subr.bf16.mxu0 0
        %3623 = vmatpush1.bf16.msra.mxu0 0
        %3624 = vmatprep.subr.bf16.mxu0 0
        %3625 = vmatpush1.bf16.msra.mxu0 0
        %3626 = vmatprep.subr.bf16.mxu0 0
        %3627 = vmatpush1.bf16.msra.mxu0 0
        %3628 = vmatprep.subr.bf16.mxu0 0
        %3629 = vmatpush1.bf16.msra.mxu0 %v3610
        %3630 = vmatprep.subr.bf16.mxu0 0
        %3631 = vmatpush1.bf16.msra.mxu0 %v3609
        %3632 = vmatprep.subr.bf16.mxu0 0
        %3633 = vmatpush2.bf16.msra.mxu0 0
        %3634 = vmatprep.subr.bf16.mxu0 0
        %3635 = vmatpush2.bf16.msra.mxu0 0
        %3636 = vmatprep.subr.bf16.mxu0 0
        %3637 = vmatpush2.bf16.msra.mxu0 0
        %3638 = vmatprep.subr.bf16.mxu0 0
        %3639 = vmatpush2.bf16.msra.mxu0 0
        %3640 = vmatprep.subr.bf16.mxu0 0
        %3641 = vmatpush2.bf16.msra.mxu0 0
        %3642 = vmatprep.subr.bf16.mxu0 0
        %3643 = vmatpush2.bf16.msra.mxu0 0
        %3644 = vmatprep.subr.bf16.mxu0 0
        %3645 = vmatpush2.bf16.msra.mxu0 0
        %3646 = vmatprep.subr.bf16.mxu0 0
        %3647 = vmatpush2.bf16.msra.mxu0 0
        %3648 = vmatprep.mubr.bf16.mxu0 0
        %3649 = vmatmul.mubr.bf16.gmra.mxu0 %v3614
        %v3650 = vpop.f32.mrf.mxu0
        %v3651 = vadd.f32 0.0, %v3650
        %v3652 = vpop.f32.mrf.mxu0
        %v3653 = vpop.f32.mrf.mxu0
        %v3654 = vpop.f32.mrf.mxu0
        %3655 = vdwg.mxu0
        %v3656 = vadd.f32 %v3594, %v3651
        %v3657 = vld [vmem:[#allocation27] sm:$0x1]
        %v3659 = vlaneseq
        %v3660 = vshrl.u32 %v3659, 7
        %v3661 = vsub.s32 0, %v3660
        %v3662 = vrot.slane %v3657, %v3661
        %v3664 = vadd.f32 %v3656, %v3662
        %v3665 = vmax.f32 %v3664, 0.0
        %v3666 = vpack.c.bf16 %v3665, %v3665
        %v3667 = vld [vmem:[%s2277] sm:$0xf]
        %v3668 = vld [vmem:[%s2277 + $0x4] sm:$0xf]
        %v3669 = vld [vmem:[%s2277 + $0x8] sm:$0xf]
        %v3670 = vld [vmem:[%s2277 + $0xc] sm:$0xf]
        %v3675 = vunpack.c.l.b16 %v3667
        %v3676 = vunpack.c.l.b16 %v3668
        %v3677 = vunpack.c.l.b16 %v3669
        %v3678 = vunpack.c.l.b16 %v3670
        %v3679 = vpack.c.b16 %v3676, %v3675
        %v3680 = vpack.c.b16 %v3678, %v3677
        %v3684 = vsel %vm1086, %v3666, 0
        %3686 = vmatprep.subr.bf16.mxu0 0
        %3687 = vmatpush1.bf16.msra.mxu0 0
        %3688 = vmatprep.subr.bf16.mxu0 0
        %3689 = vmatpush1.bf16.msra.mxu0 0
        %3690 = vmatprep.subr.bf16.mxu0 0
        %3691 = vmatpush1.bf16.msra.mxu0 0
        %3692 = vmatprep.subr.bf16.mxu0 0
        %3693 = vmatpush1.bf16.msra.mxu0 0
        %3694 = vmatprep.subr.bf16.mxu0 0
        %3695 = vmatpush1.bf16.msra.mxu0 0
        %3696 = vmatprep.subr.bf16.mxu0 0
        %3697 = vmatpush1.bf16.msra.mxu0 0
        %3698 = vmatprep.subr.bf16.mxu0 0
        %3699 = vmatpush1.bf16.msra.mxu0 %v3680
        %3700 = vmatprep.subr.bf16.mxu0 0
        %3701 = vmatpush1.bf16.msra.mxu0 %v3679
        %3702 = vmatprep.subr.bf16.mxu0 0
        %3703 = vmatpush2.bf16.msra.mxu0 0
        %3704 = vmatprep.subr.bf16.mxu0 0
        %3705 = vmatpush2.bf16.msra.mxu0 0
        %3706 = vmatprep.subr.bf16.mxu0 0
        %3707 = vmatpush2.bf16.msra.mxu0 0
        %3708 = vmatprep.subr.bf16.mxu0 0
        %3709 = vmatpush2.bf16.msra.mxu0 0
        %3710 = vmatprep.subr.bf16.mxu0 0
        %3711 = vmatpush2.bf16.msra.mxu0 0
        %3712 = vmatprep.subr.bf16.mxu0 0
        %3713 = vmatpush2.bf16.msra.mxu0 0
        %3714 = vmatprep.subr.bf16.mxu0 0
        %3715 = vmatpush2.bf16.msra.mxu0 0
        %3716 = vmatprep.subr.bf16.mxu0 0
        %3717 = vmatpush2.bf16.msra.mxu0 0
        %3718 = vmatprep.mubr.bf16.mxu0 0
        %3719 = vmatmul.mubr.bf16.gmra.mxu0 %v3684
        %v3720 = vpop.f32.mrf.mxu0
        %v3721 = vadd.f32 0.0, %v3720
        %v3722 = vpop.f32.mrf.mxu0
        %v3723 = vpop.f32.mrf.mxu0
        %v3724 = vpop.f32.mrf.mxu0
        %3725 = vdwg.mxu0
        %v3730 = vunpack.c.l.b16 %v3360
        %v3731 = vunpack.c.l.b16 %v3361
        %v3732 = vunpack.c.l.b16 %v3362
        %v3733 = vunpack.c.l.b16 %v3363
        %v3734 = vpack.c.b16 %v3731, %v3730
        %v3735 = vpack.c.b16 %v3733, %v3732
        %v3739 = vsel %vm1086, %v3359, 0
        %3741 = vmatprep.subr.bf16.mxu0 0
        %3742 = vmatpush1.bf16.msra.mxu0 0
        %3743 = vmatprep.subr.bf16.mxu0 0
        %3744 = vmatpush1.bf16.msra.mxu0 0
        %3745 = vmatprep.subr.bf16.mxu0 0
        %3746 = vmatpush1.bf16.msra.mxu0 0
        %3747 = vmatprep.subr.bf16.mxu0 0
        %3748 = vmatpush1.bf16.msra.mxu0 0
        %3749 = vmatprep.subr.bf16.mxu0 0
        %3750 = vmatpush1.bf16.msra.mxu0 0
        %3751 = vmatprep.subr.bf16.mxu0 0
        %3752 = vmatpush1.bf16.msra.mxu0 0
        %3753 = vmatprep.subr.bf16.mxu0 0
        %3754 = vmatpush1.bf16.msra.mxu0 %v3735
        %3755 = vmatprep.subr.bf16.mxu0 0
        %3756 = vmatpush1.bf16.msra.mxu0 %v3734
        %3757 = vmatprep.subr.bf16.mxu0 0
        %3758 = vmatpush2.bf16.msra.mxu0 0
        %3759 = vmatprep.subr.bf16.mxu0 0
        %3760 = vmatpush2.bf16.msra.mxu0 0
        %3761 = vmatprep.subr.bf16.mxu0 0
        %3762 = vmatpush2.bf16.msra.mxu0 0
        %3763 = vmatprep.subr.bf16.mxu0 0
        %3764 = vmatpush2.bf16.msra.mxu0 0
        %3765 = vmatprep.subr.bf16.mxu0 0
        %3766 = vmatpush2.bf16.msra.mxu0 0
        %3767 = vmatprep.subr.bf16.mxu0 0
        %3768 = vmatpush2.bf16.msra.mxu0 0
        %3769 = vmatprep.subr.bf16.mxu0 0
        %3770 = vmatpush2.bf16.msra.mxu0 0
        %3771 = vmatprep.subr.bf16.mxu0 0
        %3772 = vmatpush2.bf16.msra.mxu0 0
        %3773 = vmatprep.mubr.bf16.mxu0 0
        %3774 = vmatmul.mubr.bf16.gmra.mxu0 %v3739
        %v3775 = vpop.f32.mrf.mxu0
        %v3776 = vadd.f32 %v3721, %v3775
        %v3777 = vpop.f32.mrf.mxu0
        %v3778 = vpop.f32.mrf.mxu0
        %v3779 = vpop.f32.mrf.mxu0
        %3780 = vdwg.mxu0
        %v3781 = vld [vmem:[#allocation21] sm:$0xf]
        %v3782 = vld [vmem:[#allocation21 + $0x4] sm:$0xf]
        %v3783 = vld [vmem:[#allocation21 + $0x8] sm:$0xf]
        %v3784 = vld [vmem:[#allocation21 + $0xc] sm:$0xf]
        %v3785 = vld [vmem:[#allocation22] sm:$0x1]
        %v3787 = vlaneseq
        %v3788 = vshrl.u32 %v3787, 7
        %v3789 = vsub.s32 0, %v3788
        %v3790 = vrot.slane %v3785, %v3789
        %v3796 = vunpack.c.l.b16 %v3781
        %v3797 = vunpack.c.l.b16 %v3782
        %v3798 = vunpack.c.l.b16 %v3783
        %v3799 = vunpack.c.l.b16 %v3784
        %v3800 = vpack.c.b16 %v3797, %v3796
        %v3801 = vpack.c.b16 %v3799, %v3798
        %3804 = vmatprep.subr.bf16.mxu0 0
        %3805 = vmatpush1.bf16.msra.mxu0 0
        %3806 = vmatprep.subr.bf16.mxu0 0
        %3807 = vmatpush1.bf16.msra.mxu0 0
        %3808 = vmatprep.subr.bf16.mxu0 0
        %3809 = vmatpush1.bf16.msra.mxu0 0
        %3810 = vmatprep.subr.bf16.mxu0 0
        %3811 = vmatpush1.bf16.msra.mxu0 0
        %3812 = vmatprep.subr.bf16.mxu0 0
        %3813 = vmatpush1.bf16.msra.mxu0 0
        %3814 = vmatprep.subr.bf16.mxu0 0
        %3815 = vmatpush1.bf16.msra.mxu0 0
        %3816 = vmatprep.subr.bf16.mxu0 0
        %3817 = vmatpush1.bf16.msra.mxu0 %v3801
        %3818 = vmatprep.subr.bf16.mxu0 0
        %3819 = vmatpush1.bf16.msra.mxu0 %v3800
        %3820 = vmatprep.subr.bf16.mxu0 0
        %3821 = vmatpush2.bf16.msra.mxu0 0
        %3822 = vmatprep.subr.bf16.mxu0 0
        %3823 = vmatpush2.bf16.msra.mxu0 0
        %3824 = vmatprep.subr.bf16.mxu0 0
        %3825 = vmatpush2.bf16.msra.mxu0 0
        %3826 = vmatprep.subr.bf16.mxu0 0
        %3827 = vmatpush2.bf16.msra.mxu0 0
        %3828 = vmatprep.subr.bf16.mxu0 0
        %3829 = vmatpush2.bf16.msra.mxu0 0
        %3830 = vmatprep.subr.bf16.mxu0 0
        %3831 = vmatpush2.bf16.msra.mxu0 0
        %3832 = vmatprep.subr.bf16.mxu0 0
        %3833 = vmatpush2.bf16.msra.mxu0 0
        %3834 = vmatprep.subr.bf16.mxu0 0
        %3835 = vmatpush2.bf16.msra.mxu0 0
        %3836 = vmatprep.mubr.bf16.mxu0 0
        %3837 = vmatmul.mubr.bf16.gmra.mxu0 %v3191
        %v3838 = vpop.f32.mrf.mxu0
        %v3839 = vadd.f32 %v3790, %v3838
        %v3840 = vpop.f32.mrf.mxu0
        %v3841 = vpop.f32.mrf.mxu0
        %v3842 = vpop.f32.mrf.mxu0
        %3843 = vdwg.mxu0
        %v3844 = vmax.f32 %v3839, 0.0
        %v3845 = vpack.c.bf16 %v3844, %v3844
        %v3846 = vld [vmem:[%s2457] sm:$0xf]
        %v3847 = vld [vmem:[%s2457 + $0x4] sm:$0xf]
        %v3848 = vld [vmem:[%s2457 + $0x8] sm:$0xf]
        %v3849 = vld [vmem:[%s2457 + $0xc] sm:$0xf]
        %v3854 = vunpack.c.l.b16 %v3846
        %v3855 = vunpack.c.l.b16 %v3847
        %v3856 = vunpack.c.l.b16 %v3848
        %v3857 = vunpack.c.l.b16 %v3849
        %v3858 = vpack.c.b16 %v3855, %v3854
        %v3859 = vpack.c.b16 %v3857, %v3856
        %v3863 = vsel %vm1086, %v3845, 0
        %3865 = vmatprep.subr.bf16.mxu0 0
        %3866 = vmatpush1.bf16.msra.mxu0 0
        %3867 = vmatprep.subr.bf16.mxu0 0
        %3868 = vmatpush1.bf16.msra.mxu0 0
        %3869 = vmatprep.subr.bf16.mxu0 0
        %3870 = vmatpush1.bf16.msra.mxu0 0
        %3871 = vmatprep.subr.bf16.mxu0 0
        %3872 = vmatpush1.bf16.msra.mxu0 0
        %3873 = vmatprep.subr.bf16.mxu0 0
        %3874 = vmatpush1.bf16.msra.mxu0 0
        %3875 = vmatprep.subr.bf16.mxu0 0
        %3876 = vmatpush1.bf16.msra.mxu0 0
        %3877 = vmatprep.subr.bf16.mxu0 0
        %3878 = vmatpush1.bf16.msra.mxu0 %v3859
        %3879 = vmatprep.subr.bf16.mxu0 0
        %3880 = vmatpush1.bf16.msra.mxu0 %v3858
        %3881 = vmatprep.subr.bf16.mxu0 0
        %3882 = vmatpush2.bf16.msra.mxu0 0
        %3883 = vmatprep.subr.bf16.mxu0 0
        %3884 = vmatpush2.bf16.msra.mxu0 0
        %3885 = vmatprep.subr.bf16.mxu0 0
        %3886 = vmatpush2.bf16.msra.mxu0 0
        %3887 = vmatprep.subr.bf16.mxu0 0
        %3888 = vmatpush2.bf16.msra.mxu0 0
        %3889 = vmatprep.subr.bf16.mxu0 0
        %3890 = vmatpush2.bf16.msra.mxu0 0
        %3891 = vmatprep.subr.bf16.mxu0 0
        %3892 = vmatpush2.bf16.msra.mxu0 0
        %3893 = vmatprep.subr.bf16.mxu0 0
        %3894 = vmatpush2.bf16.msra.mxu0 0
        %3895 = vmatprep.subr.bf16.mxu0 0
        %3896 = vmatpush2.bf16.msra.mxu0 0
        %3897 = vmatprep.mubr.bf16.mxu0 0
        %3898 = vmatmul.mubr.bf16.gmra.mxu0 %v3863
        %v3899 = vpop.f32.mrf.mxu0
        %v3900 = vadd.f32 0.0, %v3899
        %v3901 = vpop.f32.mrf.mxu0
        %v3902 = vpop.f32.mrf.mxu0
        %v3903 = vpop.f32.mrf.mxu0
        %3904 = vdwg.mxu0
        %v3905 = vadd.f32 %v3776, %v3900
        %v3906 = vld [vmem:[%s17] sm:$0x1]
        %v3908 = vlaneseq
        %v3909 = vshrl.u32 %v3908, 7
        %v3910 = vsub.s32 0, %v3909
        %v3911 = vrot.slane %v3906, %v3910
        %v3913 = vadd.f32 %v3905, %v3911
        %v3914 = vmax.f32 %v3913, 0.0
        %v3915 = vsel %vm1086, %v3165, 0.0
        %v3916 = vrot.slane %v3915, 4
        %v3917 = vadd.f32 %v3915, %v3916
        %v3918 = vrot.slane %v3917, 2
        %v3919 = vadd.f32 %v3917, %v3918
        %v3920 = vrot.slane %v3919, 1
        %v3921 = vadd.f32 %v3919, %v3920
        %v3922 = vmul.f32 %v3921, %v2534
        %v3923 = vld [vmem:[%s18] sm:$0xff]
        %v3924 = vld [vmem:[%s18 + $0x8] sm:$0xff]
        %v3925 = vld [vmem:[%s18 + $0x10] sm:$0xff]
        %v3926 = vld [vmem:[%s18 + $0x18] sm:$0xff]
        %v3927 = vld [vmem:[%s19] sm:$0x1]
        %v3929 = vsel %vm1086, %v3922, 0
        %3931 = vmatprep.subr.mxu0 0.0
        %3932 = vmatpush1.msra.mxu0 0.0
        %3933 = vmatprep.subr.mxu0 0.0
        %3934 = vmatpush1.msra.mxu0 0.0
        %3935 = vmatprep.subr.mxu0 0.0
        %3936 = vmatpush1.msra.mxu0 0.0
        %3937 = vmatprep.subr.mxu0 0.0
        %3938 = vmatpush1.msra.mxu0 0.0
        %3939 = vmatprep.subr.mxu0 0.0
        %3940 = vmatpush1.msra.mxu0 0.0
        %3941 = vmatprep.subr.mxu0 0.0
        %3942 = vmatpush1.msra.mxu0 0.0
        %3943 = vmatprep.subr.mxu0 0.0
        %3944 = vmatpush1.msra.mxu0 0.0
        %3945 = vmatprep.subr.mxu0 0.0
        %3946 = vmatpush1.msra.mxu0 0.0
        %3947 = vmatprep.subr.mxu0 0.0
        %3948 = vmatpush1.msra.mxu0 0.0
        %3949 = vmatprep.subr.mxu0 0.0
        %3950 = vmatpush1.msra.mxu0 0.0
        %3951 = vmatprep.subr.mxu0 0.0
        %3952 = vmatpush1.msra.mxu0 0.0
        %3953 = vmatprep.subr.mxu0 0.0
        %3954 = vmatpush1.msra.mxu0 0.0
        %3955 = vmatprep.subr.mxu0 0.0
        %3956 = vmatpush1.msra.mxu0 %v3926
        %3957 = vmatprep.subr.mxu0 0.0
        %3958 = vmatpush1.msra.mxu0 %v3925
        %3959 = vmatprep.subr.mxu0 0.0
        %3960 = vmatpush1.msra.mxu0 %v3924
        %3961 = vmatprep.subr.mxu0 0.0
        %3962 = vmatpush1.msra.mxu0 %v3923
        %3963 = vmatprep.subr.mxu0 0.0
        %3964 = vmatpush2.msra.mxu0 0.0
        %3965 = vmatprep.subr.mxu0 0.0
        %3966 = vmatpush2.msra.mxu0 0.0
        %3967 = vmatprep.subr.mxu0 0.0
        %3968 = vmatpush2.msra.mxu0 0.0
        %3969 = vmatprep.subr.mxu0 0.0
        %3970 = vmatpush2.msra.mxu0 0.0
        %3971 = vmatprep.subr.mxu0 0.0
        %3972 = vmatpush2.msra.mxu0 0.0
        %3973 = vmatprep.subr.mxu0 0.0
        %3974 = vmatpush2.msra.mxu0 0.0
        %3975 = vmatprep.subr.mxu0 0.0
        %3976 = vmatpush2.msra.mxu0 0.0
        %3977 = vmatprep.subr.mxu0 0.0
        %3978 = vmatpush2.msra.mxu0 0.0
        %3979 = vmatprep.subr.mxu0 0.0
        %3980 = vmatpush2.msra.mxu0 0.0
        %3981 = vmatprep.subr.mxu0 0.0
        %3982 = vmatpush2.msra.mxu0 0.0
        %3983 = vmatprep.subr.mxu0 0.0
        %3984 = vmatpush2.msra.mxu0 0.0
        %3985 = vmatprep.subr.mxu0 0.0
        %3986 = vmatpush2.msra.mxu0 0.0
        %3987 = vmatprep.subr.mxu0 0.0
        %3988 = vmatpush2.msra.mxu0 0.0
        %3989 = vmatprep.subr.mxu0 0.0
        %3990 = vmatpush2.msra.mxu0 0.0
        %3991 = vmatprep.subr.mxu0 0.0
        %3992 = vmatpush2.msra.mxu0 0.0
        %3993 = vmatprep.subr.mxu0 0.0
        %3994 = vmatpush2.msra.mxu0 0.0
        %3995 = vmatprep.mubr.f32.mxu0 0.0
        %3996 = vmatmul.mubr.f32.gmra.mxu0 %v3929
        %v3997 = vpop.f32.mrf.mxu0
        %v3998 = vadd.f32 %v3927, %v3997
        %v3999 = vpop.f32.mrf.mxu0
        %4000 = vdwg.mxu0
        %v4001 = vmax.f32 %v3998, 0.0
        %v4002 = vld [vmem:[%s20] sm:$0xff]
        %v4003 = vld [vmem:[%s20 + $0x8] sm:$0xff]
        %v4004 = vld [vmem:[#allocation3] sm:$0x1]
        %v4006 = vsel %vm1766, %v4001, 0
        %4008 = vmatprep.subr.mxu0 0.0
        %4009 = vmatpush1.msra.mxu0 0.0
        %4010 = vmatprep.subr.mxu0 0.0
        %4011 = vmatpush1.msra.mxu0 0.0
        %4012 = vmatprep.subr.mxu0 0.0
        %4013 = vmatpush1.msra.mxu0 0.0
        %4014 = vmatprep.subr.mxu0 0.0
        %4015 = vmatpush1.msra.mxu0 0.0
        %4016 = vmatprep.subr.mxu0 0.0
        %4017 = vmatpush1.msra.mxu0 0.0
        %4018 = vmatprep.subr.mxu0 0.0
        %4019 = vmatpush1.msra.mxu0 0.0
        %4020 = vmatprep.subr.mxu0 0.0
        %4021 = vmatpush1.msra.mxu0 0.0
        %4022 = vmatprep.subr.mxu0 0.0
        %4023 = vmatpush1.msra.mxu0 0.0
        %4024 = vmatprep.subr.mxu0 0.0
        %4025 = vmatpush1.msra.mxu0 0.0
        %4026 = vmatprep.subr.mxu0 0.0
        %4027 = vmatpush1.msra.mxu0 0.0
        %4028 = vmatprep.subr.mxu0 0.0
        %4029 = vmatpush1.msra.mxu0 0.0
        %4030 = vmatprep.subr.mxu0 0.0
        %4031 = vmatpush1.msra.mxu0 0.0
        %4032 = vmatprep.subr.mxu0 0.0
        %4033 = vmatpush1.msra.mxu0 0.0
        %4034 = vmatprep.subr.mxu0 0.0
        %4035 = vmatpush1.msra.mxu0 0.0
        %4036 = vmatprep.subr.mxu0 0.0
        %4037 = vmatpush1.msra.mxu0 %v4003
        %4038 = vmatprep.subr.mxu0 0.0
        %4039 = vmatpush1.msra.mxu0 %v4002
        %4040 = vmatprep.subr.mxu0 0.0
        %4041 = vmatpush2.msra.mxu0 0.0
        %4042 = vmatprep.subr.mxu0 0.0
        %4043 = vmatpush2.msra.mxu0 0.0
        %4044 = vmatprep.subr.mxu0 0.0
        %4045 = vmatpush2.msra.mxu0 0.0
        %4046 = vmatprep.subr.mxu0 0.0
        %4047 = vmatpush2.msra.mxu0 0.0
        %4048 = vmatprep.subr.mxu0 0.0
        %4049 = vmatpush2.msra.mxu0 0.0
        %4050 = vmatprep.subr.mxu0 0.0
        %4051 = vmatpush2.msra.mxu0 0.0
        %4052 = vmatprep.subr.mxu0 0.0
        %4053 = vmatpush2.msra.mxu0 0.0
        %4054 = vmatprep.subr.mxu0 0.0
        %4055 = vmatpush2.msra.mxu0 0.0
        %4056 = vmatprep.subr.mxu0 0.0
        %4057 = vmatpush2.msra.mxu0 0.0
        %4058 = vmatprep.subr.mxu0 0.0
        %4059 = vmatpush2.msra.mxu0 0.0
        %4060 = vmatprep.subr.mxu0 0.0
        %4061 = vmatpush2.msra.mxu0 0.0
        %4062 = vmatprep.subr.mxu0 0.0
        %4063 = vmatpush2.msra.mxu0 0.0
        %4064 = vmatprep.subr.mxu0 0.0
        %4065 = vmatpush2.msra.mxu0 0.0
        %4066 = vmatprep.subr.mxu0 0.0
        %4067 = vmatpush2.msra.mxu0 0.0
        %4068 = vmatprep.subr.mxu0 0.0
        %4069 = vmatpush2.msra.mxu0 0.0
        %4070 = vmatprep.subr.mxu0 0.0
        %4071 = vmatpush2.msra.mxu0 0.0
        %4072 = vmatprep.mubr.f32.mxu0 0.0
        %4073 = vmatmul.mubr.f32.gmra.mxu0 %v4006
        %v4074 = vpop.f32.mrf.mxu0
        %v4075 = vadd.f32 %v4004, %v4074
        %v4076 = vpop.f32.mrf.mxu0
        %4077 = vdwg.mxu0
        %v4078 = vxor.u32 %v4075, 2147483648
        %v4079 = vmul.f32 %v4078, 1.442695
        %v4080 = vpow.pop %v4079
        %v4081 = vadd.f32 %v4080, 1.0
        %v4082 = vrcp.pop %v4081
        %v4083 = vmul.f32 1.0, %v4082
        %v4084 = vsub.f32 %v3914, %v3165
        %s4086 = vtos %v4083
        %v4087 = vstv %s4086
        %v4089 = vmul.f32 %v4087, %v4084
        %v4090 = vadd.f32 %v3165, %v4089
        %v4091 = vpack.c.bf16 %v4090, %v2703
        %v4092 = vld [vmem:[#allocation30] sm:$0xf]
        %v4093 = vld [vmem:[#allocation30 + $0x4] sm:$0xf]
        %v4094 = vld [vmem:[#allocation30 + $0x8] sm:$0xf]
        %v4095 = vld [vmem:[#allocation30 + $0xc] sm:$0xf]
        %v4096 = vld [vmem:[%s23] sm:$0x1]
        %v4098 = vlaneseq
        %v4099 = vshrl.u32 %v4098, 7
        %v4100 = vsub.s32 0, %v4099
        %v4101 = vrot.slane %v4096, %v4100
        %v4107 = vunpack.c.l.b16 %v4092
        %v4108 = vunpack.c.l.b16 %v4093
        %v4109 = vunpack.c.l.b16 %v4094
        %v4110 = vunpack.c.l.b16 %v4095
        %v4111 = vpack.c.b16 %v4108, %v4107
        %v4112 = vpack.c.b16 %v4110, %v4109
        %v4116 = vsel %vm1086, %v4091, 0
        %4118 = vmatprep.subr.bf16.mxu0 0
        %4119 = vmatpush1.bf16.msra.mxu0 0
        %4120 = vmatprep.subr.bf16.mxu0 0
        %4121 = vmatpush1.bf16.msra.mxu0 0
        %4122 = vmatprep.subr.bf16.mxu0 0
        %4123 = vmatpush1.bf16.msra.mxu0 0
        %4124 = vmatprep.subr.bf16.mxu0 0
        %4125 = vmatpush1.bf16.msra.mxu0 0
        %4126 = vmatprep.subr.bf16.mxu0 0
        %4127 = vmatpush1.bf16.msra.mxu0 0
        %4128 = vmatprep.subr.bf16.mxu0 0
        %4129 = vmatpush1.bf16.msra.mxu0 0
        %4130 = vmatprep.subr.bf16.mxu0 0
        %4131 = vmatpush1.bf16.msra.mxu0 %v4112
        %4132 = vmatprep.subr.bf16.mxu0 0
        %4133 = vmatpush1.bf16.msra.mxu0 %v4111
        %4134 = vmatprep.subr.bf16.mxu0 0
        %4135 = vmatpush2.bf16.msra.mxu0 0
        %4136 = vmatprep.subr.bf16.mxu0 0
        %4137 = vmatpush2.bf16.msra.mxu0 0
        %4138 = vmatprep.subr.bf16.mxu0 0
        %4139 = vmatpush2.bf16.msra.mxu0 0
        %4140 = vmatprep.subr.bf16.mxu0 0
        %4141 = vmatpush2.bf16.msra.mxu0 0
        %4142 = vmatprep.subr.bf16.mxu0 0
        %4143 = vmatpush2.bf16.msra.mxu0 0
        %4144 = vmatprep.subr.bf16.mxu0 0
        %4145 = vmatpush2.bf16.msra.mxu0 0
        %4146 = vmatprep.subr.bf16.mxu0 0
        %4147 = vmatpush2.bf16.msra.mxu0 0
        %4148 = vmatprep.subr.bf16.mxu0 0
        %4149 = vmatpush2.bf16.msra.mxu0 0
        %4150 = vmatprep.mubr.bf16.mxu0 0
        %4151 = vmatmul.mubr.bf16.gmra.mxu0 %v4116
        %v4152 = vpop.f32.mrf.mxu0
        %v4153 = vadd.f32 %v4101, %v4152
        %v4154 = vpop.f32.mrf.mxu0
        %v4155 = vpop.f32.mrf.mxu0
        %v4156 = vadd.f32 %v4101, %v4155
        %v4157 = vpop.f32.mrf.mxu0
        %4158 = vdwg.mxu0
        %4159 = vst.msk [vmem:[%s1050] sm:$0xff] %vm1086, %v4153
        %4160 = vst.msk [vmem:[%s1050 + $0x8] sm:$0xff] %vm1086, %v4156
        %s4161 = sand.u32 %s587, 1
        %s4162 = scalar_lea.sflag [#allocation6], %s4161
        %s4163 = sand.u32 %s587, 1
        %s4164 = smul.addr %s4163, 16
        %s4165 = scalar_lea.vmem [#allocation31], %s4164
        // Predicated region
        $region185: #{tpu_custom_call.1} parent=115 // pred_check
          %p4166 = pneg %p597
        $region186: #{tpu_custom_call.1} parent=115 // pred_check_branch
          %4168 = sbr.rel (%p4166) target = $region188
        $region187: #{tpu_custom_call.1} parent=115 // pred_region
          %s4169 = smul.u32 2, %s55
          %s4171 = ssub.s32 256, 256
          %4172 = vsyncadd %s4162, %s4171
          %s4173 = smul.addr %s4169, 128
          %s4174 = scalar_lea.hbm %s24, %s4173
          %s4175 = sshll.u32 %s4165, 4
          %s4176 = int_to_ptr.vmem [resolvable:$true] %s4175
          %4181 = dma.vmem_to_hbm [thread:$0]  %s4176, 256, %s4174, %s4162, 128, 128, 8
        $region188: #{tpu_custom_call.1} parent=115 // pred_fallthru
          _
      $region116: #{tpu_custom_call.1} parent=5 // pred_fallthru
        _
      %p4182 = scmp.le.s32.totalorder 2, %s50
      // Predicated region
      $region189: #{tpu_custom_call.1} parent=5 // pred_check
        %p4183 = pneg %p4182
      $region190: #{tpu_custom_call.1} parent=5 // pred_check_branch
        %4185 = sbr.rel (%p4183) target = $region192
      $region191: #{tpu_custom_call.1} parent=5 // pred_region
        %s4186 = ssub.s32 %s50, 2
        // Predicated region
        $region193: #{tpu_custom_call.1} parent=191 // pred_check
          %p4187 = pneg %p603
        $region194: #{tpu_custom_call.1} parent=191 // pred_check_branch
          %4189 = sbr.rel (%p4187) target = $region196
        $region195: #{tpu_custom_call.1} parent=191 // pred_region
          %s4190 = sand.u32 %s588, 1
          %s4191 = scalar_lea.sflag [#allocation6], %s4190
          %s4192 = sand.u32 %s588, 1
          %s4193 = smul.addr %s4192, 16
          %s4194 = scalar_lea.vmem [#allocation31], %s4193
          %4195 = dma.done %s4191, 256
        $region196: #{tpu_custom_call.1} parent=191 // pred_fallthru
          _
      $region192: #{tpu_custom_call.1} parent=5 // pred_fallthru
        _
    $region6: #{tpu_custom_call.1} parent=1 // loop_footer
      %s54 = sadd.s32 1, %s50
    $region7: #{tpu_custom_call.1} parent=1 // loop_footer_branch
      %49 = sbr.rel target = $region3
    $region8: #{tpu_custom_call.1} parent=1 // loop_exit
      _
    %4196 = vsyncpa [#allocation5], 1
    %s4197 = scalar_lea.sflag [#allocation5], 1
    %4198 = vsyncpa %s4197, 1
    %4199 = vsyncpa [#allocation8], 1
    %s4200 = scalar_lea.sflag [#allocation8], 1
    %4201 = vsyncpa %s4200, 1
    %4202 = vsyncpa [#allocation11], 1
    %s4203 = scalar_lea.sflag [#allocation11], 1
    %4204 = vsyncpa %s4203, 1
    %4205 = vsyncpa [#allocation14], 1
    %4206 = vsyncpa [#allocation17], 1
    %4207 = vsyncpa [#allocation20], 1
    %4208 = vsyncpa [#allocation23], 1
    %4209 = vsyncpa [#allocation26], 1
    %4210 = vsyncpa [#allocation29], 1
    %4211 = vsyncpa [#allocation6], 1
    %s4212 = scalar_lea.sflag [#allocation6], 1
    %4213 = vsyncpa %s4212, 1

</llo_original>
